<compile_context>
chip_gen: v7x
topology: tpu7x:2x2x1
jax: 0.10.0
libtpu: 0.0.40
codegen_flags: <defaults>
</compile_context>

<pallas_src>
import jax
import jax.numpy as jnp
from jax.experimental import pallas as pl
from jax.experimental.pallas import tpu as pltpu

EPS = 1e-5


def _pick_tile(m):
    """Largest row tile (multiple of 8) dividing m, preferring >= 2 grid steps."""
    cands = (512, 256, 128, 64, 32, 16, 8)
    for t in cands:
        if m % t == 0 and m // t >= 2:
            return t
    for t in cands:
        if m % t == 0:
            return t
    return m  # full extent fallback (always legal)


# ----------------------------- Pallas kernels -----------------------------

def _bn_relu_kernel(x_ref, scale_ref, shift_ref, o_ref):
    o_ref[...] = jnp.maximum(x_ref[...] * scale_ref[...] + shift_ref[...], 0.0)


def bn_relu(x2d, scale, shift):
    """y = relu(x * scale + shift), per-channel.  x2d: (M, C).

    Only used for the two stride-2 conv1 pre-activations and nothing else;
    all other BN+ReLU are fused into the conv kernels below.
    """
    M, C = x2d.shape
    tm = _pick_tile(M)
    return pl.pallas_call(
        _bn_relu_kernel,
        out_shape=jax.ShapeDtypeStruct((M, C), x2d.dtype),
        grid=(M // tm,),
        in_specs=[
            pl.BlockSpec((tm, C), lambda i: (i, 0)),
            pl.BlockSpec((1, C), lambda i: (0, 0)),
            pl.BlockSpec((1, C), lambda i: (0, 0)),
        ],
        out_specs=pl.BlockSpec((tm, C), lambda i: (i, 0)),
        compiler_params=pltpu.CompilerParams(dimension_semantics=("parallel",)),
        cost_estimate=pl.CostEstimate(flops=2 * M * C, transcendentals=0,
                                      bytes_accessed=(2 * M * C + 2 * C) * 4),
    )(x2d, scale.reshape(1, C), shift.reshape(1, C))


def _matmul_bn_relu_kernel(a_ref, b_ref, s_ref, t_ref, o_ref):
    acc = jnp.dot(a_ref[...], b_ref[...], preferred_element_type=jnp.float32)
    o_ref[...] = jnp.maximum(acc * s_ref[...] + t_ref[...], 0.0).astype(o_ref.dtype)


def matmul_bn_relu(a, b, scale, shift):
    """relu((a @ b) * scale + shift).  a: (M, K), b: (K, N)."""
    M, K = a.shape
    _, N = b.shape
    tm = _pick_tile(M)
    return pl.pallas_call(
        _matmul_bn_relu_kernel,
        out_shape=jax.ShapeDtypeStruct((M, N), jnp.float32),
        grid=(M // tm,),
        in_specs=[
            pl.BlockSpec((tm, K), lambda i: (i, 0)),
            pl.BlockSpec((K, N), lambda i: (0, 0)),
            pl.BlockSpec((1, N), lambda i: (0, 0)),
            pl.BlockSpec((1, N), lambda i: (0, 0)),
        ],
        out_specs=pl.BlockSpec((tm, N), lambda i: (i, 0)),
        compiler_params=pltpu.CompilerParams(dimension_semantics=("parallel",)),
        cost_estimate=pl.CostEstimate(
            flops=2 * M * K * N, transcendentals=0,
            bytes_accessed=(M * K + K * N + M * N + 2 * N) * 4),
    )(a, b, scale.reshape(1, N), shift.reshape(1, N))


def _make_conv3x3_kernel(Ho, Wo, pre_act, post_act, res_mode):
    """Direct 3x3, stride-1, pad-1 conv kernel (input arrives pre-padded).

    Trace-time fusion flags:
      pre_act  : relu(x * s1 + t1) applied to the input tile (border re-zeroed
                 with a mask so the conv's zero padding stays exact)
      res_mode : None | 'add' (identity shortcut) | 'proj' (fused 1x1 conv)
      post_act : relu(acc * s2 + t2) epilogue after the residual add
    """
    def kernel(*refs):
        it = iter(refs)
        x_ref = next(it)                               # (1, Hp, Wp, Cin)
        w_ref = next(it)                               # (3, 3, Cin, Cout)
        if pre_act:
            m_ref = next(it)                           # (1, Hp, Wp, 1)
            s1_ref = next(it)                          # (1, Cin)
            t1_ref = next(it)                          # (1, Cin)
        if post_act:
            s2_ref = next(it)                          # (1, Cout)
            t2_ref = next(it)                          # (1, Cout)
        if res_mode is not None:
            r_ref = next(it)                           # (1, Ho, Wo, Cr)
        if res_mode == "proj":
            wsc_ref = next(it)                         # (Cr, Cout)
        o_ref = next(it)                               # (1, Ho, Wo, Cout)

        cin = x_ref.shape[3]
        cout = w_ref.shape[3]

        xa = x_ref[0]                                  # (Hp, Wp, Cin)
        if pre_act:
            # Conv zero-padding applies AFTER bn1+relu: activate the whole
            # padded tile, then re-zero the 1-px border with the mask.
            xa = jnp.maximum(xa * s1_ref[...] + t1_ref[...], 0.0) * m_ref[0]

        # 9-tap MXU accumulation over in-VMEM windows (no HBM im2col).
        acc = jnp.zeros((Ho * Wo, cout), jnp.float32)
        for ki in range(3):
            for kj in range(3):
                win = xa[ki:ki + Ho, kj:kj + Wo, :].reshape(Ho * Wo, cin)
                acc = acc + jnp.dot(win, w_ref[ki, kj],
                                    preferred_element_type=jnp.float32)

        if res_mode == "add":
            acc = acc + r_ref[0].reshape(Ho * Wo, cout)
        elif res_mode == "proj":
            cr = r_ref.shape[3]
            acc = acc + jnp.dot(r_ref[0].reshape(Ho * Wo, cr), wsc_ref[...],
                                preferred_element_type=jnp.float32)

        if post_act:
            acc = jnp.maximum(acc * s2_ref[...] + t2_ref[...], 0.0)

        o_ref[...] = acc.reshape(1, Ho, Wo, cout).astype(o_ref.dtype)

    return kernel


def conv3x3_direct(x, w, *, in_bn=None, out_bn=None, residual=None, shortcut_w=None):
    """Fused 3x3 stride-1 pad-1 conv.  x: (N, H, W, Cin) NHWC -> (N, H, W, Cout)."""
    N, H, W, Cin = x.shape
    Cout = w.shape[-1]
    Ho, Wo = H, W
    Hp, Wp = H + 2, W + 2
    xp = jnp.pad(x, ((0, 0), (1, 1), (1, 1), (0, 0)))

    pre_act = in_bn is not None
    post_act = out_bn is not None
    if residual is None:
        res_mode = None
    elif shortcut_w is None:
        res_mode = "add"
    else:
        res_mode = "proj"

    inputs = [xp, w]
    in_specs = [
        pl.BlockSpec((1, Hp, Wp, Cin), lambda n: (n, 0, 0, 0)),
        pl.BlockSpec((3, 3, Cin, Cout), lambda n: (0, 0, 0, 0)),
    ]
    flops = 2 * N * Ho * Wo * 9 * Cin * Cout

    if pre_act:
        mask = jnp.pad(jnp.ones((1, H, W, 1), jnp.float32),
                       ((0, 0), (1, 1), (1, 1), (0, 0)))
        s1, t1 = in_bn
        inputs += [mask, s1.reshape(1, Cin), t1.reshape(1, Cin)]
        in_specs += [
            pl.BlockSpec((1, Hp, Wp, 1), lambda n: (0, 0, 0, 0)),
            pl.BlockSpec((1, Cin), lambda n: (0, 0)),
            pl.BlockSpec((1, Cin), lambda n: (0, 0)),
        ]
    if post_act:
        s2, t2 = out_bn
        inputs += [s2.reshape(1, Cout), t2.reshape(1, Cout)]
        in_specs += [
            pl.BlockSpec((1, Cout), lambda n: (0, 0)),
            pl.BlockSpec((1, Cout), lambda n: (0, 0)),
        ]
    if res_mode is not None:
        Cr = residual.shape[-1]
        inputs.append(residual)
        in_specs.append(pl.BlockSpec((1, Ho, Wo, Cr), lambda n: (n, 0, 0, 0)))
    if res_mode == "proj":
        inputs.append(shortcut_w)
        in_specs.append(pl.BlockSpec(shortcut_w.shape, lambda n: (0, 0)))
        flops += 2 * N * Ho * Wo * shortcut_w.shape[0] * Cout

    bytes_accessed = sum(int(a.size) for a in inputs) * 4 + N * Ho * Wo * Cout * 4

    return pl.pallas_call(
        _make_conv3x3_kernel(Ho, Wo, pre_act, post_act, res_mode),
        out_shape=jax.ShapeDtypeStruct((N, Ho, Wo, Cout), jnp.float32),
        grid=(N,),
        in_specs=in_specs,
        out_specs=pl.BlockSpec((1, Ho, Wo, Cout), lambda n: (n, 0, 0, 0)),
        compiler_params=pltpu.CompilerParams(dimension_semantics=("parallel",)),
        cost_estimate=pl.CostEstimate(flops=flops, transcendentals=0,
                                      bytes_accessed=bytes_accessed),
    )(*inputs)


# ----------------------------- JAX glue -----------------------------------

def conv3x3_patches(x, stride):
    """im2col for a 3x3 conv with padding=1 (used only for stride-2 conv1s).
    x: (N, H, W, C) -> patches (N*Ho*Wo, 9*C) ordered (ki, kj, c)."""
    N, H, W, C = x.shape
    k, pad = 3, 1
    Ho = (H + 2 * pad - k) // stride + 1
    Wo = (W + 2 * pad - k) // stride + 1
    xp = jnp.pad(x, ((0, 0), (pad, pad), (pad, pad), (0, 0)))
    cols = []
    for i in range(k):
        for j in range(k):
            cols.append(xp[:, i:i + stride * (Ho - 1) + 1:stride,
                           j:j + stride * (Wo - 1) + 1:stride, :])
    patches = jnp.concatenate(cols, axis=-1).reshape(N * Ho * Wo, k * k * C)
    return patches, (N, Ho, Wo)


def basic_block(x, p, post_bn=None):
    """Pre-activation BasicBlock.  x: (N, H, W, Cin) NHWC.

    post_bn: (scale, shift) of the network's final BN, fused into this block's
    conv2 epilogue when this is the last block (else None).
    """
    stride = p['stride']
    N, H, W, Cin = x.shape
    cout = p['conv1_w'].shape[-1]

    if stride == 1:
        # relu(bn2(conv1(relu(bn1(x))))) in one fused direct-conv kernel.
        pre2 = conv3x3_direct(
            x, p['conv1_w'],
            in_bn=(p['bn1_scale'], p['bn1_shift']),
            out_bn=(p['bn2_scale'], p['bn2_shift']))
    else:
        # TODO(synk): the two stride-2 conv1s use a small glue im2col instead
        #             of the in-kernel tap reduction (their tensors are 4x
        #             smaller); bn1+relu runs as a fused elementwise kernel.
        a1 = bn_relu(x.reshape(-1, Cin), p['bn1_scale'], p['bn1_shift'])
        a1 = a1.reshape(N, H, W, Cin)
        patches, (n, ho, wo) = conv3x3_patches(a1, stride)
        pre2 = matmul_bn_relu(patches, p['conv1_w'].reshape(-1, cout),
                              p['bn2_scale'], p['bn2_shift'])
        pre2 = pre2.reshape(n, ho, wo, cout)
    # dropout -> identity (eval mode, see TODO at top)

    # conv2 with the shortcut (identity or fused 1x1 projection) and, for the
    # last block, the final BN+ReLU fused into the same kernel's epilogue.
    if p['shortcut_w'] is not None:
        xs = x[:, ::stride, ::stride, :]
        out = conv3x3_direct(pre2, p['conv2_w'], residual=xs,
                             shortcut_w=p['shortcut_w'], out_bn=post_bn)
    else:
        out = conv3x3_direct(pre2, p['conv2_w'], residual=x, out_bn=post_bn)
    return out


def wideresnet_forward(params, x_nchw):
    x = jnp.transpose(x_nchw, (0, 2, 3, 1))              # NCHW -> NHWC
    out = conv3x3_direct(x, params['conv1_w'])           # stem 3->16, s1, p1
    blocks = params['blocks']
    last = len(blocks) - 1
    for bi, p in enumerate(blocks):
        post_bn = ((params['bn_final_scale'], params['bn_final_shift'])
                   if bi == last else None)
        out = basic_block(out, p, post_bn)
    return jnp.transpose(out, (0, 3, 1, 2))               # back to NCHW


# ----------------------------- Parameters ---------------------------------

def make_params(key, depth=10, widen_factor=2):
    assert (depth - 4) % 6 == 0
    n = (depth - 4) // 6
    nch = [16, 16 * widen_factor, 32 * widen_factor, 64 * widen_factor]

    ctr = [0]

    def next_key():
        ctr[0] += 1
        return jax.random.fold_in(key, ctr[0])

    def kaiming(kh, kw, cin, cout):
        # kaiming_normal_(mode='fan_out', nonlinearity='relu')
        fan_out = cout * kh * kw
        std = (2.0 / fan_out) ** 0.5
        return jax.random.normal(next_key(), (kh, kw, cin, cout), jnp.float32) * std

    def bn_params(c):
        gamma = jnp.ones((c,), jnp.float32)
        beta = jnp.zeros((c,), jnp.float32)
        mean = jnp.zeros((c,), jnp.float32)
        var = jnp.ones((c,), jnp.float32)
        scale = gamma / jnp.sqrt(var + EPS)
        shift = beta - mean * scale
        return scale, shift

    params = {'conv1_w': kaiming(3, 3, 3, nch[0]), 'blocks': []}
    in_planes = nch[0]
    for planes, stride0 in zip(nch[1:], (1, 2, 2)):
        strides = [stride0] + [1] * (n - 1)
        for s in strides:
            b = {'stride': s}
            b['bn1_scale'], b['bn1_shift'] = bn_params(in_planes)
            b['conv1_w'] = kaiming(3, 3, in_planes, planes)
            b['bn2_scale'], b['bn2_shift'] = bn_params(planes)
            b['conv2_w'] = kaiming(3, 3, planes, planes)
            if s != 1 or in_planes != planes:
                b['shortcut_w'] = kaiming(1, 1, in_planes, planes).reshape(in_planes, planes)
            else:
                b['shortcut_w'] = None
            params['blocks'].append(b)
            in_planes = planes
    params['bn_final_scale'], params['bn_final_shift'] = bn_params(nch[3])
    return params


# ----------------------------- Pure-JAX reference --------------------------

def _ref_conv(x, w, stride, pad):
    return jax.lax.conv_general_dilated(
        x, w, window_strides=(stride, stride),
        padding=[(pad, pad), (pad, pad)],
        dimension_numbers=('NHWC', 'HWIO', 'NHWC'))


def _ref_forward(params, x_nchw):
    x = jnp.transpose(x_nchw, (0, 2, 3, 1))
    out = _ref_conv(x, params['conv1_w'], 1, 1)
    for p in params['blocks']:
        s = p['stride']
        pre1 = jnp.maximum(out * p['bn1_scale'] + p['bn1_shift'], 0.0)
        y = _ref_conv(pre1, p['conv1_w'], s, 1)
        pre2 = jnp.maximum(y * p['bn2_scale'] + p['bn2_shift'], 0.0)
        y = _ref_conv(pre2, p['conv2_w'], 1, 1)
        if p['shortcut_w'] is not None:
            cin, cout = p['shortcut_w'].shape
            sc = _ref_conv(out, p['shortcut_w'].reshape(1, 1, cin, cout), s, 0)
        else:
            sc = out
        out = y + sc
    out = jnp.maximum(out * params['bn_final_scale'] + params['bn_final_shift'], 0.0)
    return jnp.transpose(out, (0, 3, 1, 2))


# ----------------------------- Main ----------------------------------------

if __name__ == "__main__":
    key = jax.random.PRNGKey(0)
    # WideResNet(depth=10, widen_factor=2, dropout_rate=0.0) -> channels [16,32,64,128]
    params = make_params(key, depth=10, widen_factor=2)

    x = jax.random.normal(jax.random.fold_in(key, 12345), (2, 3, 16, 16), jnp.float32)

    out = wideresnet_forward(params, x)
    out = jax.block_until_ready(out)
    assert out.shape == (2, 128, 4, 4), out.shape

    ref = jax.block_until_ready(_ref_forward(params, x))
    assert jnp.allclose(out, ref, rtol=1e-3, atol=1e-3), float(jnp.max(jnp.abs(out - ref)))

    print("KERNEL_OK")
</pallas_src>

<mosaic_0001>
module attributes {stable_mosaic.version = 11 : i64} {
  func.func @kernel(%arg0: i32, %arg1: memref<1x18x18x3xf32, #tpu.memory_space<vmem>>, %arg2: memref<3x3x3x16xf32, #tpu.memory_space<vmem>>, %arg3: memref<1x16x16x16xf32, #tpu.memory_space<vmem>>) attributes {dimension_semantics = [#tpu.dimension_semantics<parallel>], iteration_bounds = array<i64: 2>, scalar_prefetch = 0 : i64, scratch_operands = 0 : i64, tpu.core_type = #tpu.core_type<tc>, window_params = [{transform_indices = @transform_0, window_bounds = array<i64: 1, 18, 18, 3>}, {pipeline_mode = #tpu.pipeline_mode<synchronous>, transform_indices = @transform_1, window_bounds = array<i64: 3, 3, 3, 16>}, {transform_indices = @transform_2, window_bounds = array<i64: 1, 16, 16, 16>}]} {
    %c0 = arith.constant 0 : index
    %c0_0 = arith.constant 0 : index
    %c0_1 = arith.constant 0 : index
    %c0_2 = arith.constant 0 : index
    %0 = vector.load %arg1[%c0, %c0_0, %c0_1, %c0_2] : memref<1x18x18x3xf32, #tpu.memory_space<vmem>>, vector<1x18x18x3xf32>
    %1 = vector.shape_cast %0 : vector<1x18x18x3xf32> to vector<18x18x3xf32>
    %cst = arith.constant 0.000000e+00 : f32
    %2 = vector.broadcast %cst : f32 to vector<256x16xf32>
    %3 = vector.extract_strided_slice %1 {offsets = [0, 0, 0], sizes = [16, 16, 3], strides = [1, 1, 1]} : vector<18x18x3xf32> to vector<16x16x3xf32>
    %4 = vector.shape_cast %3 : vector<16x16x3xf32> to vector<256x3xf32>
    %c0_3 = arith.constant 0 : index
    %c0_4 = arith.constant 0 : index
    %c0_5 = arith.constant 0 : index
    %c0_6 = arith.constant 0 : index
    %5 = vector.load %arg2[%c0_3, %c0_4, %c0_5, %c0_6] : memref<3x3x3x16xf32, #tpu.memory_space<vmem>>, vector<1x1x3x16xf32>
    %6 = vector.shape_cast %5 : vector<1x1x3x16xf32> to vector<3x16xf32>
    %cst_7 = arith.constant dense<0.000000e+00> : vector<256x16xf32>
    %7 = tpu.matmul %4, %6, %cst_7 {dimension_numbers = #tpu.dot_dimension_numbers<[1], [0], [0], [1], [0, 0, 1, 1], [], []>} : vector<256x3xf32>, vector<3x16xf32>, vector<256x16xf32> -> vector<256x16xf32>
    %8 = arith.addf %2, %7 : vector<256x16xf32>
    %9 = vector.extract_strided_slice %1 {offsets = [0, 1, 0], sizes = [16, 16, 3], strides = [1, 1, 1]} : vector<18x18x3xf32> to vector<16x16x3xf32>
    %10 = vector.shape_cast %9 : vector<16x16x3xf32> to vector<256x3xf32>
    %c0_8 = arith.constant 0 : index
    %c1 = arith.constant 1 : index
    %c0_9 = arith.constant 0 : index
    %c0_10 = arith.constant 0 : index
    %11 = vector.load %arg2[%c0_8, %c1, %c0_9, %c0_10] : memref<3x3x3x16xf32, #tpu.memory_space<vmem>>, vector<1x1x3x16xf32>
    %12 = vector.shape_cast %11 : vector<1x1x3x16xf32> to vector<3x16xf32>
    %cst_11 = arith.constant dense<0.000000e+00> : vector<256x16xf32>
    %13 = tpu.matmul %10, %12, %cst_11 {dimension_numbers = #tpu.dot_dimension_numbers<[1], [0], [0], [1], [0, 0, 1, 1], [], []>} : vector<256x3xf32>, vector<3x16xf32>, vector<256x16xf32> -> vector<256x16xf32>
    %14 = arith.addf %8, %13 : vector<256x16xf32>
    %15 = vector.extract_strided_slice %1 {offsets = [0, 2, 0], sizes = [16, 16, 3], strides = [1, 1, 1]} : vector<18x18x3xf32> to vector<16x16x3xf32>
    %16 = vector.shape_cast %15 : vector<16x16x3xf32> to vector<256x3xf32>
    %c0_12 = arith.constant 0 : index
    %c2 = arith.constant 2 : index
    %c0_13 = arith.constant 0 : index
    %c0_14 = arith.constant 0 : index
    %17 = vector.load %arg2[%c0_12, %c2, %c0_13, %c0_14] : memref<3x3x3x16xf32, #tpu.memory_space<vmem>>, vector<1x1x3x16xf32>
    %18 = vector.shape_cast %17 : vector<1x1x3x16xf32> to vector<3x16xf32>
    %cst_15 = arith.constant dense<0.000000e+00> : vector<256x16xf32>
    %19 = tpu.matmul %16, %18, %cst_15 {dimension_numbers = #tpu.dot_dimension_numbers<[1], [0], [0], [1], [0, 0, 1, 1], [], []>} : vector<256x3xf32>, vector<3x16xf32>, vector<256x16xf32> -> vector<256x16xf32>
    %20 = arith.addf %14, %19 : vector<256x16xf32>
    %21 = vector.extract_strided_slice %1 {offsets = [1, 0, 0], sizes = [16, 16, 3], strides = [1, 1, 1]} : vector<18x18x3xf32> to vector<16x16x3xf32>
    %22 = vector.shape_cast %21 : vector<16x16x3xf32> to vector<256x3xf32>
    %c1_16 = arith.constant 1 : index
    %c0_17 = arith.constant 0 : index
    %c0_18 = arith.constant 0 : index
    %c0_19 = arith.constant 0 : index
    %23 = vector.load %arg2[%c1_16, %c0_17, %c0_18, %c0_19] : memref<3x3x3x16xf32, #tpu.memory_space<vmem>>, vector<1x1x3x16xf32>
    %24 = vector.shape_cast %23 : vector<1x1x3x16xf32> to vector<3x16xf32>
    %cst_20 = arith.constant dense<0.000000e+00> : vector<256x16xf32>
    %25 = tpu.matmul %22, %24, %cst_20 {dimension_numbers = #tpu.dot_dimension_numbers<[1], [0], [0], [1], [0, 0, 1, 1], [], []>} : vector<256x3xf32>, vector<3x16xf32>, vector<256x16xf32> -> vector<256x16xf32>
    %26 = arith.addf %20, %25 : vector<256x16xf32>
    %27 = vector.extract_strided_slice %1 {offsets = [1, 1, 0], sizes = [16, 16, 3], strides = [1, 1, 1]} : vector<18x18x3xf32> to vector<16x16x3xf32>
    %28 = vector.shape_cast %27 : vector<16x16x3xf32> to vector<256x3xf32>
    %c1_21 = arith.constant 1 : index
    %c1_22 = arith.constant 1 : index
    %c0_23 = arith.constant 0 : index
    %c0_24 = arith.constant 0 : index
    %29 = vector.load %arg2[%c1_21, %c1_22, %c0_23, %c0_24] : memref<3x3x3x16xf32, #tpu.memory_space<vmem>>, vector<1x1x3x16xf32>
    %30 = vector.shape_cast %29 : vector<1x1x3x16xf32> to vector<3x16xf32>
    %cst_25 = arith.constant dense<0.000000e+00> : vector<256x16xf32>
    %31 = tpu.matmul %28, %30, %cst_25 {dimension_numbers = #tpu.dot_dimension_numbers<[1], [0], [0], [1], [0, 0, 1, 1], [], []>} : vector<256x3xf32>, vector<3x16xf32>, vector<256x16xf32> -> vector<256x16xf32>
    %32 = arith.addf %26, %31 : vector<256x16xf32>
    %33 = vector.extract_strided_slice %1 {offsets = [1, 2, 0], sizes = [16, 16, 3], strides = [1, 1, 1]} : vector<18x18x3xf32> to vector<16x16x3xf32>
    %34 = vector.shape_cast %33 : vector<16x16x3xf32> to vector<256x3xf32>
    %c1_26 = arith.constant 1 : index
    %c2_27 = arith.constant 2 : index
    %c0_28 = arith.constant 0 : index
    %c0_29 = arith.constant 0 : index
    %35 = vector.load %arg2[%c1_26, %c2_27, %c0_28, %c0_29] : memref<3x3x3x16xf32, #tpu.memory_space<vmem>>, vector<1x1x3x16xf32>
    %36 = vector.shape_cast %35 : vector<1x1x3x16xf32> to vector<3x16xf32>
    %cst_30 = arith.constant dense<0.000000e+00> : vector<256x16xf32>
    %37 = tpu.matmul %34, %36, %cst_30 {dimension_numbers = #tpu.dot_dimension_numbers<[1], [0], [0], [1], [0, 0, 1, 1], [], []>} : vector<256x3xf32>, vector<3x16xf32>, vector<256x16xf32> -> vector<256x16xf32>
    %38 = arith.addf %32, %37 : vector<256x16xf32>
    %39 = vector.extract_strided_slice %1 {offsets = [2, 0, 0], sizes = [16, 16, 3], strides = [1, 1, 1]} : vector<18x18x3xf32> to vector<16x16x3xf32>
    %40 = vector.shape_cast %39 : vector<16x16x3xf32> to vector<256x3xf32>
    %c2_31 = arith.constant 2 : index
    %c0_32 = arith.constant 0 : index
    %c0_33 = arith.constant 0 : index
    %c0_34 = arith.constant 0 : index
    %41 = vector.load %arg2[%c2_31, %c0_32, %c0_33, %c0_34] : memref<3x3x3x16xf32, #tpu.memory_space<vmem>>, vector<1x1x3x16xf32>
    %42 = vector.shape_cast %41 : vector<1x1x3x16xf32> to vector<3x16xf32>
    %cst_35 = arith.constant dense<0.000000e+00> : vector<256x16xf32>
    %43 = tpu.matmul %40, %42, %cst_35 {dimension_numbers = #tpu.dot_dimension_numbers<[1], [0], [0], [1], [0, 0, 1, 1], [], []>} : vector<256x3xf32>, vector<3x16xf32>, vector<256x16xf32> -> vector<256x16xf32>
    %44 = arith.addf %38, %43 : vector<256x16xf32>
    %45 = vector.extract_strided_slice %1 {offsets = [2, 1, 0], sizes = [16, 16, 3], strides = [1, 1, 1]} : vector<18x18x3xf32> to vector<16x16x3xf32>
    %46 = vector.shape_cast %45 : vector<16x16x3xf32> to vector<256x3xf32>
    %c2_36 = arith.constant 2 : index
    %c1_37 = arith.constant 1 : index
    %c0_38 = arith.constant 0 : index
    %c0_39 = arith.constant 0 : index
    %47 = vector.load %arg2[%c2_36, %c1_37, %c0_38, %c0_39] : memref<3x3x3x16xf32, #tpu.memory_space<vmem>>, vector<1x1x3x16xf32>
    %48 = vector.shape_cast %47 : vector<1x1x3x16xf32> to vector<3x16xf32>
    %cst_40 = arith.constant dense<0.000000e+00> : vector<256x16xf32>
    %49 = tpu.matmul %46, %48, %cst_40 {dimension_numbers = #tpu.dot_dimension_numbers<[1], [0], [0], [1], [0, 0, 1, 1], [], []>} : vector<256x3xf32>, vector<3x16xf32>, vector<256x16xf32> -> vector<256x16xf32>
    %50 = arith.addf %44, %49 : vector<256x16xf32>
    %51 = vector.extract_strided_slice %1 {offsets = [2, 2, 0], sizes = [16, 16, 3], strides = [1, 1, 1]} : vector<18x18x3xf32> to vector<16x16x3xf32>
    %52 = vector.shape_cast %51 : vector<16x16x3xf32> to vector<256x3xf32>
    %c2_41 = arith.constant 2 : index
    %c2_42 = arith.constant 2 : index
    %c0_43 = arith.constant 0 : index
    %c0_44 = arith.constant 0 : index
    %53 = vector.load %arg2[%c2_41, %c2_42, %c0_43, %c0_44] : memref<3x3x3x16xf32, #tpu.memory_space<vmem>>, vector<1x1x3x16xf32>
    %54 = vector.shape_cast %53 : vector<1x1x3x16xf32> to vector<3x16xf32>
    %cst_45 = arith.constant dense<0.000000e+00> : vector<256x16xf32>
    %55 = tpu.matmul %52, %54, %cst_45 {dimension_numbers = #tpu.dot_dimension_numbers<[1], [0], [0], [1], [0, 0, 1, 1], [], []>} : vector<256x3xf32>, vector<3x16xf32>, vector<256x16xf32> -> vector<256x16xf32>
    %56 = arith.addf %50, %55 : vector<256x16xf32>
    %57 = vector.shape_cast %56 : vector<256x16xf32> to vector<1x16x16x16xf32>
    %c0_46 = arith.constant 0 : index
    %c0_47 = arith.constant 0 : index
    %c0_48 = arith.constant 0 : index
    %c0_49 = arith.constant 0 : index
    %58 = vector.load %arg3[%c0_46, %c0_47, %c0_48, %c0_49] : memref<1x16x16x16xf32, #tpu.memory_space<vmem>>, vector<1x16x16x16xf32>
    tpu.vector_store %arg3[%c0_46, %c0_47, %c0_48, %c0_49], %57 {strides = array<i32>} : memref<1x16x16x16xf32, #tpu.memory_space<vmem>>, vector<1x16x16x16xf32>,
    return
  }
  func.func @transform_0(%arg0: i32) -> (i32, i32, i32, i32) {
    %c0_i32 = arith.constant 0 : i32
    %c0_i32_0 = arith.constant 0 : i32
    %c0_i32_1 = arith.constant 0 : i32
    %c0_i32_2 = arith.constant 0 : i32
    return %arg0, %c0_i32, %c0_i32_0, %c0_i32_1 : i32, i32, i32, i32
  }
  func.func @transform_1(%arg0: i32) -> (i32, i32, i32, i32) {
    %c0_i32 = arith.constant 0 : i32
    %c0_i32_0 = arith.constant 0 : i32
    %c0_i32_1 = arith.constant 0 : i32
    %c0_i32_2 = arith.constant 0 : i32
    %c0_i32_3 = arith.constant 0 : i32
    return %c0_i32, %c0_i32_0, %c0_i32_1, %c0_i32_2 : i32, i32, i32, i32
  }
  func.func @transform_2(%arg0: i32) -> (i32, i32, i32, i32) {
    %c0_i32 = arith.constant 0 : i32
    %c0_i32_0 = arith.constant 0 : i32
    %c0_i32_1 = arith.constant 0 : i32
    %c0_i32_2 = arith.constant 0 : i32
    return %arg0, %c0_i32, %c0_i32_0, %c0_i32_1 : i32, i32, i32, i32
  }
}

</mosaic_0001>

<llo_original>
// kernel: tpu_custom_call.1
$region0: #{tpu_custom_call.1}
  #allocation0 [shape = 'u32[]', space=smem, size = 0x4, offset = 0x4, fixed_abs, tag = 'smem constant byte address 0x4 - core index']
  #allocation1 [shape = 'u32[144,128]{1,0:T(1,128)}', space=vmem, size = 0x12000, scoped, tag = 'internal scratch']
  %s0 = inlined_call_operand.vmem [shape: f32[2,18,18,3], index: 0, kind: input, shape index: {}]
  %s1 = inlined_call_operand.vmem [shape: f32[3,3,3,16], index: 1, kind: input, shape index: {}]
  %s2 = inlined_call_operand.hbm [shape: f32[2,16,16,16], index: 2, kind: output, shape index: {}]
  %s3 = sld [smem:[#allocation0]]
  $region41: #{tpu_custom_call.1} parent=0
    _
  %s5 = ssub.s32 1, %s3
  %s6 = scalar_select 0, %s5, %s3
  $region1: #{tpu_custom_call.1} parent=0
    #allocation2 [shape = 'u8[262144]{0}', space=vmem, size = 0x40000, scoped, tag = 'output window, operand 0']
    #allocation3 [shape = 's32[2]{0}', space=sflag, size = 0x8, scoped, tag = 'scoped memory for tpu_custom_call.1']
    %7 = vsyncpa [#allocation3], 0
    %s8 = scalar_lea.sflag [#allocation3], 1
    %9 = vsyncpa %s8, 0
    loop: start=0, step=1, limit=4
    $region2: #{tpu_custom_call.1} parent=1 // loop_pre_header
      _
    $region3: #{tpu_custom_call.1} parent=1 // loop_header
      %s11 = sphi 0, %s15
      %p12 = scmp.ge.s32.totalorder %s11, 4
      %s21 = sphi 0, %s23
      %s24 = sphi 0, %s21
      %s25 = sphi 0, %s24
      %s41 = sphi 0, %s25
      %s45 = sphi 0, %s45
      %s47 = sphi 0, %s45
      %s48 = sphi 0, %s47
      %s62 = sphi 0, %s48
      %s68 = sphi 0, %s70
      %s71 = sphi 0, %s68
      %s72 = sphi 0, %s71
      %s88 = sphi 0, %s72
    $region4: #{tpu_custom_call.1} parent=1 // loop_header_branch
      %14 = sbr.rel (%p12) target = $region8
    $region5: #{tpu_custom_call.1} parent=1 // loop_body
      %s16 = ssub.s32 %s11, 1
      %s17 = ssub.s32 %s11, 2
      %s18 = sadd.s32 %s11, 1
      %s19 = ssub.s32 %s11, %s18
      %p20 = scmp.eq.s32.totalorder %s19, 0
      %s22 = sadd.s32 %s21, 1
      %s23 = scalar_select %p20, %s21, %s22
      %p26 = pneg %p20
      %p27 = scmp.eq.s32.totalorder %s11, 1
      %p28 = por %p26, %p27
      %p29 = scmp.ne.s32.totalorder %s21, %s24
      %p30 = scmp.eq.s32.totalorder %s11, 0
      %p31 = por %p29, %p30
      %p32 = scmp.ne.s32.totalorder %s21, %s24
      %p33 = scmp.eq.s32.totalorder %s16, 1
      %p34 = por %p32, %p33
      %p35 = scmp.ne.s32.totalorder %s24, %s25
      %p36 = scmp.eq.s32.totalorder %s16, 0
      %p37 = por %p35, %p36
      %p38 = scmp.ne.s32.totalorder %s24, %s25
      %p39 = scmp.eq.s32.totalorder %s17, 1
      %p40 = por %p38, %p39
      %p42 = scmp.ne.s32.totalorder %s25, %s41
      %p43 = scmp.eq.s32.totalorder %s17, 0
      %p44 = por %p42, %p43
      %s46 = sadd.s32 %s45, 1
      %p49 = scmp.eq.s32.totalorder %s11, 1
      %p50 = scmp.ne.s32.totalorder %s45, %s47
      %p51 = scmp.eq.s32.totalorder %s11, 0
      %p52 = por %p50, %p51
      %p53 = scmp.ne.s32.totalorder %s45, %s47
      %p54 = scmp.eq.s32.totalorder %s16, 1
      %p55 = por %p53, %p54
      %p56 = scmp.ne.s32.totalorder %s47, %s48
      %p57 = scmp.eq.s32.totalorder %s16, 0
      %p58 = por %p56, %p57
      %p59 = scmp.ne.s32.totalorder %s47, %s48
      %p60 = scmp.eq.s32.totalorder %s17, 1
      %p61 = por %p59, %p60
      %p63 = scmp.ne.s32.totalorder %s48, %s62
      %p64 = scmp.eq.s32.totalorder %s17, 0
      %p65 = por %p63, %p64
      %s66 = ssub.s32 %s11, %s18
      %p67 = scmp.eq.s32.totalorder %s66, 0
      %s69 = sadd.s32 %s68, 1
      %s70 = scalar_select %p67, %s68, %s69
      %p73 = pneg %p67
      %p74 = scmp.eq.s32.totalorder %s11, 1
      %p75 = por %p73, %p74
      %p76 = scmp.ne.s32.totalorder %s68, %s71
      %p77 = scmp.eq.s32.totalorder %s11, 0
      %p78 = por %p76, %p77
      %p79 = scmp.ne.s32.totalorder %s68, %s71
      %p80 = scmp.eq.s32.totalorder %s16, 1
      %p81 = por %p79, %p80
      %p82 = scmp.ne.s32.totalorder %s71, %s72
      %p83 = scmp.eq.s32.totalorder %s16, 0
      %p84 = por %p82, %p83
      %p85 = scmp.ne.s32.totalorder %s71, %s72
      %p86 = scmp.eq.s32.totalorder %s17, 1
      %p87 = por %p85, %p86
      %p89 = scmp.ne.s32.totalorder %s72, %s88
      %p90 = scmp.eq.s32.totalorder %s17, 0
      %p91 = por %p89, %p90
      %p92 = scmp.le.s32.totalorder 1, %s11
      %p93 = scmp.lt.s32.totalorder %s11, 3
      %p94 = pnand %p92, %p93
      %p95 = pneg %p94
      // Predicated region
      $region9: #{tpu_custom_call.1} parent=5 // pred_check
        _
      $region10: #{tpu_custom_call.1} parent=5 // pred_check_branch
        %97 = sbr.rel (%p94) target = $region12
      $region11: #{tpu_custom_call.1} parent=5 // pred_region
        %s98 = ssub.s32 %s11, 1
        // Predicated region
        $region13: #{tpu_custom_call.1} parent=11 // pred_check
          %p99 = pneg %p58
        $region14: #{tpu_custom_call.1} parent=11 // pred_check_branch
          %101 = sbr.rel (%p99) target = $region16
        $region15: #{tpu_custom_call.1} parent=11 // pred_region
          _
        $region16: #{tpu_custom_call.1} parent=11 // pred_fallthru
          _
      $region12: #{tpu_custom_call.1} parent=5 // pred_fallthru
        _
      %p102 = scmp.lt.s32.totalorder %s11, 2
      // Predicated region
      $region17: #{tpu_custom_call.1} parent=5 // pred_check
        %p103 = pneg %p102
      $region18: #{tpu_custom_call.1} parent=5 // pred_check_branch
        %105 = sbr.rel (%p103) target = $region20
      $region19: #{tpu_custom_call.1} parent=5 // pred_region
        // Predicated region
        $region21: #{tpu_custom_call.1} parent=19 // pred_check
          %p106 = pneg %p31
        $region22: #{tpu_custom_call.1} parent=19 // pred_check_branch
          %108 = sbr.rel (%p106) target = $region24
        $region23: #{tpu_custom_call.1} parent=19 // pred_region
          %p109 = scmp.lt.s32.totalorder %s11, 1
          %s110 = scalar_select %p109, %s11, 1
          %s111 = smul.addr %s110, 54
          %s112 = smul.addr %s111, 8
          %s113 = scalar_lea.vmem %s0, %s112
        $region24: #{tpu_custom_call.1} parent=19 // pred_fallthru
          _
      $region20: #{tpu_custom_call.1} parent=5 // pred_fallthru
        _
      %p114 = scmp.le.s32.totalorder 1, %s11
      %p115 = scmp.lt.s32.totalorder %s11, 3
      %p116 = pnand %p114, %p115
      %p117 = pneg %p116
      // Predicated region
      $region25: #{tpu_custom_call.1} parent=5 // pred_check
        _
      $region26: #{tpu_custom_call.1} parent=5 // pred_check_branch
        %119 = sbr.rel (%p116) target = $region28
      $region27: #{tpu_custom_call.1} parent=5 // pred_region
        %s120 = ssub.s32 %s11, 1
        %p121 = scmp.lt.s32.totalorder %s16, 1
        %s122 = scalar_select %p121, %s16, 1
        %s123 = smul.addr %s122, 54
        %s124 = smul.addr %s123, 8
        %s125 = scalar_lea.vmem %s0, %s124
        %p126 = pneg %p37
        %p127 = pneg %p34
        %p128 = pneg %p58
        %p129 = pneg %p55
        %p130 = pneg %p84
        %p131 = pneg %p81
        %s132 = sand.u32 %s71, 1
        %s133 = scalar_lea.sflag [#allocation3], %s132
        %s134 = sand.u32 %s71, 1
        %s135 = smul.addr %s134, 256
        %s136 = scalar_lea.vmem [#allocation2], %s135
        %p137 = scmp.lt.s32.totalorder %s16, 1
        %s138 = scalar_select %p137, %s16, 1
        %s139 = smul.addr %s138, 54
        %s140 = smul.addr %s139, 8
        %s141 = scalar_lea.vmem %s0, %s140
        %v142 = vld [vmem:[%s141] sm:$0xff]
        %v143 = vld [vmem:[%s141 + $0x8] sm:$0xff]
        %v144 = vld [vmem:[%s141 + $0x10] sm:$0x3]
        %v145 = vld [vmem:[%s141 + $0x18] sm:$0xff]
        %v146 = vld [vmem:[%s141 + $0x20] sm:$0xff]
        %v147 = vld [vmem:[%s141 + $0x28] sm:$0x3]
        %v148 = vld [vmem:[%s141 + $0x30] sm:$0xff]
        %v149 = vld [vmem:[%s141 + $0x38] sm:$0xff]
        %v150 = vld [vmem:[%s141 + $0x40] sm:$0x3]
        %v151 = vld [vmem:[%s141 + $0x48] sm:$0xff]
        %v152 = vld [vmem:[%s141 + $0x50] sm:$0xff]
        %v153 = vld [vmem:[%s141 + $0x58] sm:$0x3]
        %v154 = vld [vmem:[%s141 + $0x60] sm:$0xff]
        %v155 = vld [vmem:[%s141 + $0x68] sm:$0xff]
        %v156 = vld [vmem:[%s141 + $0x70] sm:$0x3]
        %v157 = vld [vmem:[%s141 + $0x78] sm:$0xff]
        %v158 = vld [vmem:[%s141 + $0x80] sm:$0xff]
        %v159 = vld [vmem:[%s141 + $0x88] sm:$0x3]
        %v160 = vld [vmem:[%s141 + $0x90] sm:$0xff]
        %v161 = vld [vmem:[%s141 + $0x98] sm:$0xff]
        %v162 = vld [vmem:[%s141 + $0xa0] sm:$0x3]
        %v163 = vld [vmem:[%s141 + $0xa8] sm:$0xff]
        %v164 = vld [vmem:[%s141 + $0xb0] sm:$0xff]
        %v165 = vld [vmem:[%s141 + $0xb8] sm:$0x3]
        %v166 = vld [vmem:[%s141 + $0xc0] sm:$0xff]
        %v167 = vld [vmem:[%s141 + $0xc8] sm:$0xff]
        %v168 = vld [vmem:[%s141 + $0xd0] sm:$0x3]
        %v169 = vld [vmem:[%s141 + $0xd8] sm:$0xff]
        %v170 = vld [vmem:[%s141 + $0xe0] sm:$0xff]
        %v171 = vld [vmem:[%s141 + $0xe8] sm:$0x3]
        %v172 = vld [vmem:[%s141 + $0xf0] sm:$0xff]
        %v173 = vld [vmem:[%s141 + $0xf8] sm:$0xff]
        %v174 = vld [vmem:[%s141 + $0x100] sm:$0x3]
        %v175 = vld [vmem:[%s141 + $0x108] sm:$0xff]
        %v176 = vld [vmem:[%s141 + $0x110] sm:$0xff]
        %v177 = vld [vmem:[%s141 + $0x118] sm:$0x3]
        %v178 = vld [vmem:[%s141 + $0x120] sm:$0xff]
        %v179 = vld [vmem:[%s141 + $0x128] sm:$0xff]
        %v180 = vld [vmem:[%s141 + $0x130] sm:$0x3]
        %v181 = vld [vmem:[%s141 + $0x138] sm:$0xff]
        %v182 = vld [vmem:[%s141 + $0x140] sm:$0xff]
        %v183 = vld [vmem:[%s141 + $0x148] sm:$0x3]
        %v184 = vld [vmem:[%s141 + $0x150] sm:$0xff]
        %v185 = vld [vmem:[%s141 + $0x158] sm:$0xff]
        %v186 = vld [vmem:[%s141 + $0x160] sm:$0x3]
        %v187 = vld [vmem:[%s141 + $0x168] sm:$0xff]
        %v188 = vld [vmem:[%s141 + $0x170] sm:$0xff]
        %v189 = vld [vmem:[%s141 + $0x178] sm:$0x3]
        %v190 = vld [vmem:[%s141 + $0x180] sm:$0xff]
        %v191 = vld [vmem:[%s141 + $0x188] sm:$0xff]
        %v192 = vld [vmem:[%s141 + $0x190] sm:$0x3]
        %v193 = vld [vmem:[%s141 + $0x198] sm:$0xff]
        %v194 = vld [vmem:[%s141 + $0x1a0] sm:$0xff]
        %v195 = vld [vmem:[%s141 + $0x1a8] sm:$0x3]
        %v196 = vld [vmem:[%s1] sm:$0x7]
        %vm245 = vcmask 1046528
        %v246 = vrot.slane %v142, 1
        %v247 = vrot.slane %v143, 1
        %v248 = vsel %vm245, %v246, %v247
        %v249 = vrot.slane %v144, 1
        %v250 = vsel %vm245, %v247, %v249
        %v251 = vrot.slane %v145, 1
        %v252 = vrot.slane %v146, 1
        %v253 = vsel %vm245, %v251, %v252
        %v254 = vrot.slane %v147, 1
        %v255 = vsel %vm245, %v252, %v254
        %v256 = vrot.slane %v148, 1
        %v257 = vrot.slane %v149, 1
        %v258 = vsel %vm245, %v256, %v257
        %v259 = vrot.slane %v150, 1
        %v260 = vsel %vm245, %v257, %v259
        %v261 = vrot.slane %v151, 1
        %v262 = vrot.slane %v152, 1
        %v263 = vsel %vm245, %v261, %v262
        %v264 = vrot.slane %v153, 1
        %v265 = vsel %vm245, %v262, %v264
        %v266 = vrot.slane %v154, 1
        %v267 = vrot.slane %v155, 1
        %v268 = vsel %vm245, %v266, %v267
        %v269 = vrot.slane %v156, 1
        %v270 = vsel %vm245, %v267, %v269
        %v271 = vrot.slane %v157, 1
        %v272 = vrot.slane %v158, 1
        %v273 = vsel %vm245, %v271, %v272
        %v274 = vrot.slane %v159, 1
        %v275 = vsel %vm245, %v272, %v274
        %v276 = vrot.slane %v160, 1
        %v277 = vrot.slane %v161, 1
        %v278 = vsel %vm245, %v276, %v277
        %v279 = vrot.slane %v162, 1
        %v280 = vsel %vm245, %v277, %v279
        %v281 = vrot.slane %v163, 1
        %v282 = vrot.slane %v164, 1
        %v283 = vsel %vm245, %v281, %v282
        %v284 = vrot.slane %v165, 1
        %v285 = vsel %vm245, %v282, %v284
        %v286 = vrot.slane %v166, 1
        %v287 = vrot.slane %v167, 1
        %v288 = vsel %vm245, %v286, %v287
        %v289 = vrot.slane %v168, 1
        %v290 = vsel %vm245, %v287, %v289
        %v291 = vrot.slane %v169, 1
        %v292 = vrot.slane %v170, 1
        %v293 = vsel %vm245, %v291, %v292
        %v294 = vrot.slane %v171, 1
        %v295 = vsel %vm245, %v292, %v294
        %v296 = vrot.slane %v172, 1
        %v297 = vrot.slane %v173, 1
        %v298 = vsel %vm245, %v296, %v297
        %v299 = vrot.slane %v174, 1
        %v300 = vsel %vm245, %v297, %v299
        %v301 = vrot.slane %v175, 1
        %v302 = vrot.slane %v176, 1
        %v303 = vsel %vm245, %v301, %v302
        %v304 = vrot.slane %v177, 1
        %v305 = vsel %vm245, %v302, %v304
        %v306 = vrot.slane %v178, 1
        %v307 = vrot.slane %v179, 1
        %v308 = vsel %vm245, %v306, %v307
        %v309 = vrot.slane %v180, 1
        %v310 = vsel %vm245, %v307, %v309
        %v311 = vrot.slane %v181, 1
        %v312 = vrot.slane %v182, 1
        %v313 = vsel %vm245, %v311, %v312
        %v314 = vrot.slane %v183, 1
        %v315 = vsel %vm245, %v312, %v314
        %v316 = vrot.slane %v184, 1
        %v317 = vrot.slane %v185, 1
        %v318 = vsel %vm245, %v316, %v317
        %v319 = vrot.slane %v186, 1
        %v320 = vsel %vm245, %v317, %v319
        %v321 = vrot.slane %v187, 1
        %v322 = vrot.slane %v188, 1
        %v323 = vsel %vm245, %v321, %v322
        %v324 = vrot.slane %v189, 1
        %v325 = vsel %vm245, %v322, %v324
        %s326 = scalar_lea.vmem %s1, 4
        %v327 = vld [vmem:[%s326] sm:$0x7]
        %vm328 = vcmask 23552
        %v329 = vsel %vm328, %v248, 0
        %v331 = vsel %vm328, %v250, 0
        %v333 = vsel %vm328, %v253, 0
        %v335 = vsel %vm328, %v255, 0
        %v337 = vsel %vm328, %v258, 0
        %v339 = vsel %vm328, %v260, 0
        %v341 = vsel %vm328, %v263, 0
        %v343 = vsel %vm328, %v265, 0
        %v345 = vsel %vm328, %v268, 0
        %v347 = vsel %vm328, %v270, 0
        %v349 = vsel %vm328, %v273, 0
        %v351 = vsel %vm328, %v275, 0
        %v353 = vsel %vm328, %v278, 0
        %v355 = vsel %vm328, %v280, 0
        %v357 = vsel %vm328, %v283, 0
        %v359 = vsel %vm328, %v285, 0
        %v361 = vsel %vm328, %v288, 0
        %v363 = vsel %vm328, %v290, 0
        %v365 = vsel %vm328, %v293, 0
        %v367 = vsel %vm328, %v295, 0
        %v369 = vsel %vm328, %v298, 0
        %v371 = vsel %vm328, %v300, 0
        %v373 = vsel %vm328, %v303, 0
        %v375 = vsel %vm328, %v305, 0
        %v377 = vsel %vm328, %v308, 0
        %v379 = vsel %vm328, %v310, 0
        %v381 = vsel %vm328, %v313, 0
        %v383 = vsel %vm328, %v315, 0
        %v385 = vsel %vm328, %v318, 0
        %v387 = vsel %vm328, %v320, 0
        %v389 = vsel %vm328, %v323, 0
        %v391 = vsel %vm328, %v325, 0
        %vm393 = vcmask 1042432
        %v395 = vsel %vm393, %v327, 0
        %397 = vmatprep.subr.mxu0 0.0
        %398 = vmatpush1.msra.mxu0 %v395
        %399 = vmatprep.subr.mxu0 0.0
        %400 = vmatpush1.msra.mxu0 0.0
        %401 = vmatprep.subr.mxu0 0.0
        %402 = vmatpush1.msra.mxu0 0.0
        %403 = vmatprep.subr.mxu0 0.0
        %404 = vmatpush1.msra.mxu0 0.0
        %405 = vmatprep.subr.mxu0 0.0
        %406 = vmatpush1.msra.mxu0 0.0
        %407 = vmatprep.subr.mxu0 0.0
        %408 = vmatpush1.msra.mxu0 0.0
        %409 = vmatprep.subr.mxu0 0.0
        %410 = vmatpush1.msra.mxu0 0.0
        %411 = vmatprep.subr.mxu0 0.0
        %412 = vmatpush1.msra.mxu0 0.0
        %413 = vmatprep.subr.mxu0 0.0
        %414 = vmatpush1.msra.mxu0 0.0
        %415 = vmatprep.subr.mxu0 0.0
        %416 = vmatpush1.msra.mxu0 0.0
        %417 = vmatprep.subr.mxu0 0.0
        %418 = vmatpush1.msra.mxu0 0.0
        %419 = vmatprep.subr.mxu0 0.0
        %420 = vmatpush1.msra.mxu0 0.0
        %421 = vmatprep.subr.mxu0 0.0
        %422 = vmatpush1.msra.mxu0 0.0
        %423 = vmatprep.subr.mxu0 0.0
        %424 = vmatpush1.msra.mxu0 0.0
        %425 = vmatprep.subr.mxu0 0.0
        %426 = vmatpush1.msra.mxu0 0.0
        %427 = vmatprep.subr.mxu0 0.0
        %428 = vmatpush1.msra.mxu0 0.0
        %429 = vmatprep.subr.mxu0 0.0
        %430 = vmatpush1.msra.mxu0 0.0
        %431 = vmatprep.subr.mxu0 0.0
        %432 = vmatpush1.msra.mxu0 0.0
        %433 = vmatprep.subr.mxu0 0.0
        %434 = vmatpush1.msra.mxu0 0.0
        %435 = vmatprep.subr.mxu0 0.0
        %436 = vmatpush1.msra.mxu0 0.0
        %437 = vmatprep.subr.mxu0 0.0
        %438 = vmatpush1.msra.mxu0 0.0
        %439 = vmatprep.subr.mxu0 0.0
        %440 = vmatpush1.msra.mxu0 0.0
        %441 = vmatprep.subr.mxu0 0.0
        %442 = vmatpush1.msra.mxu0 0.0
        %443 = vmatprep.subr.mxu0 0.0
        %444 = vmatpush1.msra.mxu0 0.0
        %445 = vmatprep.subr.mxu0 0.0
        %446 = vmatpush1.msra.mxu0 0.0
        %447 = vmatprep.subr.mxu0 0.0
        %448 = vmatpush1.msra.mxu0 0.0
        %449 = vmatprep.subr.mxu0 0.0
        %450 = vmatpush1.msra.mxu0 0.0
        %451 = vmatprep.subr.mxu0 0.0
        %452 = vmatpush1.msra.mxu0 0.0
        %453 = vmatprep.subr.mxu0 0.0
        %454 = vmatpush1.msra.mxu0 0.0
        %455 = vmatprep.subr.mxu0 0.0
        %456 = vmatpush1.msra.mxu0 0.0
        %457 = vmatprep.subr.mxu0 0.0
        %458 = vmatpush1.msra.mxu0 0.0
        %459 = vmatprep.subr.mxu0 0.0
        %460 = vmatpush1.msra.mxu0 0.0
        %461 = vmatprep.mubr.f32.mxu0 0.0
        %462 = vmatmul.mubr.f32.gmra.mrb[0].mxu0 %v329
        %v463 = vpop.f32.mrb[0].mxu0
        %v464 = vadd.f32 0.0, %v463
        %v465 = vpop.f32.mrb[0].mxu0
        %466 = vmatprep.mubr.f32.mxu0 0.0
        %467 = vmatmul.mubr.f32.gmra.mrb[0].mxu0 %v331
        %v468 = vpop.f32.mrb[0].mxu0
        %v469 = vadd.f32 0.0, %v468
        %v470 = vpop.f32.mrb[0].mxu0
        %471 = vmatprep.mubr.f32.mxu0 0.0
        %472 = vmatmul.mubr.f32.gmra.mrb[0].mxu0 %v333
        %v473 = vpop.f32.mrb[0].mxu0
        %v474 = vadd.f32 0.0, %v473
        %v475 = vpop.f32.mrb[0].mxu0
        %476 = vmatprep.mubr.f32.mxu0 0.0
        %477 = vmatmul.mubr.f32.gmra.mrb[0].mxu0 %v335
        %v478 = vpop.f32.mrb[0].mxu0
        %v479 = vadd.f32 0.0, %v478
        %v480 = vpop.f32.mrb[0].mxu0
        %481 = vmatprep.mubr.f32.mxu0 0.0
        %482 = vmatmul.mubr.f32.gmra.mrb[0].mxu0 %v337
        %v483 = vpop.f32.mrb[0].mxu0
        %v484 = vadd.f32 0.0, %v483
        %v485 = vpop.f32.mrb[0].mxu0
        %486 = vmatprep.mubr.f32.mxu0 0.0
        %487 = vmatmul.mubr.f32.gmra.mrb[0].mxu0 %v339
        %v488 = vpop.f32.mrb[0].mxu0
        %v489 = vadd.f32 0.0, %v488
        %v490 = vpop.f32.mrb[0].mxu0
        %491 = vmatprep.mubr.f32.mxu0 0.0
        %492 = vmatmul.mubr.f32.gmra.mrb[0].mxu0 %v341
        %v493 = vpop.f32.mrb[0].mxu0
        %v494 = vadd.f32 0.0, %v493
        %v495 = vpop.f32.mrb[0].mxu0
        %496 = vmatprep.mubr.f32.mxu0 0.0
        %497 = vmatmul.mubr.f32.gmra.mrb[0].mxu0 %v343
        %v498 = vpop.f32.mrb[0].mxu0
        %v499 = vadd.f32 0.0, %v498
        %v500 = vpop.f32.mrb[0].mxu0
        %501 = vmatprep.mubr.f32.mxu0 0.0
        %502 = vmatmul.mubr.f32.gmra.mrb[0].mxu0 %v345
        %v503 = vpop.f32.mrb[0].mxu0
        %v504 = vadd.f32 0.0, %v503
        %v505 = vpop.f32.mrb[0].mxu0
        %506 = vmatprep.mubr.f32.mxu0 0.0
        %507 = vmatmul.mubr.f32.gmra.mrb[0].mxu0 %v347
        %v508 = vpop.f32.mrb[0].mxu0
        %v509 = vadd.f32 0.0, %v508
        %v510 = vpop.f32.mrb[0].mxu0
        %511 = vmatprep.mubr.f32.mxu0 0.0
        %512 = vmatmul.mubr.f32.gmra.mrb[0].mxu0 %v349
        %v513 = vpop.f32.mrb[0].mxu0
        %v514 = vadd.f32 0.0, %v513
        %v515 = vpop.f32.mrb[0].mxu0
        %516 = vmatprep.mubr.f32.mxu0 0.0
        %517 = vmatmul.mubr.f32.gmra.mrb[0].mxu0 %v351
        %v518 = vpop.f32.mrb[0].mxu0
        %v519 = vadd.f32 0.0, %v518
        %v520 = vpop.f32.mrb[0].mxu0
        %521 = vmatprep.mubr.f32.mxu0 0.0
        %522 = vmatmul.mubr.f32.gmra.mrb[0].mxu0 %v353
        %v523 = vpop.f32.mrb[0].mxu0
        %v524 = vadd.f32 0.0, %v523
        %v525 = vpop.f32.mrb[0].mxu0
        %526 = vmatprep.mubr.f32.mxu0 0.0
        %527 = vmatmul.mubr.f32.gmra.mrb[0].mxu0 %v355
        %v528 = vpop.f32.mrb[0].mxu0
        %v529 = vadd.f32 0.0, %v528
        %v530 = vpop.f32.mrb[0].mxu0
        %531 = vmatprep.mubr.f32.mxu0 0.0
        %532 = vmatmul.mubr.f32.gmra.mrb[0].mxu0 %v357
        %v533 = vpop.f32.mrb[0].mxu0
        %v534 = vadd.f32 0.0, %v533
        %v535 = vpop.f32.mrb[0].mxu0
        %536 = vmatprep.mubr.f32.mxu0 0.0
        %537 = vmatmul.mubr.f32.gmra.mrb[0].mxu0 %v359
        %v538 = vpop.f32.mrb[0].mxu0
        %v539 = vadd.f32 0.0, %v538
        %v540 = vpop.f32.mrb[0].mxu0
        %541 = vmatprep.mubr.f32.mxu0 0.0
        %542 = vmatmul.mubr.f32.gmra.mrb[0].mxu0 %v361
        %v543 = vpop.f32.mrb[0].mxu0
        %v544 = vadd.f32 0.0, %v543
        %v545 = vpop.f32.mrb[0].mxu0
        %546 = vmatprep.mubr.f32.mxu0 0.0
        %547 = vmatmul.mubr.f32.gmra.mrb[0].mxu0 %v363
        %v548 = vpop.f32.mrb[0].mxu0
        %v549 = vadd.f32 0.0, %v548
        %v550 = vpop.f32.mrb[0].mxu0
        %551 = vmatprep.mubr.f32.mxu0 0.0
        %552 = vmatmul.mubr.f32.gmra.mrb[0].mxu0 %v365
        %v553 = vpop.f32.mrb[0].mxu0
        %v554 = vadd.f32 0.0, %v553
        %v555 = vpop.f32.mrb[0].mxu0
        %556 = vmatprep.mubr.f32.mxu0 0.0
        %557 = vmatmul.mubr.f32.gmra.mrb[0].mxu0 %v367
        %v558 = vpop.f32.mrb[0].mxu0
        %v559 = vadd.f32 0.0, %v558
        %v560 = vpop.f32.mrb[0].mxu0
        %561 = vmatprep.mubr.f32.mxu0 0.0
        %562 = vmatmul.mubr.f32.gmra.mrb[0].mxu0 %v369
        %v563 = vpop.f32.mrb[0].mxu0
        %v564 = vadd.f32 0.0, %v563
        %v565 = vpop.f32.mrb[0].mxu0
        %566 = vmatprep.mubr.f32.mxu0 0.0
        %567 = vmatmul.mubr.f32.gmra.mrb[0].mxu0 %v371
        %v568 = vpop.f32.mrb[0].mxu0
        %v569 = vadd.f32 0.0, %v568
        %v570 = vpop.f32.mrb[0].mxu0
        %571 = vmatprep.mubr.f32.mxu0 0.0
        %572 = vmatmul.mubr.f32.gmra.mrb[0].mxu0 %v373
        %v573 = vpop.f32.mrb[0].mxu0
        %v574 = vadd.f32 0.0, %v573
        %v575 = vpop.f32.mrb[0].mxu0
        %576 = vmatprep.mubr.f32.mxu0 0.0
        %577 = vmatmul.mubr.f32.gmra.mrb[0].mxu0 %v375
        %v578 = vpop.f32.mrb[0].mxu0
        %v579 = vadd.f32 0.0, %v578
        %v580 = vpop.f32.mrb[0].mxu0
        %581 = vmatprep.mubr.f32.mxu0 0.0
        %582 = vmatmul.mubr.f32.gmra.mrb[0].mxu0 %v377
        %v583 = vpop.f32.mrb[0].mxu0
        %v584 = vadd.f32 0.0, %v583
        %v585 = vpop.f32.mrb[0].mxu0
        %586 = vmatprep.mubr.f32.mxu0 0.0
        %587 = vmatmul.mubr.f32.gmra.mrb[0].mxu0 %v379
        %v588 = vpop.f32.mrb[0].mxu0
        %v589 = vadd.f32 0.0, %v588
        %v590 = vpop.f32.mrb[0].mxu0
        %591 = vmatprep.mubr.f32.mxu0 0.0
        %592 = vmatmul.mubr.f32.gmra.mrb[0].mxu0 %v381
        %v593 = vpop.f32.mrb[0].mxu0
        %v594 = vadd.f32 0.0, %v593
        %v595 = vpop.f32.mrb[0].mxu0
        %596 = vmatprep.mubr.f32.mxu0 0.0
        %597 = vmatmul.mubr.f32.gmra.mrb[0].mxu0 %v383
        %v598 = vpop.f32.mrb[0].mxu0
        %v599 = vadd.f32 0.0, %v598
        %v600 = vpop.f32.mrb[0].mxu0
        %601 = vmatprep.mubr.f32.mxu0 0.0
        %602 = vmatmul.mubr.f32.gmra.mrb[0].mxu0 %v385
        %v603 = vpop.f32.mrb[0].mxu0
        %v604 = vadd.f32 0.0, %v603
        %v605 = vpop.f32.mrb[0].mxu0
        %606 = vmatprep.mubr.f32.mxu0 0.0
        %607 = vmatmul.mubr.f32.gmra.mrb[0].mxu0 %v387
        %v608 = vpop.f32.mrb[0].mxu0
        %v609 = vadd.f32 0.0, %v608
        %v610 = vpop.f32.mrb[0].mxu0
        %611 = vmatprep.mubr.f32.mxu0 0.0
        %612 = vmatmul.mubr.f32.gmra.mrb[0].mxu0 %v389
        %v613 = vpop.f32.mrb[0].mxu0
        %v614 = vadd.f32 0.0, %v613
        %v615 = vpop.f32.mrb[0].mxu0
        %616 = vmatprep.mubr.f32.mxu0 0.0
        %617 = vmatmul.mubr.f32.gmra.mrb[0].mxu0 %v391
        %v618 = vpop.f32.mrb[0].mxu0
        %v619 = vadd.f32 0.0, %v618
        %v620 = vpop.f32.mrb[0].mxu0
        %621 = vdwg.mxu0
        %v622 = vsel %vm328, %v142, 0
        %v624 = vsel %vm328, %v143, 0
        %v626 = vsel %vm328, %v145, 0
        %v628 = vsel %vm328, %v146, 0
        %v630 = vsel %vm328, %v148, 0
        %v632 = vsel %vm328, %v149, 0
        %v634 = vsel %vm328, %v151, 0
        %v636 = vsel %vm328, %v152, 0
        %v638 = vsel %vm328, %v154, 0
        %v640 = vsel %vm328, %v155, 0
        %v642 = vsel %vm328, %v157, 0
        %v644 = vsel %vm328, %v158, 0
        %v646 = vsel %vm328, %v160, 0
        %v648 = vsel %vm328, %v161, 0
        %v650 = vsel %vm328, %v163, 0
        %v652 = vsel %vm328, %v164, 0
        %v654 = vsel %vm328, %v166, 0
        %v656 = vsel %vm328, %v167, 0
        %v658 = vsel %vm328, %v169, 0
        %v660 = vsel %vm328, %v170, 0
        %v662 = vsel %vm328, %v172, 0
        %v664 = vsel %vm328, %v173, 0
        %v666 = vsel %vm328, %v175, 0
        %v668 = vsel %vm328, %v176, 0
        %v670 = vsel %vm328, %v178, 0
        %v672 = vsel %vm328, %v179, 0
        %v674 = vsel %vm328, %v181, 0
        %v676 = vsel %vm328, %v182, 0
        %v678 = vsel %vm328, %v184, 0
        %v680 = vsel %vm328, %v185, 0
        %v682 = vsel %vm328, %v187, 0
        %v684 = vsel %vm328, %v188, 0
        %v687 = vsel %vm393, %v196, 0
        %689 = vmatprep.subr.mxu0 0.0
        %690 = vmatpush1.msra.mxu0 %v687
        %691 = vmatprep.subr.mxu0 0.0
        %692 = vmatpush1.msra.mxu0 0.0
        %693 = vmatprep.subr.mxu0 0.0
        %694 = vmatpush1.msra.mxu0 0.0
        %695 = vmatprep.subr.mxu0 0.0
        %696 = vmatpush1.msra.mxu0 0.0
        %697 = vmatprep.subr.mxu0 0.0
        %698 = vmatpush1.msra.mxu0 0.0
        %699 = vmatprep.subr.mxu0 0.0
        %700 = vmatpush1.msra.mxu0 0.0
        %701 = vmatprep.subr.mxu0 0.0
        %702 = vmatpush1.msra.mxu0 0.0
        %703 = vmatprep.subr.mxu0 0.0
        %704 = vmatpush1.msra.mxu0 0.0
        %705 = vmatprep.subr.mxu0 0.0
        %706 = vmatpush1.msra.mxu0 0.0
        %707 = vmatprep.subr.mxu0 0.0
        %708 = vmatpush1.msra.mxu0 0.0
        %709 = vmatprep.subr.mxu0 0.0
        %710 = vmatpush1.msra.mxu0 0.0
        %711 = vmatprep.subr.mxu0 0.0
        %712 = vmatpush1.msra.mxu0 0.0
        %713 = vmatprep.subr.mxu0 0.0
        %714 = vmatpush1.msra.mxu0 0.0
        %715 = vmatprep.subr.mxu0 0.0
        %716 = vmatpush1.msra.mxu0 0.0
        %717 = vmatprep.subr.mxu0 0.0
        %718 = vmatpush1.msra.mxu0 0.0
        %719 = vmatprep.subr.mxu0 0.0
        %720 = vmatpush1.msra.mxu0 0.0
        %721 = vmatprep.subr.mxu0 0.0
        %722 = vmatpush1.msra.mxu0 0.0
        %723 = vmatprep.subr.mxu0 0.0
        %724 = vmatpush1.msra.mxu0 0.0
        %725 = vmatprep.subr.mxu0 0.0
        %726 = vmatpush1.msra.mxu0 0.0
        %727 = vmatprep.subr.mxu0 0.0
        %728 = vmatpush1.msra.mxu0 0.0
        %729 = vmatprep.subr.mxu0 0.0
        %730 = vmatpush1.msra.mxu0 0.0
        %731 = vmatprep.subr.mxu0 0.0
        %732 = vmatpush1.msra.mxu0 0.0
        %733 = vmatprep.subr.mxu0 0.0
        %734 = vmatpush1.msra.mxu0 0.0
        %735 = vmatprep.subr.mxu0 0.0
        %736 = vmatpush1.msra.mxu0 0.0
        %737 = vmatprep.subr.mxu0 0.0
        %738 = vmatpush1.msra.mxu0 0.0
        %739 = vmatprep.subr.mxu0 0.0
        %740 = vmatpush1.msra.mxu0 0.0
        %741 = vmatprep.subr.mxu0 0.0
        %742 = vmatpush1.msra.mxu0 0.0
        %743 = vmatprep.subr.mxu0 0.0
        %744 = vmatpush1.msra.mxu0 0.0
        %745 = vmatprep.subr.mxu0 0.0
        %746 = vmatpush1.msra.mxu0 0.0
        %747 = vmatprep.subr.mxu0 0.0
        %748 = vmatpush1.msra.mxu0 0.0
        %749 = vmatprep.subr.mxu0 0.0
        %750 = vmatpush1.msra.mxu0 0.0
        %751 = vmatprep.subr.mxu0 0.0
        %752 = vmatpush1.msra.mxu0 0.0
        %753 = vmatprep.mubr.f32.mxu0 0.0
        %754 = vmatmul.mubr.f32.gmra.mrb[0].mxu0 %v622
        %v755 = vpop.f32.mrb[0].mxu0
        %v756 = vadd.f32 %v464, %v755
        %v757 = vpop.f32.mrb[0].mxu0
        %758 = vmatprep.mubr.f32.mxu0 0.0
        %759 = vmatmul.mubr.f32.gmra.mrb[0].mxu0 %v624
        %v760 = vpop.f32.mrb[0].mxu0
        %v761 = vadd.f32 %v469, %v760
        %v762 = vpop.f32.mrb[0].mxu0
        %763 = vmatprep.mubr.f32.mxu0 0.0
        %764 = vmatmul.mubr.f32.gmra.mrb[0].mxu0 %v626
        %v765 = vpop.f32.mrb[0].mxu0
        %v766 = vadd.f32 %v474, %v765
        %v767 = vpop.f32.mrb[0].mxu0
        %768 = vmatprep.mubr.f32.mxu0 0.0
        %769 = vmatmul.mubr.f32.gmra.mrb[0].mxu0 %v628
        %v770 = vpop.f32.mrb[0].mxu0
        %v771 = vadd.f32 %v479, %v770
        %v772 = vpop.f32.mrb[0].mxu0
        %773 = vmatprep.mubr.f32.mxu0 0.0
        %774 = vmatmul.mubr.f32.gmra.mrb[0].mxu0 %v630
        %v775 = vpop.f32.mrb[0].mxu0
        %v776 = vadd.f32 %v484, %v775
        %v777 = vpop.f32.mrb[0].mxu0
        %778 = vmatprep.mubr.f32.mxu0 0.0
        %779 = vmatmul.mubr.f32.gmra.mrb[0].mxu0 %v632
        %v780 = vpop.f32.mrb[0].mxu0
        %v781 = vadd.f32 %v489, %v780
        %v782 = vpop.f32.mrb[0].mxu0
        %783 = vmatprep.mubr.f32.mxu0 0.0
        %784 = vmatmul.mubr.f32.gmra.mrb[0].mxu0 %v634
        %v785 = vpop.f32.mrb[0].mxu0
        %v786 = vadd.f32 %v494, %v785
        %v787 = vpop.f32.mrb[0].mxu0
        %788 = vmatprep.mubr.f32.mxu0 0.0
        %789 = vmatmul.mubr.f32.gmra.mrb[0].mxu0 %v636
        %v790 = vpop.f32.mrb[0].mxu0
        %v791 = vadd.f32 %v499, %v790
        %v792 = vpop.f32.mrb[0].mxu0
        %793 = vmatprep.mubr.f32.mxu0 0.0
        %794 = vmatmul.mubr.f32.gmra.mrb[0].mxu0 %v638
        %v795 = vpop.f32.mrb[0].mxu0
        %v796 = vadd.f32 %v504, %v795
        %v797 = vpop.f32.mrb[0].mxu0
        %798 = vmatprep.mubr.f32.mxu0 0.0
        %799 = vmatmul.mubr.f32.gmra.mrb[0].mxu0 %v640
        %v800 = vpop.f32.mrb[0].mxu0
        %v801 = vadd.f32 %v509, %v800
        %v802 = vpop.f32.mrb[0].mxu0
        %803 = vmatprep.mubr.f32.mxu0 0.0
        %804 = vmatmul.mubr.f32.gmra.mrb[0].mxu0 %v642
        %v805 = vpop.f32.mrb[0].mxu0
        %v806 = vadd.f32 %v514, %v805
        %v807 = vpop.f32.mrb[0].mxu0
        %808 = vmatprep.mubr.f32.mxu0 0.0
        %809 = vmatmul.mubr.f32.gmra.mrb[0].mxu0 %v644
        %v810 = vpop.f32.mrb[0].mxu0
        %v811 = vadd.f32 %v519, %v810
        %v812 = vpop.f32.mrb[0].mxu0
        %813 = vmatprep.mubr.f32.mxu0 0.0
        %814 = vmatmul.mubr.f32.gmra.mrb[0].mxu0 %v646
        %v815 = vpop.f32.mrb[0].mxu0
        %v816 = vadd.f32 %v524, %v815
        %v817 = vpop.f32.mrb[0].mxu0
        %818 = vmatprep.mubr.f32.mxu0 0.0
        %819 = vmatmul.mubr.f32.gmra.mrb[0].mxu0 %v648
        %v820 = vpop.f32.mrb[0].mxu0
        %v821 = vadd.f32 %v529, %v820
        %v822 = vpop.f32.mrb[0].mxu0
        %823 = vmatprep.mubr.f32.mxu0 0.0
        %824 = vmatmul.mubr.f32.gmra.mrb[0].mxu0 %v650
        %v825 = vpop.f32.mrb[0].mxu0
        %v826 = vadd.f32 %v534, %v825
        %v827 = vpop.f32.mrb[0].mxu0
        %828 = vmatprep.mubr.f32.mxu0 0.0
        %829 = vmatmul.mubr.f32.gmra.mrb[0].mxu0 %v652
        %v830 = vpop.f32.mrb[0].mxu0
        %v831 = vadd.f32 %v539, %v830
        %v832 = vpop.f32.mrb[0].mxu0
        %833 = vmatprep.mubr.f32.mxu0 0.0
        %834 = vmatmul.mubr.f32.gmra.mrb[0].mxu0 %v654
        %v835 = vpop.f32.mrb[0].mxu0
        %v836 = vadd.f32 %v544, %v835
        %v837 = vpop.f32.mrb[0].mxu0
        %838 = vmatprep.mubr.f32.mxu0 0.0
        %839 = vmatmul.mubr.f32.gmra.mrb[0].mxu0 %v656
        %v840 = vpop.f32.mrb[0].mxu0
        %v841 = vadd.f32 %v549, %v840
        %v842 = vpop.f32.mrb[0].mxu0
        %843 = vmatprep.mubr.f32.mxu0 0.0
        %844 = vmatmul.mubr.f32.gmra.mrb[0].mxu0 %v658
        %v845 = vpop.f32.mrb[0].mxu0
        %v846 = vadd.f32 %v554, %v845
        %v847 = vpop.f32.mrb[0].mxu0
        %848 = vmatprep.mubr.f32.mxu0 0.0
        %849 = vmatmul.mubr.f32.gmra.mrb[0].mxu0 %v660
        %v850 = vpop.f32.mrb[0].mxu0
        %v851 = vadd.f32 %v559, %v850
        %v852 = vpop.f32.mrb[0].mxu0
        %853 = vmatprep.mubr.f32.mxu0 0.0
        %854 = vmatmul.mubr.f32.gmra.mrb[0].mxu0 %v662
        %v855 = vpop.f32.mrb[0].mxu0
        %v856 = vadd.f32 %v564, %v855
        %v857 = vpop.f32.mrb[0].mxu0
        %858 = vmatprep.mubr.f32.mxu0 0.0
        %859 = vmatmul.mubr.f32.gmra.mrb[0].mxu0 %v664
        %v860 = vpop.f32.mrb[0].mxu0
        %v861 = vadd.f32 %v569, %v860
        %v862 = vpop.f32.mrb[0].mxu0
        %863 = vmatprep.mubr.f32.mxu0 0.0
        %864 = vmatmul.mubr.f32.gmra.mrb[0].mxu0 %v666
        %v865 = vpop.f32.mrb[0].mxu0
        %v866 = vadd.f32 %v574, %v865
        %v867 = vpop.f32.mrb[0].mxu0
        %868 = vmatprep.mubr.f32.mxu0 0.0
        %869 = vmatmul.mubr.f32.gmra.mrb[0].mxu0 %v668
        %v870 = vpop.f32.mrb[0].mxu0
        %v871 = vadd.f32 %v579, %v870
        %v872 = vpop.f32.mrb[0].mxu0
        %873 = vmatprep.mubr.f32.mxu0 0.0
        %874 = vmatmul.mubr.f32.gmra.mrb[0].mxu0 %v670
        %v875 = vpop.f32.mrb[0].mxu0
        %v876 = vadd.f32 %v584, %v875
        %v877 = vpop.f32.mrb[0].mxu0
        %878 = vmatprep.mubr.f32.mxu0 0.0
        %879 = vmatmul.mubr.f32.gmra.mrb[0].mxu0 %v672
        %v880 = vpop.f32.mrb[0].mxu0
        %v881 = vadd.f32 %v589, %v880
        %v882 = vpop.f32.mrb[0].mxu0
        %883 = vmatprep.mubr.f32.mxu0 0.0
        %884 = vmatmul.mubr.f32.gmra.mrb[0].mxu0 %v674
        %v885 = vpop.f32.mrb[0].mxu0
        %v886 = vadd.f32 %v594, %v885
        %v887 = vpop.f32.mrb[0].mxu0
        %888 = vmatprep.mubr.f32.mxu0 0.0
        %889 = vmatmul.mubr.f32.gmra.mrb[0].mxu0 %v676
        %v890 = vpop.f32.mrb[0].mxu0
        %v891 = vadd.f32 %v599, %v890
        %v892 = vpop.f32.mrb[0].mxu0
        %893 = vmatprep.mubr.f32.mxu0 0.0
        %894 = vmatmul.mubr.f32.gmra.mrb[0].mxu0 %v678
        %v895 = vpop.f32.mrb[0].mxu0
        %v896 = vadd.f32 %v604, %v895
        %v897 = vpop.f32.mrb[0].mxu0
        %898 = vmatprep.mubr.f32.mxu0 0.0
        %899 = vmatmul.mubr.f32.gmra.mrb[0].mxu0 %v680
        %v900 = vpop.f32.mrb[0].mxu0
        %v901 = vadd.f32 %v609, %v900
        %v902 = vpop.f32.mrb[0].mxu0
        %903 = vmatprep.mubr.f32.mxu0 0.0
        %904 = vmatmul.mubr.f32.gmra.mrb[0].mxu0 %v682
        %v905 = vpop.f32.mrb[0].mxu0
        %v906 = vadd.f32 %v614, %v905
        %v907 = vpop.f32.mrb[0].mxu0
        %908 = vmatprep.mubr.f32.mxu0 0.0
        %909 = vmatmul.mubr.f32.gmra.mrb[0].mxu0 %v684
        %v910 = vpop.f32.mrb[0].mxu0
        %v911 = vadd.f32 %v619, %v910
        %v912 = vpop.f32.mrb[0].mxu0
        %913 = vdwg.mxu0
        %vm914 = vcmask 1045504
        %v915 = vrot.slane %v142, 2
        %v916 = vrot.slane %v143, 2
        %v917 = vsel %vm914, %v915, %v916
        %v918 = vrot.slane %v144, 2
        %v919 = vsel %vm914, %v916, %v918
        %v920 = vrot.slane %v145, 2
        %v921 = vrot.slane %v146, 2
        %v922 = vsel %vm914, %v920, %v921
        %v923 = vrot.slane %v147, 2
        %v924 = vsel %vm914, %v921, %v923
        %v925 = vrot.slane %v148, 2
        %v926 = vrot.slane %v149, 2
        %v927 = vsel %vm914, %v925, %v926
        %v928 = vrot.slane %v150, 2
        %v929 = vsel %vm914, %v926, %v928
        %v930 = vrot.slane %v151, 2
        %v931 = vrot.slane %v152, 2
        %v932 = vsel %vm914, %v930, %v931
        %v933 = vrot.slane %v153, 2
        %v934 = vsel %vm914, %v931, %v933
        %v935 = vrot.slane %v154, 2
        %v936 = vrot.slane %v155, 2
        %v937 = vsel %vm914, %v935, %v936
        %v938 = vrot.slane %v156, 2
        %v939 = vsel %vm914, %v936, %v938
        %v940 = vrot.slane %v157, 2
        %v941 = vrot.slane %v158, 2
        %v942 = vsel %vm914, %v940, %v941
        %v943 = vrot.slane %v159, 2
        %v944 = vsel %vm914, %v941, %v943
        %v945 = vrot.slane %v160, 2
        %v946 = vrot.slane %v161, 2
        %v947 = vsel %vm914, %v945, %v946
        %v948 = vrot.slane %v162, 2
        %v949 = vsel %vm914, %v946, %v948
        %v950 = vrot.slane %v163, 2
        %v951 = vrot.slane %v164, 2
        %v952 = vsel %vm914, %v950, %v951
        %v953 = vrot.slane %v165, 2
        %v954 = vsel %vm914, %v951, %v953
        %v955 = vrot.slane %v166, 2
        %v956 = vrot.slane %v167, 2
        %v957 = vsel %vm914, %v955, %v956
        %v958 = vrot.slane %v168, 2
        %v959 = vsel %vm914, %v956, %v958
        %v960 = vrot.slane %v169, 2
        %v961 = vrot.slane %v170, 2
        %v962 = vsel %vm914, %v960, %v961
        %v963 = vrot.slane %v171, 2
        %v964 = vsel %vm914, %v961, %v963
        %v965 = vrot.slane %v172, 2
        %v966 = vrot.slane %v173, 2
        %v967 = vsel %vm914, %v965, %v966
        %v968 = vrot.slane %v174, 2
        %v969 = vsel %vm914, %v966, %v968
        %v970 = vrot.slane %v175, 2
        %v971 = vrot.slane %v176, 2
        %v972 = vsel %vm914, %v970, %v971
        %v973 = vrot.slane %v177, 2
        %v974 = vsel %vm914, %v971, %v973
        %v975 = vrot.slane %v178, 2
        %v976 = vrot.slane %v179, 2
        %v977 = vsel %vm914, %v975, %v976
        %v978 = vrot.slane %v180, 2
        %v979 = vsel %vm914, %v976, %v978
        %v980 = vrot.slane %v181, 2
        %v981 = vrot.slane %v182, 2
        %v982 = vsel %vm914, %v980, %v981
        %v983 = vrot.slane %v183, 2
        %v984 = vsel %vm914, %v981, %v983
        %v985 = vrot.slane %v184, 2
        %v986 = vrot.slane %v185, 2
        %v987 = vsel %vm914, %v985, %v986
        %v988 = vrot.slane %v186, 2
        %v989 = vsel %vm914, %v986, %v988
        %v990 = vrot.slane %v187, 2
        %v991 = vrot.slane %v188, 2
        %v992 = vsel %vm914, %v990, %v991
        %v993 = vrot.slane %v189, 2
        %v994 = vsel %vm914, %v991, %v993
        %s995 = scalar_lea.vmem %s1, 8
        %v996 = vld [vmem:[%s995] sm:$0x7]
        %v997 = vsel %vm328, %v917, 0
        %v999 = vsel %vm328, %v919, 0
        %v1001 = vsel %vm328, %v922, 0
        %v1003 = vsel %vm328, %v924, 0
        %v1005 = vsel %vm328, %v927, 0
        %v1007 = vsel %vm328, %v929, 0
        %v1009 = vsel %vm328, %v932, 0
        %v1011 = vsel %vm328, %v934, 0
        %v1013 = vsel %vm328, %v937, 0
        %v1015 = vsel %vm328, %v939, 0
        %v1017 = vsel %vm328, %v942, 0
        %v1019 = vsel %vm328, %v944, 0
        %v1021 = vsel %vm328, %v947, 0
        %v1023 = vsel %vm328, %v949, 0
        %v1025 = vsel %vm328, %v952, 0
        %v1027 = vsel %vm328, %v954, 0
        %v1029 = vsel %vm328, %v957, 0
        %v1031 = vsel %vm328, %v959, 0
        %v1033 = vsel %vm328, %v962, 0
        %v1035 = vsel %vm328, %v964, 0
        %v1037 = vsel %vm328, %v967, 0
        %v1039 = vsel %vm328, %v969, 0
        %v1041 = vsel %vm328, %v972, 0
        %v1043 = vsel %vm328, %v974, 0
        %v1045 = vsel %vm328, %v977, 0
        %v1047 = vsel %vm328, %v979, 0
        %v1049 = vsel %vm328, %v982, 0
        %v1051 = vsel %vm328, %v984, 0
        %v1053 = vsel %vm328, %v987, 0
        %v1055 = vsel %vm328, %v989, 0
        %v1057 = vsel %vm328, %v992, 0
        %v1059 = vsel %vm328, %v994, 0
        %v1062 = vsel %vm393, %v996, 0
        %1064 = vmatprep.subr.mxu0 0.0
        %1065 = vmatpush1.msra.mxu0 %v1062
        %1066 = vmatprep.subr.mxu0 0.0
        %1067 = vmatpush1.msra.mxu0 0.0
        %1068 = vmatprep.subr.mxu0 0.0
        %1069 = vmatpush1.msra.mxu0 0.0
        %1070 = vmatprep.subr.mxu0 0.0
        %1071 = vmatpush1.msra.mxu0 0.0
        %1072 = vmatprep.subr.mxu0 0.0
        %1073 = vmatpush1.msra.mxu0 0.0
        %1074 = vmatprep.subr.mxu0 0.0
        %1075 = vmatpush1.msra.mxu0 0.0
        %1076 = vmatprep.subr.mxu0 0.0
        %1077 = vmatpush1.msra.mxu0 0.0
        %1078 = vmatprep.subr.mxu0 0.0
        %1079 = vmatpush1.msra.mxu0 0.0
        %1080 = vmatprep.subr.mxu0 0.0
        %1081 = vmatpush1.msra.mxu0 0.0
        %1082 = vmatprep.subr.mxu0 0.0
        %1083 = vmatpush1.msra.mxu0 0.0
        %1084 = vmatprep.subr.mxu0 0.0
        %1085 = vmatpush1.msra.mxu0 0.0
        %1086 = vmatprep.subr.mxu0 0.0
        %1087 = vmatpush1.msra.mxu0 0.0
        %1088 = vmatprep.subr.mxu0 0.0
        %1089 = vmatpush1.msra.mxu0 0.0
        %1090 = vmatprep.subr.mxu0 0.0
        %1091 = vmatpush1.msra.mxu0 0.0
        %1092 = vmatprep.subr.mxu0 0.0
        %1093 = vmatpush1.msra.mxu0 0.0
        %1094 = vmatprep.subr.mxu0 0.0
        %1095 = vmatpush1.msra.mxu0 0.0
        %1096 = vmatprep.subr.mxu0 0.0
        %1097 = vmatpush1.msra.mxu0 0.0
        %1098 = vmatprep.subr.mxu0 0.0
        %1099 = vmatpush1.msra.mxu0 0.0
        %1100 = vmatprep.subr.mxu0 0.0
        %1101 = vmatpush1.msra.mxu0 0.0
        %1102 = vmatprep.subr.mxu0 0.0
        %1103 = vmatpush1.msra.mxu0 0.0
        %1104 = vmatprep.subr.mxu0 0.0
        %1105 = vmatpush1.msra.mxu0 0.0
        %1106 = vmatprep.subr.mxu0 0.0
        %1107 = vmatpush1.msra.mxu0 0.0
        %1108 = vmatprep.subr.mxu0 0.0
        %1109 = vmatpush1.msra.mxu0 0.0
        %1110 = vmatprep.subr.mxu0 0.0
        %1111 = vmatpush1.msra.mxu0 0.0
        %1112 = vmatprep.subr.mxu0 0.0
        %1113 = vmatpush1.msra.mxu0 0.0
        %1114 = vmatprep.subr.mxu0 0.0
        %1115 = vmatpush1.msra.mxu0 0.0
        %1116 = vmatprep.subr.mxu0 0.0
        %1117 = vmatpush1.msra.mxu0 0.0
        %1118 = vmatprep.subr.mxu0 0.0
        %1119 = vmatpush1.msra.mxu0 0.0
        %1120 = vmatprep.subr.mxu0 0.0
        %1121 = vmatpush1.msra.mxu0 0.0
        %1122 = vmatprep.subr.mxu0 0.0
        %1123 = vmatpush1.msra.mxu0 0.0
        %1124 = vmatprep.subr.mxu0 0.0
        %1125 = vmatpush1.msra.mxu0 0.0
        %1126 = vmatprep.subr.mxu0 0.0
        %1127 = vmatpush1.msra.mxu0 0.0
        %1128 = vmatprep.mubr.f32.mxu0 0.0
        %1129 = vmatmul.mubr.f32.gmra.mrb[0].mxu0 %v997
        %v1130 = vpop.f32.mrb[0].mxu0
        %v1131 = vadd.f32 0.0, %v1130
        %v1132 = vpop.f32.mrb[0].mxu0
        %1133 = vmatprep.mubr.f32.mxu0 0.0
        %1134 = vmatmul.mubr.f32.gmra.mrb[0].mxu0 %v999
        %v1135 = vpop.f32.mrb[0].mxu0
        %v1136 = vadd.f32 0.0, %v1135
        %v1137 = vpop.f32.mrb[0].mxu0
        %1138 = vmatprep.mubr.f32.mxu0 0.0
        %1139 = vmatmul.mubr.f32.gmra.mrb[0].mxu0 %v1001
        %v1140 = vpop.f32.mrb[0].mxu0
        %v1141 = vadd.f32 0.0, %v1140
        %v1142 = vpop.f32.mrb[0].mxu0
        %1143 = vmatprep.mubr.f32.mxu0 0.0
        %1144 = vmatmul.mubr.f32.gmra.mrb[0].mxu0 %v1003
        %v1145 = vpop.f32.mrb[0].mxu0
        %v1146 = vadd.f32 0.0, %v1145
        %v1147 = vpop.f32.mrb[0].mxu0
        %1148 = vmatprep.mubr.f32.mxu0 0.0
        %1149 = vmatmul.mubr.f32.gmra.mrb[0].mxu0 %v1005
        %v1150 = vpop.f32.mrb[0].mxu0
        %v1151 = vadd.f32 0.0, %v1150
        %v1152 = vpop.f32.mrb[0].mxu0
        %1153 = vmatprep.mubr.f32.mxu0 0.0
        %1154 = vmatmul.mubr.f32.gmra.mrb[0].mxu0 %v1007
        %v1155 = vpop.f32.mrb[0].mxu0
        %v1156 = vadd.f32 0.0, %v1155
        %v1157 = vpop.f32.mrb[0].mxu0
        %1158 = vmatprep.mubr.f32.mxu0 0.0
        %1159 = vmatmul.mubr.f32.gmra.mrb[0].mxu0 %v1009
        %v1160 = vpop.f32.mrb[0].mxu0
        %v1161 = vadd.f32 0.0, %v1160
        %v1162 = vpop.f32.mrb[0].mxu0
        %1163 = vmatprep.mubr.f32.mxu0 0.0
        %1164 = vmatmul.mubr.f32.gmra.mrb[0].mxu0 %v1011
        %v1165 = vpop.f32.mrb[0].mxu0
        %v1166 = vadd.f32 0.0, %v1165
        %v1167 = vpop.f32.mrb[0].mxu0
        %1168 = vmatprep.mubr.f32.mxu0 0.0
        %1169 = vmatmul.mubr.f32.gmra.mrb[0].mxu0 %v1013
        %v1170 = vpop.f32.mrb[0].mxu0
        %v1171 = vadd.f32 0.0, %v1170
        %v1172 = vpop.f32.mrb[0].mxu0
        %1173 = vmatprep.mubr.f32.mxu0 0.0
        %1174 = vmatmul.mubr.f32.gmra.mrb[0].mxu0 %v1015
        %v1175 = vpop.f32.mrb[0].mxu0
        %v1176 = vadd.f32 0.0, %v1175
        %v1177 = vpop.f32.mrb[0].mxu0
        %1178 = vmatprep.mubr.f32.mxu0 0.0
        %1179 = vmatmul.mubr.f32.gmra.mrb[0].mxu0 %v1017
        %v1180 = vpop.f32.mrb[0].mxu0
        %v1181 = vadd.f32 0.0, %v1180
        %v1182 = vpop.f32.mrb[0].mxu0
        %1183 = vmatprep.mubr.f32.mxu0 0.0
        %1184 = vmatmul.mubr.f32.gmra.mrb[0].mxu0 %v1019
        %v1185 = vpop.f32.mrb[0].mxu0
        %v1186 = vadd.f32 0.0, %v1185
        %v1187 = vpop.f32.mrb[0].mxu0
        %1188 = vmatprep.mubr.f32.mxu0 0.0
        %1189 = vmatmul.mubr.f32.gmra.mrb[0].mxu0 %v1021
        %v1190 = vpop.f32.mrb[0].mxu0
        %v1191 = vadd.f32 0.0, %v1190
        %v1192 = vpop.f32.mrb[0].mxu0
        %1193 = vmatprep.mubr.f32.mxu0 0.0
        %1194 = vmatmul.mubr.f32.gmra.mrb[0].mxu0 %v1023
        %v1195 = vpop.f32.mrb[0].mxu0
        %v1196 = vadd.f32 0.0, %v1195
        %v1197 = vpop.f32.mrb[0].mxu0
        %1198 = vmatprep.mubr.f32.mxu0 0.0
        %1199 = vmatmul.mubr.f32.gmra.mrb[0].mxu0 %v1025
        %v1200 = vpop.f32.mrb[0].mxu0
        %v1201 = vadd.f32 0.0, %v1200
        %v1202 = vpop.f32.mrb[0].mxu0
        %1203 = vmatprep.mubr.f32.mxu0 0.0
        %1204 = vmatmul.mubr.f32.gmra.mrb[0].mxu0 %v1027
        %v1205 = vpop.f32.mrb[0].mxu0
        %v1206 = vadd.f32 0.0, %v1205
        %v1207 = vpop.f32.mrb[0].mxu0
        %1208 = vmatprep.mubr.f32.mxu0 0.0
        %1209 = vmatmul.mubr.f32.gmra.mrb[0].mxu0 %v1029
        %v1210 = vpop.f32.mrb[0].mxu0
        %v1211 = vadd.f32 0.0, %v1210
        %v1212 = vpop.f32.mrb[0].mxu0
        %1213 = vmatprep.mubr.f32.mxu0 0.0
        %1214 = vmatmul.mubr.f32.gmra.mrb[0].mxu0 %v1031
        %v1215 = vpop.f32.mrb[0].mxu0
        %v1216 = vadd.f32 0.0, %v1215
        %v1217 = vpop.f32.mrb[0].mxu0
        %1218 = vmatprep.mubr.f32.mxu0 0.0
        %1219 = vmatmul.mubr.f32.gmra.mrb[0].mxu0 %v1033
        %v1220 = vpop.f32.mrb[0].mxu0
        %v1221 = vadd.f32 0.0, %v1220
        %v1222 = vpop.f32.mrb[0].mxu0
        %1223 = vmatprep.mubr.f32.mxu0 0.0
        %1224 = vmatmul.mubr.f32.gmra.mrb[0].mxu0 %v1035
        %v1225 = vpop.f32.mrb[0].mxu0
        %v1226 = vadd.f32 0.0, %v1225
        %v1227 = vpop.f32.mrb[0].mxu0
        %1228 = vmatprep.mubr.f32.mxu0 0.0
        %1229 = vmatmul.mubr.f32.gmra.mrb[0].mxu0 %v1037
        %v1230 = vpop.f32.mrb[0].mxu0
        %v1231 = vadd.f32 0.0, %v1230
        %v1232 = vpop.f32.mrb[0].mxu0
        %1233 = vmatprep.mubr.f32.mxu0 0.0
        %1234 = vmatmul.mubr.f32.gmra.mrb[0].mxu0 %v1039
        %v1235 = vpop.f32.mrb[0].mxu0
        %v1236 = vadd.f32 0.0, %v1235
        %v1237 = vpop.f32.mrb[0].mxu0
        %1238 = vmatprep.mubr.f32.mxu0 0.0
        %1239 = vmatmul.mubr.f32.gmra.mrb[0].mxu0 %v1041
        %v1240 = vpop.f32.mrb[0].mxu0
        %v1241 = vadd.f32 0.0, %v1240
        %v1242 = vpop.f32.mrb[0].mxu0
        %1243 = vmatprep.mubr.f32.mxu0 0.0
        %1244 = vmatmul.mubr.f32.gmra.mrb[0].mxu0 %v1043
        %v1245 = vpop.f32.mrb[0].mxu0
        %v1246 = vadd.f32 0.0, %v1245
        %v1247 = vpop.f32.mrb[0].mxu0
        %1248 = vmatprep.mubr.f32.mxu0 0.0
        %1249 = vmatmul.mubr.f32.gmra.mrb[0].mxu0 %v1045
        %v1250 = vpop.f32.mrb[0].mxu0
        %v1251 = vadd.f32 0.0, %v1250
        %v1252 = vpop.f32.mrb[0].mxu0
        %1253 = vmatprep.mubr.f32.mxu0 0.0
        %1254 = vmatmul.mubr.f32.gmra.mrb[0].mxu0 %v1047
        %v1255 = vpop.f32.mrb[0].mxu0
        %v1256 = vadd.f32 0.0, %v1255
        %v1257 = vpop.f32.mrb[0].mxu0
        %1258 = vmatprep.mubr.f32.mxu0 0.0
        %1259 = vmatmul.mubr.f32.gmra.mrb[0].mxu0 %v1049
        %v1260 = vpop.f32.mrb[0].mxu0
        %v1261 = vadd.f32 0.0, %v1260
        %v1262 = vpop.f32.mrb[0].mxu0
        %1263 = vmatprep.mubr.f32.mxu0 0.0
        %1264 = vmatmul.mubr.f32.gmra.mrb[0].mxu0 %v1051
        %v1265 = vpop.f32.mrb[0].mxu0
        %v1266 = vadd.f32 0.0, %v1265
        %v1267 = vpop.f32.mrb[0].mxu0
        %1268 = vmatprep.mubr.f32.mxu0 0.0
        %1269 = vmatmul.mubr.f32.gmra.mrb[0].mxu0 %v1053
        %v1270 = vpop.f32.mrb[0].mxu0
        %v1271 = vadd.f32 0.0, %v1270
        %v1272 = vpop.f32.mrb[0].mxu0
        %1273 = vmatprep.mubr.f32.mxu0 0.0
        %1274 = vmatmul.mubr.f32.gmra.mrb[0].mxu0 %v1055
        %v1275 = vpop.f32.mrb[0].mxu0
        %v1276 = vadd.f32 0.0, %v1275
        %v1277 = vpop.f32.mrb[0].mxu0
        %1278 = vmatprep.mubr.f32.mxu0 0.0
        %1279 = vmatmul.mubr.f32.gmra.mrb[0].mxu0 %v1057
        %v1280 = vpop.f32.mrb[0].mxu0
        %v1281 = vadd.f32 0.0, %v1280
        %v1282 = vpop.f32.mrb[0].mxu0
        %1283 = vmatprep.mubr.f32.mxu0 0.0
        %1284 = vmatmul.mubr.f32.gmra.mrb[0].mxu0 %v1059
        %v1285 = vpop.f32.mrb[0].mxu0
        %v1286 = vadd.f32 0.0, %v1285
        %v1287 = vpop.f32.mrb[0].mxu0
        %1288 = vdwg.mxu0
        %v1289 = vadd.f32 %v756, %v1131
        %v1290 = vadd.f32 %v761, %v1136
        %v1291 = vadd.f32 %v766, %v1141
        %v1292 = vadd.f32 %v771, %v1146
        %v1293 = vadd.f32 %v776, %v1151
        %v1294 = vadd.f32 %v781, %v1156
        %v1295 = vadd.f32 %v786, %v1161
        %v1296 = vadd.f32 %v791, %v1166
        %v1297 = vadd.f32 %v796, %v1171
        %v1298 = vadd.f32 %v801, %v1176
        %v1299 = vadd.f32 %v806, %v1181
        %v1300 = vadd.f32 %v811, %v1186
        %v1301 = vadd.f32 %v816, %v1191
        %v1302 = vadd.f32 %v821, %v1196
        %v1303 = vadd.f32 %v826, %v1201
        %v1304 = vadd.f32 %v831, %v1206
        %v1305 = vadd.f32 %v836, %v1211
        %v1306 = vadd.f32 %v841, %v1216
        %v1307 = vadd.f32 %v846, %v1221
        %v1308 = vadd.f32 %v851, %v1226
        %v1309 = vadd.f32 %v856, %v1231
        %v1310 = vadd.f32 %v861, %v1236
        %v1311 = vadd.f32 %v866, %v1241
        %v1312 = vadd.f32 %v871, %v1246
        %v1313 = vadd.f32 %v876, %v1251
        %v1314 = vadd.f32 %v881, %v1256
        %v1315 = vadd.f32 %v886, %v1261
        %v1316 = vadd.f32 %v891, %v1266
        %v1317 = vadd.f32 %v896, %v1271
        %v1318 = vadd.f32 %v901, %v1276
        %v1319 = vadd.f32 %v906, %v1281
        %v1320 = vadd.f32 %v911, %v1286
        %s1321 = scalar_lea.vmem %s1, 12
        %v1322 = vld [vmem:[%s1321] sm:$0x7]
        %v1324 = vsel %vm328, %v190, 0
        %v1327 = vsel %vm328, %v191, 0
        %v1330 = vsel %vm393, %v1322, 0
        %1332 = vmatprep.subr.mxu0 0.0
        %1333 = vmatpush1.msra.mxu0 %v1330
        %1334 = vmatprep.subr.mxu0 0.0
        %1335 = vmatpush1.msra.mxu0 0.0
        %1336 = vmatprep.subr.mxu0 0.0
        %1337 = vmatpush1.msra.mxu0 0.0
        %1338 = vmatprep.subr.mxu0 0.0
        %1339 = vmatpush1.msra.mxu0 0.0
        %1340 = vmatprep.subr.mxu0 0.0
        %1341 = vmatpush1.msra.mxu0 0.0
        %1342 = vmatprep.subr.mxu0 0.0
        %1343 = vmatpush1.msra.mxu0 0.0
        %1344 = vmatprep.subr.mxu0 0.0
        %1345 = vmatpush1.msra.mxu0 0.0
        %1346 = vmatprep.subr.mxu0 0.0
        %1347 = vmatpush1.msra.mxu0 0.0
        %1348 = vmatprep.subr.mxu0 0.0
        %1349 = vmatpush1.msra.mxu0 0.0
        %1350 = vmatprep.subr.mxu0 0.0
        %1351 = vmatpush1.msra.mxu0 0.0
        %1352 = vmatprep.subr.mxu0 0.0
        %1353 = vmatpush1.msra.mxu0 0.0
        %1354 = vmatprep.subr.mxu0 0.0
        %1355 = vmatpush1.msra.mxu0 0.0
        %1356 = vmatprep.subr.mxu0 0.0
        %1357 = vmatpush1.msra.mxu0 0.0
        %1358 = vmatprep.subr.mxu0 0.0
        %1359 = vmatpush1.msra.mxu0 0.0
        %1360 = vmatprep.subr.mxu0 0.0
        %1361 = vmatpush1.msra.mxu0 0.0
        %1362 = vmatprep.subr.mxu0 0.0
        %1363 = vmatpush1.msra.mxu0 0.0
        %1364 = vmatprep.subr.mxu0 0.0
        %1365 = vmatpush1.msra.mxu0 0.0
        %1366 = vmatprep.subr.mxu0 0.0
        %1367 = vmatpush1.msra.mxu0 0.0
        %1368 = vmatprep.subr.mxu0 0.0
        %1369 = vmatpush1.msra.mxu0 0.0
        %1370 = vmatprep.subr.mxu0 0.0
        %1371 = vmatpush1.msra.mxu0 0.0
        %1372 = vmatprep.subr.mxu0 0.0
        %1373 = vmatpush1.msra.mxu0 0.0
        %1374 = vmatprep.subr.mxu0 0.0
        %1375 = vmatpush1.msra.mxu0 0.0
        %1376 = vmatprep.subr.mxu0 0.0
        %1377 = vmatpush1.msra.mxu0 0.0
        %1378 = vmatprep.subr.mxu0 0.0
        %1379 = vmatpush1.msra.mxu0 0.0
        %1380 = vmatprep.subr.mxu0 0.0
        %1381 = vmatpush1.msra.mxu0 0.0
        %1382 = vmatprep.subr.mxu0 0.0
        %1383 = vmatpush1.msra.mxu0 0.0
        %1384 = vmatprep.subr.mxu0 0.0
        %1385 = vmatpush1.msra.mxu0 0.0
        %1386 = vmatprep.subr.mxu0 0.0
        %1387 = vmatpush1.msra.mxu0 0.0
        %1388 = vmatprep.subr.mxu0 0.0
        %1389 = vmatpush1.msra.mxu0 0.0
        %1390 = vmatprep.subr.mxu0 0.0
        %1391 = vmatpush1.msra.mxu0 0.0
        %1392 = vmatprep.subr.mxu0 0.0
        %1393 = vmatpush1.msra.mxu0 0.0
        %1394 = vmatprep.subr.mxu0 0.0
        %1395 = vmatpush1.msra.mxu0 0.0
        %1396 = vmatprep.mubr.f32.mxu0 0.0
        %1397 = vmatmul.mubr.f32.gmra.mrb[0].mxu0 %v626
        %v1398 = vpop.f32.mrb[0].mxu0
        %v1399 = vadd.f32 0.0, %v1398
        %v1400 = vpop.f32.mrb[0].mxu0
        %1401 = vmatprep.mubr.f32.mxu0 0.0
        %1402 = vmatmul.mubr.f32.gmra.mrb[0].mxu0 %v628
        %v1403 = vpop.f32.mrb[0].mxu0
        %v1404 = vadd.f32 0.0, %v1403
        %v1405 = vpop.f32.mrb[0].mxu0
        %1406 = vmatprep.mubr.f32.mxu0 0.0
        %1407 = vmatmul.mubr.f32.gmra.mrb[0].mxu0 %v630
        %v1408 = vpop.f32.mrb[0].mxu0
        %v1409 = vadd.f32 0.0, %v1408
        %v1410 = vpop.f32.mrb[0].mxu0
        %1411 = vmatprep.mubr.f32.mxu0 0.0
        %1412 = vmatmul.mubr.f32.gmra.mrb[0].mxu0 %v632
        %v1413 = vpop.f32.mrb[0].mxu0
        %v1414 = vadd.f32 0.0, %v1413
        %v1415 = vpop.f32.mrb[0].mxu0
        %1416 = vmatprep.mubr.f32.mxu0 0.0
        %1417 = vmatmul.mubr.f32.gmra.mrb[0].mxu0 %v634
        %v1418 = vpop.f32.mrb[0].mxu0
        %v1419 = vadd.f32 0.0, %v1418
        %v1420 = vpop.f32.mrb[0].mxu0
        %1421 = vmatprep.mubr.f32.mxu0 0.0
        %1422 = vmatmul.mubr.f32.gmra.mrb[0].mxu0 %v636
        %v1423 = vpop.f32.mrb[0].mxu0
        %v1424 = vadd.f32 0.0, %v1423
        %v1425 = vpop.f32.mrb[0].mxu0
        %1426 = vmatprep.mubr.f32.mxu0 0.0
        %1427 = vmatmul.mubr.f32.gmra.mrb[0].mxu0 %v638
        %v1428 = vpop.f32.mrb[0].mxu0
        %v1429 = vadd.f32 0.0, %v1428
        %v1430 = vpop.f32.mrb[0].mxu0
        %1431 = vmatprep.mubr.f32.mxu0 0.0
        %1432 = vmatmul.mubr.f32.gmra.mrb[0].mxu0 %v640
        %v1433 = vpop.f32.mrb[0].mxu0
        %v1434 = vadd.f32 0.0, %v1433
        %v1435 = vpop.f32.mrb[0].mxu0
        %1436 = vmatprep.mubr.f32.mxu0 0.0
        %1437 = vmatmul.mubr.f32.gmra.mrb[0].mxu0 %v642
        %v1438 = vpop.f32.mrb[0].mxu0
        %v1439 = vadd.f32 0.0, %v1438
        %v1440 = vpop.f32.mrb[0].mxu0
        %1441 = vmatprep.mubr.f32.mxu0 0.0
        %1442 = vmatmul.mubr.f32.gmra.mrb[0].mxu0 %v644
        %v1443 = vpop.f32.mrb[0].mxu0
        %v1444 = vadd.f32 0.0, %v1443
        %v1445 = vpop.f32.mrb[0].mxu0
        %1446 = vmatprep.mubr.f32.mxu0 0.0
        %1447 = vmatmul.mubr.f32.gmra.mrb[0].mxu0 %v646
        %v1448 = vpop.f32.mrb[0].mxu0
        %v1449 = vadd.f32 0.0, %v1448
        %v1450 = vpop.f32.mrb[0].mxu0
        %1451 = vmatprep.mubr.f32.mxu0 0.0
        %1452 = vmatmul.mubr.f32.gmra.mrb[0].mxu0 %v648
        %v1453 = vpop.f32.mrb[0].mxu0
        %v1454 = vadd.f32 0.0, %v1453
        %v1455 = vpop.f32.mrb[0].mxu0
        %1456 = vmatprep.mubr.f32.mxu0 0.0
        %1457 = vmatmul.mubr.f32.gmra.mrb[0].mxu0 %v650
        %v1458 = vpop.f32.mrb[0].mxu0
        %v1459 = vadd.f32 0.0, %v1458
        %v1460 = vpop.f32.mrb[0].mxu0
        %1461 = vmatprep.mubr.f32.mxu0 0.0
        %1462 = vmatmul.mubr.f32.gmra.mrb[0].mxu0 %v652
        %v1463 = vpop.f32.mrb[0].mxu0
        %v1464 = vadd.f32 0.0, %v1463
        %v1465 = vpop.f32.mrb[0].mxu0
        %1466 = vmatprep.mubr.f32.mxu0 0.0
        %1467 = vmatmul.mubr.f32.gmra.mrb[0].mxu0 %v654
        %v1468 = vpop.f32.mrb[0].mxu0
        %v1469 = vadd.f32 0.0, %v1468
        %v1470 = vpop.f32.mrb[0].mxu0
        %1471 = vmatprep.mubr.f32.mxu0 0.0
        %1472 = vmatmul.mubr.f32.gmra.mrb[0].mxu0 %v656
        %v1473 = vpop.f32.mrb[0].mxu0
        %v1474 = vadd.f32 0.0, %v1473
        %v1475 = vpop.f32.mrb[0].mxu0
        %1476 = vmatprep.mubr.f32.mxu0 0.0
        %1477 = vmatmul.mubr.f32.gmra.mrb[0].mxu0 %v658
        %v1478 = vpop.f32.mrb[0].mxu0
        %v1479 = vadd.f32 0.0, %v1478
        %v1480 = vpop.f32.mrb[0].mxu0
        %1481 = vmatprep.mubr.f32.mxu0 0.0
        %1482 = vmatmul.mubr.f32.gmra.mrb[0].mxu0 %v660
        %v1483 = vpop.f32.mrb[0].mxu0
        %v1484 = vadd.f32 0.0, %v1483
        %v1485 = vpop.f32.mrb[0].mxu0
        %1486 = vmatprep.mubr.f32.mxu0 0.0
        %1487 = vmatmul.mubr.f32.gmra.mrb[0].mxu0 %v662
        %v1488 = vpop.f32.mrb[0].mxu0
        %v1489 = vadd.f32 0.0, %v1488
        %v1490 = vpop.f32.mrb[0].mxu0
        %1491 = vmatprep.mubr.f32.mxu0 0.0
        %1492 = vmatmul.mubr.f32.gmra.mrb[0].mxu0 %v664
        %v1493 = vpop.f32.mrb[0].mxu0
        %v1494 = vadd.f32 0.0, %v1493
        %v1495 = vpop.f32.mrb[0].mxu0
        %1496 = vmatprep.mubr.f32.mxu0 0.0
        %1497 = vmatmul.mubr.f32.gmra.mrb[0].mxu0 %v666
        %v1498 = vpop.f32.mrb[0].mxu0
        %v1499 = vadd.f32 0.0, %v1498
        %v1500 = vpop.f32.mrb[0].mxu0
        %1501 = vmatprep.mubr.f32.mxu0 0.0
        %1502 = vmatmul.mubr.f32.gmra.mrb[0].mxu0 %v668
        %v1503 = vpop.f32.mrb[0].mxu0
        %v1504 = vadd.f32 0.0, %v1503
        %v1505 = vpop.f32.mrb[0].mxu0
        %1506 = vmatprep.mubr.f32.mxu0 0.0
        %1507 = vmatmul.mubr.f32.gmra.mrb[0].mxu0 %v670
        %v1508 = vpop.f32.mrb[0].mxu0
        %v1509 = vadd.f32 0.0, %v1508
        %v1510 = vpop.f32.mrb[0].mxu0
        %1511 = vmatprep.mubr.f32.mxu0 0.0
        %1512 = vmatmul.mubr.f32.gmra.mrb[0].mxu0 %v672
        %v1513 = vpop.f32.mrb[0].mxu0
        %v1514 = vadd.f32 0.0, %v1513
        %v1515 = vpop.f32.mrb[0].mxu0
        %1516 = vmatprep.mubr.f32.mxu0 0.0
        %1517 = vmatmul.mubr.f32.gmra.mrb[0].mxu0 %v674
        %v1518 = vpop.f32.mrb[0].mxu0
        %v1519 = vadd.f32 0.0, %v1518
        %v1520 = vpop.f32.mrb[0].mxu0
        %1521 = vmatprep.mubr.f32.mxu0 0.0
        %1522 = vmatmul.mubr.f32.gmra.mrb[0].mxu0 %v676
        %v1523 = vpop.f32.mrb[0].mxu0
        %v1524 = vadd.f32 0.0, %v1523
        %v1525 = vpop.f32.mrb[0].mxu0
        %1526 = vmatprep.mubr.f32.mxu0 0.0
        %1527 = vmatmul.mubr.f32.gmra.mrb[0].mxu0 %v678
        %v1528 = vpop.f32.mrb[0].mxu0
        %v1529 = vadd.f32 0.0, %v1528
        %v1530 = vpop.f32.mrb[0].mxu0
        %1531 = vmatprep.mubr.f32.mxu0 0.0
        %1532 = vmatmul.mubr.f32.gmra.mrb[0].mxu0 %v680
        %v1533 = vpop.f32.mrb[0].mxu0
        %v1534 = vadd.f32 0.0, %v1533
        %v1535 = vpop.f32.mrb[0].mxu0
        %1536 = vmatprep.mubr.f32.mxu0 0.0
        %1537 = vmatmul.mubr.f32.gmra.mrb[0].mxu0 %v682
        %v1538 = vpop.f32.mrb[0].mxu0
        %v1539 = vadd.f32 0.0, %v1538
        %v1540 = vpop.f32.mrb[0].mxu0
        %1541 = vmatprep.mubr.f32.mxu0 0.0
        %1542 = vmatmul.mubr.f32.gmra.mrb[0].mxu0 %v684
        %v1543 = vpop.f32.mrb[0].mxu0
        %v1544 = vadd.f32 0.0, %v1543
        %v1545 = vpop.f32.mrb[0].mxu0
        %1546 = vmatprep.mubr.f32.mxu0 0.0
        %1547 = vmatmul.mubr.f32.gmra.mrb[0].mxu0 %v1324
        %v1548 = vpop.f32.mrb[0].mxu0
        %v1549 = vadd.f32 0.0, %v1548
        %v1550 = vpop.f32.mrb[0].mxu0
        %1551 = vmatprep.mubr.f32.mxu0 0.0
        %1552 = vmatmul.mubr.f32.gmra.mrb[0].mxu0 %v1327
        %v1553 = vpop.f32.mrb[0].mxu0
        %v1554 = vadd.f32 0.0, %v1553
        %v1555 = vpop.f32.mrb[0].mxu0
        %1556 = vdwg.mxu0
        %v1557 = vadd.f32 %v1289, %v1399
        %v1558 = vadd.f32 %v1290, %v1404
        %v1559 = vadd.f32 %v1291, %v1409
        %v1560 = vadd.f32 %v1292, %v1414
        %v1561 = vadd.f32 %v1293, %v1419
        %v1562 = vadd.f32 %v1294, %v1424
        %v1563 = vadd.f32 %v1295, %v1429
        %v1564 = vadd.f32 %v1296, %v1434
        %v1565 = vadd.f32 %v1297, %v1439
        %v1566 = vadd.f32 %v1298, %v1444
        %v1567 = vadd.f32 %v1299, %v1449
        %v1568 = vadd.f32 %v1300, %v1454
        %v1569 = vadd.f32 %v1301, %v1459
        %v1570 = vadd.f32 %v1302, %v1464
        %v1571 = vadd.f32 %v1303, %v1469
        %v1572 = vadd.f32 %v1304, %v1474
        %v1573 = vadd.f32 %v1305, %v1479
        %v1574 = vadd.f32 %v1306, %v1484
        %v1575 = vadd.f32 %v1307, %v1489
        %v1576 = vadd.f32 %v1308, %v1494
        %v1577 = vadd.f32 %v1309, %v1499
        %v1578 = vadd.f32 %v1310, %v1504
        %v1579 = vadd.f32 %v1311, %v1509
        %v1580 = vadd.f32 %v1312, %v1514
        %v1581 = vadd.f32 %v1313, %v1519
        %v1582 = vadd.f32 %v1314, %v1524
        %v1583 = vadd.f32 %v1315, %v1529
        %v1584 = vadd.f32 %v1316, %v1534
        %v1585 = vadd.f32 %v1317, %v1539
        %v1586 = vadd.f32 %v1318, %v1544
        %v1587 = vadd.f32 %v1319, %v1549
        %v1588 = vadd.f32 %v1320, %v1554
        %v1590 = vrot.slane %v190, 1
        %v1591 = vrot.slane %v191, 1
        %v1592 = vsel %vm245, %v1590, %v1591
        %v1593 = vrot.slane %v192, 1
        %v1594 = vsel %vm245, %v1591, %v1593
        %s1595 = scalar_lea.vmem %s1, 16
        %v1596 = vld [vmem:[%s1595] sm:$0x7]
        %v1597 = vsel %vm328, %v1592, 0
        %v1599 = vsel %vm328, %v1594, 0
        %v1602 = vsel %vm393, %v1596, 0
        %1604 = vmatprep.subr.mxu0 0.0
        %1605 = vmatpush1.msra.mxu0 %v1602
        %1606 = vmatprep.subr.mxu0 0.0
        %1607 = vmatpush1.msra.mxu0 0.0
        %1608 = vmatprep.subr.mxu0 0.0
        %1609 = vmatpush1.msra.mxu0 0.0
        %1610 = vmatprep.subr.mxu0 0.0
        %1611 = vmatpush1.msra.mxu0 0.0
        %1612 = vmatprep.subr.mxu0 0.0
        %1613 = vmatpush1.msra.mxu0 0.0
        %1614 = vmatprep.subr.mxu0 0.0
        %1615 = vmatpush1.msra.mxu0 0.0
        %1616 = vmatprep.subr.mxu0 0.0
        %1617 = vmatpush1.msra.mxu0 0.0
        %1618 = vmatprep.subr.mxu0 0.0
        %1619 = vmatpush1.msra.mxu0 0.0
        %1620 = vmatprep.subr.mxu0 0.0
        %1621 = vmatpush1.msra.mxu0 0.0
        %1622 = vmatprep.subr.mxu0 0.0
        %1623 = vmatpush1.msra.mxu0 0.0
        %1624 = vmatprep.subr.mxu0 0.0
        %1625 = vmatpush1.msra.mxu0 0.0
        %1626 = vmatprep.subr.mxu0 0.0
        %1627 = vmatpush1.msra.mxu0 0.0
        %1628 = vmatprep.subr.mxu0 0.0
        %1629 = vmatpush1.msra.mxu0 0.0
        %1630 = vmatprep.subr.mxu0 0.0
        %1631 = vmatpush1.msra.mxu0 0.0
        %1632 = vmatprep.subr.mxu0 0.0
        %1633 = vmatpush1.msra.mxu0 0.0
        %1634 = vmatprep.subr.mxu0 0.0
        %1635 = vmatpush1.msra.mxu0 0.0
        %1636 = vmatprep.subr.mxu0 0.0
        %1637 = vmatpush1.msra.mxu0 0.0
        %1638 = vmatprep.subr.mxu0 0.0
        %1639 = vmatpush1.msra.mxu0 0.0
        %1640 = vmatprep.subr.mxu0 0.0
        %1641 = vmatpush1.msra.mxu0 0.0
        %1642 = vmatprep.subr.mxu0 0.0
        %1643 = vmatpush1.msra.mxu0 0.0
        %1644 = vmatprep.subr.mxu0 0.0
        %1645 = vmatpush1.msra.mxu0 0.0
        %1646 = vmatprep.subr.mxu0 0.0
        %1647 = vmatpush1.msra.mxu0 0.0
        %1648 = vmatprep.subr.mxu0 0.0
        %1649 = vmatpush1.msra.mxu0 0.0
        %1650 = vmatprep.subr.mxu0 0.0
        %1651 = vmatpush1.msra.mxu0 0.0
        %1652 = vmatprep.subr.mxu0 0.0
        %1653 = vmatpush1.msra.mxu0 0.0
        %1654 = vmatprep.subr.mxu0 0.0
        %1655 = vmatpush1.msra.mxu0 0.0
        %1656 = vmatprep.subr.mxu0 0.0
        %1657 = vmatpush1.msra.mxu0 0.0
        %1658 = vmatprep.subr.mxu0 0.0
        %1659 = vmatpush1.msra.mxu0 0.0
        %1660 = vmatprep.subr.mxu0 0.0
        %1661 = vmatpush1.msra.mxu0 0.0
        %1662 = vmatprep.subr.mxu0 0.0
        %1663 = vmatpush1.msra.mxu0 0.0
        %1664 = vmatprep.subr.mxu0 0.0
        %1665 = vmatpush1.msra.mxu0 0.0
        %1666 = vmatprep.subr.mxu0 0.0
        %1667 = vmatpush1.msra.mxu0 0.0
        %1668 = vmatprep.mubr.f32.mxu0 0.0
        %1669 = vmatmul.mubr.f32.gmra.mrb[0].mxu0 %v333
        %v1670 = vpop.f32.mrb[0].mxu0
        %v1671 = vadd.f32 0.0, %v1670
        %v1672 = vpop.f32.mrb[0].mxu0
        %1673 = vmatprep.mubr.f32.mxu0 0.0
        %1674 = vmatmul.mubr.f32.gmra.mrb[0].mxu0 %v335
        %v1675 = vpop.f32.mrb[0].mxu0
        %v1676 = vadd.f32 0.0, %v1675
        %v1677 = vpop.f32.mrb[0].mxu0
        %1678 = vmatprep.mubr.f32.mxu0 0.0
        %1679 = vmatmul.mubr.f32.gmra.mrb[0].mxu0 %v337
        %v1680 = vpop.f32.mrb[0].mxu0
        %v1681 = vadd.f32 0.0, %v1680
        %v1682 = vpop.f32.mrb[0].mxu0
        %1683 = vmatprep.mubr.f32.mxu0 0.0
        %1684 = vmatmul.mubr.f32.gmra.mrb[0].mxu0 %v339
        %v1685 = vpop.f32.mrb[0].mxu0
        %v1686 = vadd.f32 0.0, %v1685
        %v1687 = vpop.f32.mrb[0].mxu0
        %1688 = vmatprep.mubr.f32.mxu0 0.0
        %1689 = vmatmul.mubr.f32.gmra.mrb[0].mxu0 %v341
        %v1690 = vpop.f32.mrb[0].mxu0
        %v1691 = vadd.f32 0.0, %v1690
        %v1692 = vpop.f32.mrb[0].mxu0
        %1693 = vmatprep.mubr.f32.mxu0 0.0
        %1694 = vmatmul.mubr.f32.gmra.mrb[0].mxu0 %v343
        %v1695 = vpop.f32.mrb[0].mxu0
        %v1696 = vadd.f32 0.0, %v1695
        %v1697 = vpop.f32.mrb[0].mxu0
        %1698 = vmatprep.mubr.f32.mxu0 0.0
        %1699 = vmatmul.mubr.f32.gmra.mrb[0].mxu0 %v345
        %v1700 = vpop.f32.mrb[0].mxu0
        %v1701 = vadd.f32 0.0, %v1700
        %v1702 = vpop.f32.mrb[0].mxu0
        %1703 = vmatprep.mubr.f32.mxu0 0.0
        %1704 = vmatmul.mubr.f32.gmra.mrb[0].mxu0 %v347
        %v1705 = vpop.f32.mrb[0].mxu0
        %v1706 = vadd.f32 0.0, %v1705
        %v1707 = vpop.f32.mrb[0].mxu0
        %1708 = vmatprep.mubr.f32.mxu0 0.0
        %1709 = vmatmul.mubr.f32.gmra.mrb[0].mxu0 %v349
        %v1710 = vpop.f32.mrb[0].mxu0
        %v1711 = vadd.f32 0.0, %v1710
        %v1712 = vpop.f32.mrb[0].mxu0
        %1713 = vmatprep.mubr.f32.mxu0 0.0
        %1714 = vmatmul.mubr.f32.gmra.mrb[0].mxu0 %v351
        %v1715 = vpop.f32.mrb[0].mxu0
        %v1716 = vadd.f32 0.0, %v1715
        %v1717 = vpop.f32.mrb[0].mxu0
        %1718 = vmatprep.mubr.f32.mxu0 0.0
        %1719 = vmatmul.mubr.f32.gmra.mrb[0].mxu0 %v353
        %v1720 = vpop.f32.mrb[0].mxu0
        %v1721 = vadd.f32 0.0, %v1720
        %v1722 = vpop.f32.mrb[0].mxu0
        %1723 = vmatprep.mubr.f32.mxu0 0.0
        %1724 = vmatmul.mubr.f32.gmra.mrb[0].mxu0 %v355
        %v1725 = vpop.f32.mrb[0].mxu0
        %v1726 = vadd.f32 0.0, %v1725
        %v1727 = vpop.f32.mrb[0].mxu0
        %1728 = vmatprep.mubr.f32.mxu0 0.0
        %1729 = vmatmul.mubr.f32.gmra.mrb[0].mxu0 %v357
        %v1730 = vpop.f32.mrb[0].mxu0
        %v1731 = vadd.f32 0.0, %v1730
        %v1732 = vpop.f32.mrb[0].mxu0
        %1733 = vmatprep.mubr.f32.mxu0 0.0
        %1734 = vmatmul.mubr.f32.gmra.mrb[0].mxu0 %v359
        %v1735 = vpop.f32.mrb[0].mxu0
        %v1736 = vadd.f32 0.0, %v1735
        %v1737 = vpop.f32.mrb[0].mxu0
        %1738 = vmatprep.mubr.f32.mxu0 0.0
        %1739 = vmatmul.mubr.f32.gmra.mrb[0].mxu0 %v361
        %v1740 = vpop.f32.mrb[0].mxu0
        %v1741 = vadd.f32 0.0, %v1740
        %v1742 = vpop.f32.mrb[0].mxu0
        %1743 = vmatprep.mubr.f32.mxu0 0.0
        %1744 = vmatmul.mubr.f32.gmra.mrb[0].mxu0 %v363
        %v1745 = vpop.f32.mrb[0].mxu0
        %v1746 = vadd.f32 0.0, %v1745
        %v1747 = vpop.f32.mrb[0].mxu0
        %1748 = vmatprep.mubr.f32.mxu0 0.0
        %1749 = vmatmul.mubr.f32.gmra.mrb[0].mxu0 %v365
        %v1750 = vpop.f32.mrb[0].mxu0
        %v1751 = vadd.f32 0.0, %v1750
        %v1752 = vpop.f32.mrb[0].mxu0
        %1753 = vmatprep.mubr.f32.mxu0 0.0
        %1754 = vmatmul.mubr.f32.gmra.mrb[0].mxu0 %v367
        %v1755 = vpop.f32.mrb[0].mxu0
        %v1756 = vadd.f32 0.0, %v1755
        %v1757 = vpop.f32.mrb[0].mxu0
        %1758 = vmatprep.mubr.f32.mxu0 0.0
        %1759 = vmatmul.mubr.f32.gmra.mrb[0].mxu0 %v369
        %v1760 = vpop.f32.mrb[0].mxu0
        %v1761 = vadd.f32 0.0, %v1760
        %v1762 = vpop.f32.mrb[0].mxu0
        %1763 = vmatprep.mubr.f32.mxu0 0.0
        %1764 = vmatmul.mubr.f32.gmra.mrb[0].mxu0 %v371
        %v1765 = vpop.f32.mrb[0].mxu0
        %v1766 = vadd.f32 0.0, %v1765
        %v1767 = vpop.f32.mrb[0].mxu0
        %1768 = vmatprep.mubr.f32.mxu0 0.0
        %1769 = vmatmul.mubr.f32.gmra.mrb[0].mxu0 %v373
        %v1770 = vpop.f32.mrb[0].mxu0
        %v1771 = vadd.f32 0.0, %v1770
        %v1772 = vpop.f32.mrb[0].mxu0
        %1773 = vmatprep.mubr.f32.mxu0 0.0
        %1774 = vmatmul.mubr.f32.gmra.mrb[0].mxu0 %v375
        %v1775 = vpop.f32.mrb[0].mxu0
        %v1776 = vadd.f32 0.0, %v1775
        %v1777 = vpop.f32.mrb[0].mxu0
        %1778 = vmatprep.mubr.f32.mxu0 0.0
        %1779 = vmatmul.mubr.f32.gmra.mrb[0].mxu0 %v377
        %v1780 = vpop.f32.mrb[0].mxu0
        %v1781 = vadd.f32 0.0, %v1780
        %v1782 = vpop.f32.mrb[0].mxu0
        %1783 = vmatprep.mubr.f32.mxu0 0.0
        %1784 = vmatmul.mubr.f32.gmra.mrb[0].mxu0 %v379
        %v1785 = vpop.f32.mrb[0].mxu0
        %v1786 = vadd.f32 0.0, %v1785
        %v1787 = vpop.f32.mrb[0].mxu0
        %1788 = vmatprep.mubr.f32.mxu0 0.0
        %1789 = vmatmul.mubr.f32.gmra.mrb[0].mxu0 %v381
        %v1790 = vpop.f32.mrb[0].mxu0
        %v1791 = vadd.f32 0.0, %v1790
        %v1792 = vpop.f32.mrb[0].mxu0
        %1793 = vmatprep.mubr.f32.mxu0 0.0
        %1794 = vmatmul.mubr.f32.gmra.mrb[0].mxu0 %v383
        %v1795 = vpop.f32.mrb[0].mxu0
        %v1796 = vadd.f32 0.0, %v1795
        %v1797 = vpop.f32.mrb[0].mxu0
        %1798 = vmatprep.mubr.f32.mxu0 0.0
        %1799 = vmatmul.mubr.f32.gmra.mrb[0].mxu0 %v385
        %v1800 = vpop.f32.mrb[0].mxu0
        %v1801 = vadd.f32 0.0, %v1800
        %v1802 = vpop.f32.mrb[0].mxu0
        %1803 = vmatprep.mubr.f32.mxu0 0.0
        %1804 = vmatmul.mubr.f32.gmra.mrb[0].mxu0 %v387
        %v1805 = vpop.f32.mrb[0].mxu0
        %v1806 = vadd.f32 0.0, %v1805
        %v1807 = vpop.f32.mrb[0].mxu0
        %1808 = vmatprep.mubr.f32.mxu0 0.0
        %1809 = vmatmul.mubr.f32.gmra.mrb[0].mxu0 %v389
        %v1810 = vpop.f32.mrb[0].mxu0
        %v1811 = vadd.f32 0.0, %v1810
        %v1812 = vpop.f32.mrb[0].mxu0
        %1813 = vmatprep.mubr.f32.mxu0 0.0
        %1814 = vmatmul.mubr.f32.gmra.mrb[0].mxu0 %v391
        %v1815 = vpop.f32.mrb[0].mxu0
        %v1816 = vadd.f32 0.0, %v1815
        %v1817 = vpop.f32.mrb[0].mxu0
        %1818 = vmatprep.mubr.f32.mxu0 0.0
        %1819 = vmatmul.mubr.f32.gmra.mrb[0].mxu0 %v1597
        %v1820 = vpop.f32.mrb[0].mxu0
        %v1821 = vadd.f32 0.0, %v1820
        %v1822 = vpop.f32.mrb[0].mxu0
        %1823 = vmatprep.mubr.f32.mxu0 0.0
        %1824 = vmatmul.mubr.f32.gmra.mrb[0].mxu0 %v1599
        %v1825 = vpop.f32.mrb[0].mxu0
        %v1826 = vadd.f32 0.0, %v1825
        %v1827 = vpop.f32.mrb[0].mxu0
        %1828 = vdwg.mxu0
        %v1829 = vadd.f32 %v1557, %v1671
        %v1830 = vadd.f32 %v1558, %v1676
        %v1831 = vadd.f32 %v1559, %v1681
        %v1832 = vadd.f32 %v1560, %v1686
        %v1833 = vadd.f32 %v1561, %v1691
        %v1834 = vadd.f32 %v1562, %v1696
        %v1835 = vadd.f32 %v1563, %v1701
        %v1836 = vadd.f32 %v1564, %v1706
        %v1837 = vadd.f32 %v1565, %v1711
        %v1838 = vadd.f32 %v1566, %v1716
        %v1839 = vadd.f32 %v1567, %v1721
        %v1840 = vadd.f32 %v1568, %v1726
        %v1841 = vadd.f32 %v1569, %v1731
        %v1842 = vadd.f32 %v1570, %v1736
        %v1843 = vadd.f32 %v1571, %v1741
        %v1844 = vadd.f32 %v1572, %v1746
        %v1845 = vadd.f32 %v1573, %v1751
        %v1846 = vadd.f32 %v1574, %v1756
        %v1847 = vadd.f32 %v1575, %v1761
        %v1848 = vadd.f32 %v1576, %v1766
        %v1849 = vadd.f32 %v1577, %v1771
        %v1850 = vadd.f32 %v1578, %v1776
        %v1851 = vadd.f32 %v1579, %v1781
        %v1852 = vadd.f32 %v1580, %v1786
        %v1853 = vadd.f32 %v1581, %v1791
        %v1854 = vadd.f32 %v1582, %v1796
        %v1855 = vadd.f32 %v1583, %v1801
        %v1856 = vadd.f32 %v1584, %v1806
        %v1857 = vadd.f32 %v1585, %v1811
        %v1858 = vadd.f32 %v1586, %v1816
        %v1859 = vadd.f32 %v1587, %v1821
        %v1860 = vadd.f32 %v1588, %v1826
        %v1861 = vrot.slane %v190, 2
        %v1862 = vrot.slane %v191, 2
        %v1863 = vsel %vm914, %v1861, %v1862
        %v1864 = vrot.slane %v192, 2
        %v1865 = vsel %vm914, %v1862, %v1864
        %s1866 = scalar_lea.vmem %s1, 20
        %v1867 = vld [vmem:[%s1866] sm:$0x7]
        %v1868 = vsel %vm328, %v1863, 0
        %v1870 = vsel %vm328, %v1865, 0
        %v1873 = vsel %vm393, %v1867, 0
        %1875 = vmatprep.subr.mxu0 0.0
        %1876 = vmatpush1.msra.mxu0 %v1873
        %1877 = vmatprep.subr.mxu0 0.0
        %1878 = vmatpush1.msra.mxu0 0.0
        %1879 = vmatprep.subr.mxu0 0.0
        %1880 = vmatpush1.msra.mxu0 0.0
        %1881 = vmatprep.subr.mxu0 0.0
        %1882 = vmatpush1.msra.mxu0 0.0
        %1883 = vmatprep.subr.mxu0 0.0
        %1884 = vmatpush1.msra.mxu0 0.0
        %1885 = vmatprep.subr.mxu0 0.0
        %1886 = vmatpush1.msra.mxu0 0.0
        %1887 = vmatprep.subr.mxu0 0.0
        %1888 = vmatpush1.msra.mxu0 0.0
        %1889 = vmatprep.subr.mxu0 0.0
        %1890 = vmatpush1.msra.mxu0 0.0
        %1891 = vmatprep.subr.mxu0 0.0
        %1892 = vmatpush1.msra.mxu0 0.0
        %1893 = vmatprep.subr.mxu0 0.0
        %1894 = vmatpush1.msra.mxu0 0.0
        %1895 = vmatprep.subr.mxu0 0.0
        %1896 = vmatpush1.msra.mxu0 0.0
        %1897 = vmatprep.subr.mxu0 0.0
        %1898 = vmatpush1.msra.mxu0 0.0
        %1899 = vmatprep.subr.mxu0 0.0
        %1900 = vmatpush1.msra.mxu0 0.0
        %1901 = vmatprep.subr.mxu0 0.0
        %1902 = vmatpush1.msra.mxu0 0.0
        %1903 = vmatprep.subr.mxu0 0.0
        %1904 = vmatpush1.msra.mxu0 0.0
        %1905 = vmatprep.subr.mxu0 0.0
        %1906 = vmatpush1.msra.mxu0 0.0
        %1907 = vmatprep.subr.mxu0 0.0
        %1908 = vmatpush1.msra.mxu0 0.0
        %1909 = vmatprep.subr.mxu0 0.0
        %1910 = vmatpush1.msra.mxu0 0.0
        %1911 = vmatprep.subr.mxu0 0.0
        %1912 = vmatpush1.msra.mxu0 0.0
        %1913 = vmatprep.subr.mxu0 0.0
        %1914 = vmatpush1.msra.mxu0 0.0
        %1915 = vmatprep.subr.mxu0 0.0
        %1916 = vmatpush1.msra.mxu0 0.0
        %1917 = vmatprep.subr.mxu0 0.0
        %1918 = vmatpush1.msra.mxu0 0.0
        %1919 = vmatprep.subr.mxu0 0.0
        %1920 = vmatpush1.msra.mxu0 0.0
        %1921 = vmatprep.subr.mxu0 0.0
        %1922 = vmatpush1.msra.mxu0 0.0
        %1923 = vmatprep.subr.mxu0 0.0
        %1924 = vmatpush1.msra.mxu0 0.0
        %1925 = vmatprep.subr.mxu0 0.0
        %1926 = vmatpush1.msra.mxu0 0.0
        %1927 = vmatprep.subr.mxu0 0.0
        %1928 = vmatpush1.msra.mxu0 0.0
        %1929 = vmatprep.subr.mxu0 0.0
        %1930 = vmatpush1.msra.mxu0 0.0
        %1931 = vmatprep.subr.mxu0 0.0
        %1932 = vmatpush1.msra.mxu0 0.0
        %1933 = vmatprep.subr.mxu0 0.0
        %1934 = vmatpush1.msra.mxu0 0.0
        %1935 = vmatprep.subr.mxu0 0.0
        %1936 = vmatpush1.msra.mxu0 0.0
        %1937 = vmatprep.subr.mxu0 0.0
        %1938 = vmatpush1.msra.mxu0 0.0
        %1939 = vmatprep.mubr.f32.mxu0 0.0
        %1940 = vmatmul.mubr.f32.gmra.mrb[0].mxu0 %v1001
        %v1941 = vpop.f32.mrb[0].mxu0
        %v1942 = vadd.f32 0.0, %v1941
        %v1943 = vpop.f32.mrb[0].mxu0
        %1944 = vmatprep.mubr.f32.mxu0 0.0
        %1945 = vmatmul.mubr.f32.gmra.mrb[0].mxu0 %v1003
        %v1946 = vpop.f32.mrb[0].mxu0
        %v1947 = vadd.f32 0.0, %v1946
        %v1948 = vpop.f32.mrb[0].mxu0
        %1949 = vmatprep.mubr.f32.mxu0 0.0
        %1950 = vmatmul.mubr.f32.gmra.mrb[0].mxu0 %v1005
        %v1951 = vpop.f32.mrb[0].mxu0
        %v1952 = vadd.f32 0.0, %v1951
        %v1953 = vpop.f32.mrb[0].mxu0
        %1954 = vmatprep.mubr.f32.mxu0 0.0
        %1955 = vmatmul.mubr.f32.gmra.mrb[0].mxu0 %v1007
        %v1956 = vpop.f32.mrb[0].mxu0
        %v1957 = vadd.f32 0.0, %v1956
        %v1958 = vpop.f32.mrb[0].mxu0
        %1959 = vmatprep.mubr.f32.mxu0 0.0
        %1960 = vmatmul.mubr.f32.gmra.mrb[0].mxu0 %v1009
        %v1961 = vpop.f32.mrb[0].mxu0
        %v1962 = vadd.f32 0.0, %v1961
        %v1963 = vpop.f32.mrb[0].mxu0
        %1964 = vmatprep.mubr.f32.mxu0 0.0
        %1965 = vmatmul.mubr.f32.gmra.mrb[0].mxu0 %v1011
        %v1966 = vpop.f32.mrb[0].mxu0
        %v1967 = vadd.f32 0.0, %v1966
        %v1968 = vpop.f32.mrb[0].mxu0
        %1969 = vmatprep.mubr.f32.mxu0 0.0
        %1970 = vmatmul.mubr.f32.gmra.mrb[0].mxu0 %v1013
        %v1971 = vpop.f32.mrb[0].mxu0
        %v1972 = vadd.f32 0.0, %v1971
        %v1973 = vpop.f32.mrb[0].mxu0
        %1974 = vmatprep.mubr.f32.mxu0 0.0
        %1975 = vmatmul.mubr.f32.gmra.mrb[0].mxu0 %v1015
        %v1976 = vpop.f32.mrb[0].mxu0
        %v1977 = vadd.f32 0.0, %v1976
        %v1978 = vpop.f32.mrb[0].mxu0
        %1979 = vmatprep.mubr.f32.mxu0 0.0
        %1980 = vmatmul.mubr.f32.gmra.mrb[0].mxu0 %v1017
        %v1981 = vpop.f32.mrb[0].mxu0
        %v1982 = vadd.f32 0.0, %v1981
        %v1983 = vpop.f32.mrb[0].mxu0
        %1984 = vmatprep.mubr.f32.mxu0 0.0
        %1985 = vmatmul.mubr.f32.gmra.mrb[0].mxu0 %v1019
        %v1986 = vpop.f32.mrb[0].mxu0
        %v1987 = vadd.f32 0.0, %v1986
        %v1988 = vpop.f32.mrb[0].mxu0
        %1989 = vmatprep.mubr.f32.mxu0 0.0
        %1990 = vmatmul.mubr.f32.gmra.mrb[0].mxu0 %v1021
        %v1991 = vpop.f32.mrb[0].mxu0
        %v1992 = vadd.f32 0.0, %v1991
        %v1993 = vpop.f32.mrb[0].mxu0
        %1994 = vmatprep.mubr.f32.mxu0 0.0
        %1995 = vmatmul.mubr.f32.gmra.mrb[0].mxu0 %v1023
        %v1996 = vpop.f32.mrb[0].mxu0
        %v1997 = vadd.f32 0.0, %v1996
        %v1998 = vpop.f32.mrb[0].mxu0
        %1999 = vmatprep.mubr.f32.mxu0 0.0
        %2000 = vmatmul.mubr.f32.gmra.mrb[0].mxu0 %v1025
        %v2001 = vpop.f32.mrb[0].mxu0
        %v2002 = vadd.f32 0.0, %v2001
        %v2003 = vpop.f32.mrb[0].mxu0
        %2004 = vmatprep.mubr.f32.mxu0 0.0
        %2005 = vmatmul.mubr.f32.gmra.mrb[0].mxu0 %v1027
        %v2006 = vpop.f32.mrb[0].mxu0
        %v2007 = vadd.f32 0.0, %v2006
        %v2008 = vpop.f32.mrb[0].mxu0
        %2009 = vmatprep.mubr.f32.mxu0 0.0
        %2010 = vmatmul.mubr.f32.gmra.mrb[0].mxu0 %v1029
        %v2011 = vpop.f32.mrb[0].mxu0
        %v2012 = vadd.f32 0.0, %v2011
        %v2013 = vpop.f32.mrb[0].mxu0
        %2014 = vmatprep.mubr.f32.mxu0 0.0
        %2015 = vmatmul.mubr.f32.gmra.mrb[0].mxu0 %v1031
        %v2016 = vpop.f32.mrb[0].mxu0
        %v2017 = vadd.f32 0.0, %v2016
        %v2018 = vpop.f32.mrb[0].mxu0
        %2019 = vmatprep.mubr.f32.mxu0 0.0
        %2020 = vmatmul.mubr.f32.gmra.mrb[0].mxu0 %v1033
        %v2021 = vpop.f32.mrb[0].mxu0
        %v2022 = vadd.f32 0.0, %v2021
        %v2023 = vpop.f32.mrb[0].mxu0
        %2024 = vmatprep.mubr.f32.mxu0 0.0
        %2025 = vmatmul.mubr.f32.gmra.mrb[0].mxu0 %v1035
        %v2026 = vpop.f32.mrb[0].mxu0
        %v2027 = vadd.f32 0.0, %v2026
        %v2028 = vpop.f32.mrb[0].mxu0
        %2029 = vmatprep.mubr.f32.mxu0 0.0
        %2030 = vmatmul.mubr.f32.gmra.mrb[0].mxu0 %v1037
        %v2031 = vpop.f32.mrb[0].mxu0
        %v2032 = vadd.f32 0.0, %v2031
        %v2033 = vpop.f32.mrb[0].mxu0
        %2034 = vmatprep.mubr.f32.mxu0 0.0
        %2035 = vmatmul.mubr.f32.gmra.mrb[0].mxu0 %v1039
        %v2036 = vpop.f32.mrb[0].mxu0
        %v2037 = vadd.f32 0.0, %v2036
        %v2038 = vpop.f32.mrb[0].mxu0
        %2039 = vmatprep.mubr.f32.mxu0 0.0
        %2040 = vmatmul.mubr.f32.gmra.mrb[0].mxu0 %v1041
        %v2041 = vpop.f32.mrb[0].mxu0
        %v2042 = vadd.f32 0.0, %v2041
        %v2043 = vpop.f32.mrb[0].mxu0
        %2044 = vmatprep.mubr.f32.mxu0 0.0
        %2045 = vmatmul.mubr.f32.gmra.mrb[0].mxu0 %v1043
        %v2046 = vpop.f32.mrb[0].mxu0
        %v2047 = vadd.f32 0.0, %v2046
        %v2048 = vpop.f32.mrb[0].mxu0
        %2049 = vmatprep.mubr.f32.mxu0 0.0
        %2050 = vmatmul.mubr.f32.gmra.mrb[0].mxu0 %v1045
        %v2051 = vpop.f32.mrb[0].mxu0
        %v2052 = vadd.f32 0.0, %v2051
        %v2053 = vpop.f32.mrb[0].mxu0
        %2054 = vmatprep.mubr.f32.mxu0 0.0
        %2055 = vmatmul.mubr.f32.gmra.mrb[0].mxu0 %v1047
        %v2056 = vpop.f32.mrb[0].mxu0
        %v2057 = vadd.f32 0.0, %v2056
        %v2058 = vpop.f32.mrb[0].mxu0
        %2059 = vmatprep.mubr.f32.mxu0 0.0
        %2060 = vmatmul.mubr.f32.gmra.mrb[0].mxu0 %v1049
        %v2061 = vpop.f32.mrb[0].mxu0
        %v2062 = vadd.f32 0.0, %v2061
        %v2063 = vpop.f32.mrb[0].mxu0
        %2064 = vmatprep.mubr.f32.mxu0 0.0
        %2065 = vmatmul.mubr.f32.gmra.mrb[0].mxu0 %v1051
        %v2066 = vpop.f32.mrb[0].mxu0
        %v2067 = vadd.f32 0.0, %v2066
        %v2068 = vpop.f32.mrb[0].mxu0
        %2069 = vmatprep.mubr.f32.mxu0 0.0
        %2070 = vmatmul.mubr.f32.gmra.mrb[0].mxu0 %v1053
        %v2071 = vpop.f32.mrb[0].mxu0
        %v2072 = vadd.f32 0.0, %v2071
        %v2073 = vpop.f32.mrb[0].mxu0
        %2074 = vmatprep.mubr.f32.mxu0 0.0
        %2075 = vmatmul.mubr.f32.gmra.mrb[0].mxu0 %v1055
        %v2076 = vpop.f32.mrb[0].mxu0
        %v2077 = vadd.f32 0.0, %v2076
        %v2078 = vpop.f32.mrb[0].mxu0
        %2079 = vmatprep.mubr.f32.mxu0 0.0
        %2080 = vmatmul.mubr.f32.gmra.mrb[0].mxu0 %v1057
        %v2081 = vpop.f32.mrb[0].mxu0
        %v2082 = vadd.f32 0.0, %v2081
        %v2083 = vpop.f32.mrb[0].mxu0
        %2084 = vmatprep.mubr.f32.mxu0 0.0
        %2085 = vmatmul.mubr.f32.gmra.mrb[0].mxu0 %v1059
        %v2086 = vpop.f32.mrb[0].mxu0
        %v2087 = vadd.f32 0.0, %v2086
        %v2088 = vpop.f32.mrb[0].mxu0
        %2089 = vmatprep.mubr.f32.mxu0 0.0
        %2090 = vmatmul.mubr.f32.gmra.mrb[0].mxu0 %v1868
        %v2091 = vpop.f32.mrb[0].mxu0
        %v2092 = vadd.f32 0.0, %v2091
        %v2093 = vpop.f32.mrb[0].mxu0
        %2094 = vmatprep.mubr.f32.mxu0 0.0
        %2095 = vmatmul.mubr.f32.gmra.mrb[0].mxu0 %v1870
        %v2096 = vpop.f32.mrb[0].mxu0
        %v2097 = vadd.f32 0.0, %v2096
        %v2098 = vpop.f32.mrb[0].mxu0
        %2099 = vdwg.mxu0
        %v2100 = vadd.f32 %v1829, %v1942
        %v2101 = vadd.f32 %v1830, %v1947
        %v2102 = vadd.f32 %v1831, %v1952
        %v2103 = vadd.f32 %v1832, %v1957
        %v2104 = vadd.f32 %v1833, %v1962
        %v2105 = vadd.f32 %v1834, %v1967
        %v2106 = vadd.f32 %v1835, %v1972
        %v2107 = vadd.f32 %v1836, %v1977
        %v2108 = vadd.f32 %v1837, %v1982
        %v2109 = vadd.f32 %v1838, %v1987
        %v2110 = vadd.f32 %v1839, %v1992
        %v2111 = vadd.f32 %v1840, %v1997
        %v2112 = vadd.f32 %v1841, %v2002
        %v2113 = vadd.f32 %v1842, %v2007
        %v2114 = vadd.f32 %v1843, %v2012
        %v2115 = vadd.f32 %v1844, %v2017
        %v2116 = vadd.f32 %v1845, %v2022
        %v2117 = vadd.f32 %v1846, %v2027
        %v2118 = vadd.f32 %v1847, %v2032
        %v2119 = vadd.f32 %v1848, %v2037
        %v2120 = vadd.f32 %v1849, %v2042
        %v2121 = vadd.f32 %v1850, %v2047
        %v2122 = vadd.f32 %v1851, %v2052
        %v2123 = vadd.f32 %v1852, %v2057
        %v2124 = vadd.f32 %v1853, %v2062
        %v2125 = vadd.f32 %v1854, %v2067
        %v2126 = vadd.f32 %v1855, %v2072
        %v2127 = vadd.f32 %v1856, %v2077
        %v2128 = vadd.f32 %v1857, %v2082
        %v2129 = vadd.f32 %v1858, %v2087
        %v2130 = vadd.f32 %v1859, %v2092
        %v2131 = vadd.f32 %v1860, %v2097
        %s2132 = scalar_lea.vmem %s1, 24
        %v2133 = vld [vmem:[%s2132] sm:$0x7]
        %v2135 = vsel %vm328, %v193, 0
        %v2138 = vsel %vm328, %v194, 0
        %v2141 = vsel %vm393, %v2133, 0
        %2143 = vmatprep.subr.mxu0 0.0
        %2144 = vmatpush1.msra.mxu0 %v2141
        %2145 = vmatprep.subr.mxu0 0.0
        %2146 = vmatpush1.msra.mxu0 0.0
        %2147 = vmatprep.subr.mxu0 0.0
        %2148 = vmatpush1.msra.mxu0 0.0
        %2149 = vmatprep.subr.mxu0 0.0
        %2150 = vmatpush1.msra.mxu0 0.0
        %2151 = vmatprep.subr.mxu0 0.0
        %2152 = vmatpush1.msra.mxu0 0.0
        %2153 = vmatprep.subr.mxu0 0.0
        %2154 = vmatpush1.msra.mxu0 0.0
        %2155 = vmatprep.subr.mxu0 0.0
        %2156 = vmatpush1.msra.mxu0 0.0
        %2157 = vmatprep.subr.mxu0 0.0
        %2158 = vmatpush1.msra.mxu0 0.0
        %2159 = vmatprep.subr.mxu0 0.0
        %2160 = vmatpush1.msra.mxu0 0.0
        %2161 = vmatprep.subr.mxu0 0.0
        %2162 = vmatpush1.msra.mxu0 0.0
        %2163 = vmatprep.subr.mxu0 0.0
        %2164 = vmatpush1.msra.mxu0 0.0
        %2165 = vmatprep.subr.mxu0 0.0
        %2166 = vmatpush1.msra.mxu0 0.0
        %2167 = vmatprep.subr.mxu0 0.0
        %2168 = vmatpush1.msra.mxu0 0.0
        %2169 = vmatprep.subr.mxu0 0.0
        %2170 = vmatpush1.msra.mxu0 0.0
        %2171 = vmatprep.subr.mxu0 0.0
        %2172 = vmatpush1.msra.mxu0 0.0
        %2173 = vmatprep.subr.mxu0 0.0
        %2174 = vmatpush1.msra.mxu0 0.0
        %2175 = vmatprep.subr.mxu0 0.0
        %2176 = vmatpush1.msra.mxu0 0.0
        %2177 = vmatprep.subr.mxu0 0.0
        %2178 = vmatpush1.msra.mxu0 0.0
        %2179 = vmatprep.subr.mxu0 0.0
        %2180 = vmatpush1.msra.mxu0 0.0
        %2181 = vmatprep.subr.mxu0 0.0
        %2182 = vmatpush1.msra.mxu0 0.0
        %2183 = vmatprep.subr.mxu0 0.0
        %2184 = vmatpush1.msra.mxu0 0.0
        %2185 = vmatprep.subr.mxu0 0.0
        %2186 = vmatpush1.msra.mxu0 0.0
        %2187 = vmatprep.subr.mxu0 0.0
        %2188 = vmatpush1.msra.mxu0 0.0
        %2189 = vmatprep.subr.mxu0 0.0
        %2190 = vmatpush1.msra.mxu0 0.0
        %2191 = vmatprep.subr.mxu0 0.0
        %2192 = vmatpush1.msra.mxu0 0.0
        %2193 = vmatprep.subr.mxu0 0.0
        %2194 = vmatpush1.msra.mxu0 0.0
        %2195 = vmatprep.subr.mxu0 0.0
        %2196 = vmatpush1.msra.mxu0 0.0
        %2197 = vmatprep.subr.mxu0 0.0
        %2198 = vmatpush1.msra.mxu0 0.0
        %2199 = vmatprep.subr.mxu0 0.0
        %2200 = vmatpush1.msra.mxu0 0.0
        %2201 = vmatprep.subr.mxu0 0.0
        %2202 = vmatpush1.msra.mxu0 0.0
        %2203 = vmatprep.subr.mxu0 0.0
        %2204 = vmatpush1.msra.mxu0 0.0
        %2205 = vmatprep.subr.mxu0 0.0
        %2206 = vmatpush1.msra.mxu0 0.0
        %2207 = vmatprep.mubr.f32.mxu0 0.0
        %2208 = vmatmul.mubr.f32.gmra.mrb[0].mxu0 %v630
        %v2209 = vpop.f32.mrb[0].mxu0
        %v2210 = vadd.f32 0.0, %v2209
        %v2211 = vpop.f32.mrb[0].mxu0
        %2212 = vmatprep.mubr.f32.mxu0 0.0
        %2213 = vmatmul.mubr.f32.gmra.mrb[0].mxu0 %v632
        %v2214 = vpop.f32.mrb[0].mxu0
        %v2215 = vadd.f32 0.0, %v2214
        %v2216 = vpop.f32.mrb[0].mxu0
        %2217 = vmatprep.mubr.f32.mxu0 0.0
        %2218 = vmatmul.mubr.f32.gmra.mrb[0].mxu0 %v634
        %v2219 = vpop.f32.mrb[0].mxu0
        %v2220 = vadd.f32 0.0, %v2219
        %v2221 = vpop.f32.mrb[0].mxu0
        %2222 = vmatprep.mubr.f32.mxu0 0.0
        %2223 = vmatmul.mubr.f32.gmra.mrb[0].mxu0 %v636
        %v2224 = vpop.f32.mrb[0].mxu0
        %v2225 = vadd.f32 0.0, %v2224
        %v2226 = vpop.f32.mrb[0].mxu0
        %2227 = vmatprep.mubr.f32.mxu0 0.0
        %2228 = vmatmul.mubr.f32.gmra.mrb[0].mxu0 %v638
        %v2229 = vpop.f32.mrb[0].mxu0
        %v2230 = vadd.f32 0.0, %v2229
        %v2231 = vpop.f32.mrb[0].mxu0
        %2232 = vmatprep.mubr.f32.mxu0 0.0
        %2233 = vmatmul.mubr.f32.gmra.mrb[0].mxu0 %v640
        %v2234 = vpop.f32.mrb[0].mxu0
        %v2235 = vadd.f32 0.0, %v2234
        %v2236 = vpop.f32.mrb[0].mxu0
        %2237 = vmatprep.mubr.f32.mxu0 0.0
        %2238 = vmatmul.mubr.f32.gmra.mrb[0].mxu0 %v642
        %v2239 = vpop.f32.mrb[0].mxu0
        %v2240 = vadd.f32 0.0, %v2239
        %v2241 = vpop.f32.mrb[0].mxu0
        %2242 = vmatprep.mubr.f32.mxu0 0.0
        %2243 = vmatmul.mubr.f32.gmra.mrb[0].mxu0 %v644
        %v2244 = vpop.f32.mrb[0].mxu0
        %v2245 = vadd.f32 0.0, %v2244
        %v2246 = vpop.f32.mrb[0].mxu0
        %2247 = vmatprep.mubr.f32.mxu0 0.0
        %2248 = vmatmul.mubr.f32.gmra.mrb[0].mxu0 %v646
        %v2249 = vpop.f32.mrb[0].mxu0
        %v2250 = vadd.f32 0.0, %v2249
        %v2251 = vpop.f32.mrb[0].mxu0
        %2252 = vmatprep.mubr.f32.mxu0 0.0
        %2253 = vmatmul.mubr.f32.gmra.mrb[0].mxu0 %v648
        %v2254 = vpop.f32.mrb[0].mxu0
        %v2255 = vadd.f32 0.0, %v2254
        %v2256 = vpop.f32.mrb[0].mxu0
        %2257 = vmatprep.mubr.f32.mxu0 0.0
        %2258 = vmatmul.mubr.f32.gmra.mrb[0].mxu0 %v650
        %v2259 = vpop.f32.mrb[0].mxu0
        %v2260 = vadd.f32 0.0, %v2259
        %v2261 = vpop.f32.mrb[0].mxu0
        %2262 = vmatprep.mubr.f32.mxu0 0.0
        %2263 = vmatmul.mubr.f32.gmra.mrb[0].mxu0 %v652
        %v2264 = vpop.f32.mrb[0].mxu0
        %v2265 = vadd.f32 0.0, %v2264
        %v2266 = vpop.f32.mrb[0].mxu0
        %2267 = vmatprep.mubr.f32.mxu0 0.0
        %2268 = vmatmul.mubr.f32.gmra.mrb[0].mxu0 %v654
        %v2269 = vpop.f32.mrb[0].mxu0
        %v2270 = vadd.f32 0.0, %v2269
        %v2271 = vpop.f32.mrb[0].mxu0
        %2272 = vmatprep.mubr.f32.mxu0 0.0
        %2273 = vmatmul.mubr.f32.gmra.mrb[0].mxu0 %v656
        %v2274 = vpop.f32.mrb[0].mxu0
        %v2275 = vadd.f32 0.0, %v2274
        %v2276 = vpop.f32.mrb[0].mxu0
        %2277 = vmatprep.mubr.f32.mxu0 0.0
        %2278 = vmatmul.mubr.f32.gmra.mrb[0].mxu0 %v658
        %v2279 = vpop.f32.mrb[0].mxu0
        %v2280 = vadd.f32 0.0, %v2279
        %v2281 = vpop.f32.mrb[0].mxu0
        %2282 = vmatprep.mubr.f32.mxu0 0.0
        %2283 = vmatmul.mubr.f32.gmra.mrb[0].mxu0 %v660
        %v2284 = vpop.f32.mrb[0].mxu0
        %v2285 = vadd.f32 0.0, %v2284
        %v2286 = vpop.f32.mrb[0].mxu0
        %2287 = vmatprep.mubr.f32.mxu0 0.0
        %2288 = vmatmul.mubr.f32.gmra.mrb[0].mxu0 %v662
        %v2289 = vpop.f32.mrb[0].mxu0
        %v2290 = vadd.f32 0.0, %v2289
        %v2291 = vpop.f32.mrb[0].mxu0
        %2292 = vmatprep.mubr.f32.mxu0 0.0
        %2293 = vmatmul.mubr.f32.gmra.mrb[0].mxu0 %v664
        %v2294 = vpop.f32.mrb[0].mxu0
        %v2295 = vadd.f32 0.0, %v2294
        %v2296 = vpop.f32.mrb[0].mxu0
        %2297 = vmatprep.mubr.f32.mxu0 0.0
        %2298 = vmatmul.mubr.f32.gmra.mrb[0].mxu0 %v666
        %v2299 = vpop.f32.mrb[0].mxu0
        %v2300 = vadd.f32 0.0, %v2299
        %v2301 = vpop.f32.mrb[0].mxu0
        %2302 = vmatprep.mubr.f32.mxu0 0.0
        %2303 = vmatmul.mubr.f32.gmra.mrb[0].mxu0 %v668
        %v2304 = vpop.f32.mrb[0].mxu0
        %v2305 = vadd.f32 0.0, %v2304
        %v2306 = vpop.f32.mrb[0].mxu0
        %2307 = vmatprep.mubr.f32.mxu0 0.0
        %2308 = vmatmul.mubr.f32.gmra.mrb[0].mxu0 %v670
        %v2309 = vpop.f32.mrb[0].mxu0
        %v2310 = vadd.f32 0.0, %v2309
        %v2311 = vpop.f32.mrb[0].mxu0
        %2312 = vmatprep.mubr.f32.mxu0 0.0
        %2313 = vmatmul.mubr.f32.gmra.mrb[0].mxu0 %v672
        %v2314 = vpop.f32.mrb[0].mxu0
        %v2315 = vadd.f32 0.0, %v2314
        %v2316 = vpop.f32.mrb[0].mxu0
        %2317 = vmatprep.mubr.f32.mxu0 0.0
        %2318 = vmatmul.mubr.f32.gmra.mrb[0].mxu0 %v674
        %v2319 = vpop.f32.mrb[0].mxu0
        %v2320 = vadd.f32 0.0, %v2319
        %v2321 = vpop.f32.mrb[0].mxu0
        %2322 = vmatprep.mubr.f32.mxu0 0.0
        %2323 = vmatmul.mubr.f32.gmra.mrb[0].mxu0 %v676
        %v2324 = vpop.f32.mrb[0].mxu0
        %v2325 = vadd.f32 0.0, %v2324
        %v2326 = vpop.f32.mrb[0].mxu0
        %2327 = vmatprep.mubr.f32.mxu0 0.0
        %2328 = vmatmul.mubr.f32.gmra.mrb[0].mxu0 %v678
        %v2329 = vpop.f32.mrb[0].mxu0
        %v2330 = vadd.f32 0.0, %v2329
        %v2331 = vpop.f32.mrb[0].mxu0
        %2332 = vmatprep.mubr.f32.mxu0 0.0
        %2333 = vmatmul.mubr.f32.gmra.mrb[0].mxu0 %v680
        %v2334 = vpop.f32.mrb[0].mxu0
        %v2335 = vadd.f32 0.0, %v2334
        %v2336 = vpop.f32.mrb[0].mxu0
        %2337 = vmatprep.mubr.f32.mxu0 0.0
        %2338 = vmatmul.mubr.f32.gmra.mrb[0].mxu0 %v682
        %v2339 = vpop.f32.mrb[0].mxu0
        %v2340 = vadd.f32 0.0, %v2339
        %v2341 = vpop.f32.mrb[0].mxu0
        %2342 = vmatprep.mubr.f32.mxu0 0.0
        %2343 = vmatmul.mubr.f32.gmra.mrb[0].mxu0 %v684
        %v2344 = vpop.f32.mrb[0].mxu0
        %v2345 = vadd.f32 0.0, %v2344
        %v2346 = vpop.f32.mrb[0].mxu0
        %2347 = vmatprep.mubr.f32.mxu0 0.0
        %2348 = vmatmul.mubr.f32.gmra.mrb[0].mxu0 %v1324
        %v2349 = vpop.f32.mrb[0].mxu0
        %v2350 = vadd.f32 0.0, %v2349
        %v2351 = vpop.f32.mrb[0].mxu0
        %2352 = vmatprep.mubr.f32.mxu0 0.0
        %2353 = vmatmul.mubr.f32.gmra.mrb[0].mxu0 %v1327
        %v2354 = vpop.f32.mrb[0].mxu0
        %v2355 = vadd.f32 0.0, %v2354
        %v2356 = vpop.f32.mrb[0].mxu0
        %2357 = vmatprep.mubr.f32.mxu0 0.0
        %2358 = vmatmul.mubr.f32.gmra.mrb[0].mxu0 %v2135
        %v2359 = vpop.f32.mrb[0].mxu0
        %v2360 = vadd.f32 0.0, %v2359
        %v2361 = vpop.f32.mrb[0].mxu0
        %2362 = vmatprep.mubr.f32.mxu0 0.0
        %2363 = vmatmul.mubr.f32.gmra.mrb[0].mxu0 %v2138
        %v2364 = vpop.f32.mrb[0].mxu0
        %v2365 = vadd.f32 0.0, %v2364
        %v2366 = vpop.f32.mrb[0].mxu0
        %2367 = vdwg.mxu0
        %v2368 = vadd.f32 %v2100, %v2210
        %v2369 = vadd.f32 %v2101, %v2215
        %v2370 = vadd.f32 %v2102, %v2220
        %v2371 = vadd.f32 %v2103, %v2225
        %v2372 = vadd.f32 %v2104, %v2230
        %v2373 = vadd.f32 %v2105, %v2235
        %v2374 = vadd.f32 %v2106, %v2240
        %v2375 = vadd.f32 %v2107, %v2245
        %v2376 = vadd.f32 %v2108, %v2250
        %v2377 = vadd.f32 %v2109, %v2255
        %v2378 = vadd.f32 %v2110, %v2260
        %v2379 = vadd.f32 %v2111, %v2265
        %v2380 = vadd.f32 %v2112, %v2270
        %v2381 = vadd.f32 %v2113, %v2275
        %v2382 = vadd.f32 %v2114, %v2280
        %v2383 = vadd.f32 %v2115, %v2285
        %v2384 = vadd.f32 %v2116, %v2290
        %v2385 = vadd.f32 %v2117, %v2295
        %v2386 = vadd.f32 %v2118, %v2300
        %v2387 = vadd.f32 %v2119, %v2305
        %v2388 = vadd.f32 %v2120, %v2310
        %v2389 = vadd.f32 %v2121, %v2315
        %v2390 = vadd.f32 %v2122, %v2320
        %v2391 = vadd.f32 %v2123, %v2325
        %v2392 = vadd.f32 %v2124, %v2330
        %v2393 = vadd.f32 %v2125, %v2335
        %v2394 = vadd.f32 %v2126, %v2340
        %v2395 = vadd.f32 %v2127, %v2345
        %v2396 = vadd.f32 %v2128, %v2350
        %v2397 = vadd.f32 %v2129, %v2355
        %v2398 = vadd.f32 %v2130, %v2360
        %v2399 = vadd.f32 %v2131, %v2365
        %v2401 = vrot.slane %v193, 1
        %v2402 = vrot.slane %v194, 1
        %v2403 = vsel %vm245, %v2401, %v2402
        %v2404 = vrot.slane %v195, 1
        %v2405 = vsel %vm245, %v2402, %v2404
        %s2406 = scalar_lea.vmem %s1, 28
        %v2407 = vld [vmem:[%s2406] sm:$0x7]
        %v2408 = vsel %vm328, %v2403, 0
        %v2410 = vsel %vm328, %v2405, 0
        %v2413 = vsel %vm393, %v2407, 0
        %2415 = vmatprep.subr.mxu0 0.0
        %2416 = vmatpush1.msra.mxu0 %v2413
        %2417 = vmatprep.subr.mxu0 0.0
        %2418 = vmatpush1.msra.mxu0 0.0
        %2419 = vmatprep.subr.mxu0 0.0
        %2420 = vmatpush1.msra.mxu0 0.0
        %2421 = vmatprep.subr.mxu0 0.0
        %2422 = vmatpush1.msra.mxu0 0.0
        %2423 = vmatprep.subr.mxu0 0.0
        %2424 = vmatpush1.msra.mxu0 0.0
        %2425 = vmatprep.subr.mxu0 0.0
        %2426 = vmatpush1.msra.mxu0 0.0
        %2427 = vmatprep.subr.mxu0 0.0
        %2428 = vmatpush1.msra.mxu0 0.0
        %2429 = vmatprep.subr.mxu0 0.0
        %2430 = vmatpush1.msra.mxu0 0.0
        %2431 = vmatprep.subr.mxu0 0.0
        %2432 = vmatpush1.msra.mxu0 0.0
        %2433 = vmatprep.subr.mxu0 0.0
        %2434 = vmatpush1.msra.mxu0 0.0
        %2435 = vmatprep.subr.mxu0 0.0
        %2436 = vmatpush1.msra.mxu0 0.0
        %2437 = vmatprep.subr.mxu0 0.0
        %2438 = vmatpush1.msra.mxu0 0.0
        %2439 = vmatprep.subr.mxu0 0.0
        %2440 = vmatpush1.msra.mxu0 0.0
        %2441 = vmatprep.subr.mxu0 0.0
        %2442 = vmatpush1.msra.mxu0 0.0
        %2443 = vmatprep.subr.mxu0 0.0
        %2444 = vmatpush1.msra.mxu0 0.0
        %2445 = vmatprep.subr.mxu0 0.0
        %2446 = vmatpush1.msra.mxu0 0.0
        %2447 = vmatprep.subr.mxu0 0.0
        %2448 = vmatpush1.msra.mxu0 0.0
        %2449 = vmatprep.subr.mxu0 0.0
        %2450 = vmatpush1.msra.mxu0 0.0
        %2451 = vmatprep.subr.mxu0 0.0
        %2452 = vmatpush1.msra.mxu0 0.0
        %2453 = vmatprep.subr.mxu0 0.0
        %2454 = vmatpush1.msra.mxu0 0.0
        %2455 = vmatprep.subr.mxu0 0.0
        %2456 = vmatpush1.msra.mxu0 0.0
        %2457 = vmatprep.subr.mxu0 0.0
        %2458 = vmatpush1.msra.mxu0 0.0
        %2459 = vmatprep.subr.mxu0 0.0
        %2460 = vmatpush1.msra.mxu0 0.0
        %2461 = vmatprep.subr.mxu0 0.0
        %2462 = vmatpush1.msra.mxu0 0.0
        %2463 = vmatprep.subr.mxu0 0.0
        %2464 = vmatpush1.msra.mxu0 0.0
        %2465 = vmatprep.subr.mxu0 0.0
        %2466 = vmatpush1.msra.mxu0 0.0
        %2467 = vmatprep.subr.mxu0 0.0
        %2468 = vmatpush1.msra.mxu0 0.0
        %2469 = vmatprep.subr.mxu0 0.0
        %2470 = vmatpush1.msra.mxu0 0.0
        %2471 = vmatprep.subr.mxu0 0.0
        %2472 = vmatpush1.msra.mxu0 0.0
        %2473 = vmatprep.subr.mxu0 0.0
        %2474 = vmatpush1.msra.mxu0 0.0
        %2475 = vmatprep.subr.mxu0 0.0
        %2476 = vmatpush1.msra.mxu0 0.0
        %2477 = vmatprep.subr.mxu0 0.0
        %2478 = vmatpush1.msra.mxu0 0.0
        %2479 = vmatprep.mubr.f32.mxu0 0.0
        %2480 = vmatmul.mubr.f32.gmra.mrb[0].mxu0 %v337
        %v2481 = vpop.f32.mrb[0].mxu0
        %v2482 = vadd.f32 0.0, %v2481
        %v2483 = vpop.f32.mrb[0].mxu0
        %2484 = vmatprep.mubr.f32.mxu0 0.0
        %2485 = vmatmul.mubr.f32.gmra.mrb[0].mxu0 %v339
        %v2486 = vpop.f32.mrb[0].mxu0
        %v2487 = vadd.f32 0.0, %v2486
        %v2488 = vpop.f32.mrb[0].mxu0
        %2489 = vmatprep.mubr.f32.mxu0 0.0
        %2490 = vmatmul.mubr.f32.gmra.mrb[0].mxu0 %v341
        %v2491 = vpop.f32.mrb[0].mxu0
        %v2492 = vadd.f32 0.0, %v2491
        %v2493 = vpop.f32.mrb[0].mxu0
        %2494 = vmatprep.mubr.f32.mxu0 0.0
        %2495 = vmatmul.mubr.f32.gmra.mrb[0].mxu0 %v343
        %v2496 = vpop.f32.mrb[0].mxu0
        %v2497 = vadd.f32 0.0, %v2496
        %v2498 = vpop.f32.mrb[0].mxu0
        %2499 = vmatprep.mubr.f32.mxu0 0.0
        %2500 = vmatmul.mubr.f32.gmra.mrb[0].mxu0 %v345
        %v2501 = vpop.f32.mrb[0].mxu0
        %v2502 = vadd.f32 0.0, %v2501
        %v2503 = vpop.f32.mrb[0].mxu0
        %2504 = vmatprep.mubr.f32.mxu0 0.0
        %2505 = vmatmul.mubr.f32.gmra.mrb[0].mxu0 %v347
        %v2506 = vpop.f32.mrb[0].mxu0
        %v2507 = vadd.f32 0.0, %v2506
        %v2508 = vpop.f32.mrb[0].mxu0
        %2509 = vmatprep.mubr.f32.mxu0 0.0
        %2510 = vmatmul.mubr.f32.gmra.mrb[0].mxu0 %v349
        %v2511 = vpop.f32.mrb[0].mxu0
        %v2512 = vadd.f32 0.0, %v2511
        %v2513 = vpop.f32.mrb[0].mxu0
        %2514 = vmatprep.mubr.f32.mxu0 0.0
        %2515 = vmatmul.mubr.f32.gmra.mrb[0].mxu0 %v351
        %v2516 = vpop.f32.mrb[0].mxu0
        %v2517 = vadd.f32 0.0, %v2516
        %v2518 = vpop.f32.mrb[0].mxu0
        %2519 = vmatprep.mubr.f32.mxu0 0.0
        %2520 = vmatmul.mubr.f32.gmra.mrb[0].mxu0 %v353
        %v2521 = vpop.f32.mrb[0].mxu0
        %v2522 = vadd.f32 0.0, %v2521
        %v2523 = vpop.f32.mrb[0].mxu0
        %2524 = vmatprep.mubr.f32.mxu0 0.0
        %2525 = vmatmul.mubr.f32.gmra.mrb[0].mxu0 %v355
        %v2526 = vpop.f32.mrb[0].mxu0
        %v2527 = vadd.f32 0.0, %v2526
        %v2528 = vpop.f32.mrb[0].mxu0
        %2529 = vmatprep.mubr.f32.mxu0 0.0
        %2530 = vmatmul.mubr.f32.gmra.mrb[0].mxu0 %v357
        %v2531 = vpop.f32.mrb[0].mxu0
        %v2532 = vadd.f32 0.0, %v2531
        %v2533 = vpop.f32.mrb[0].mxu0
        %2534 = vmatprep.mubr.f32.mxu0 0.0
        %2535 = vmatmul.mubr.f32.gmra.mrb[0].mxu0 %v359
        %v2536 = vpop.f32.mrb[0].mxu0
        %v2537 = vadd.f32 0.0, %v2536
        %v2538 = vpop.f32.mrb[0].mxu0
        %2539 = vmatprep.mubr.f32.mxu0 0.0
        %2540 = vmatmul.mubr.f32.gmra.mrb[0].mxu0 %v361
        %v2541 = vpop.f32.mrb[0].mxu0
        %v2542 = vadd.f32 0.0, %v2541
        %v2543 = vpop.f32.mrb[0].mxu0
        %2544 = vmatprep.mubr.f32.mxu0 0.0
        %2545 = vmatmul.mubr.f32.gmra.mrb[0].mxu0 %v363
        %v2546 = vpop.f32.mrb[0].mxu0
        %v2547 = vadd.f32 0.0, %v2546
        %v2548 = vpop.f32.mrb[0].mxu0
        %2549 = vmatprep.mubr.f32.mxu0 0.0
        %2550 = vmatmul.mubr.f32.gmra.mrb[0].mxu0 %v365
        %v2551 = vpop.f32.mrb[0].mxu0
        %v2552 = vadd.f32 0.0, %v2551
        %v2553 = vpop.f32.mrb[0].mxu0
        %2554 = vmatprep.mubr.f32.mxu0 0.0
        %2555 = vmatmul.mubr.f32.gmra.mrb[0].mxu0 %v367
        %v2556 = vpop.f32.mrb[0].mxu0
        %v2557 = vadd.f32 0.0, %v2556
        %v2558 = vpop.f32.mrb[0].mxu0
        %2559 = vmatprep.mubr.f32.mxu0 0.0
        %2560 = vmatmul.mubr.f32.gmra.mrb[0].mxu0 %v369
        %v2561 = vpop.f32.mrb[0].mxu0
        %v2562 = vadd.f32 0.0, %v2561
        %v2563 = vpop.f32.mrb[0].mxu0
        %2564 = vmatprep.mubr.f32.mxu0 0.0
        %2565 = vmatmul.mubr.f32.gmra.mrb[0].mxu0 %v371
        %v2566 = vpop.f32.mrb[0].mxu0
        %v2567 = vadd.f32 0.0, %v2566
        %v2568 = vpop.f32.mrb[0].mxu0
        %2569 = vmatprep.mubr.f32.mxu0 0.0
        %2570 = vmatmul.mubr.f32.gmra.mrb[0].mxu0 %v373
        %v2571 = vpop.f32.mrb[0].mxu0
        %v2572 = vadd.f32 0.0, %v2571
        %v2573 = vpop.f32.mrb[0].mxu0
        %2574 = vmatprep.mubr.f32.mxu0 0.0
        %2575 = vmatmul.mubr.f32.gmra.mrb[0].mxu0 %v375
        %v2576 = vpop.f32.mrb[0].mxu0
        %v2577 = vadd.f32 0.0, %v2576
        %v2578 = vpop.f32.mrb[0].mxu0
        %2579 = vmatprep.mubr.f32.mxu0 0.0
        %2580 = vmatmul.mubr.f32.gmra.mrb[0].mxu0 %v377
        %v2581 = vpop.f32.mrb[0].mxu0
        %v2582 = vadd.f32 0.0, %v2581
        %v2583 = vpop.f32.mrb[0].mxu0
        %2584 = vmatprep.mubr.f32.mxu0 0.0
        %2585 = vmatmul.mubr.f32.gmra.mrb[0].mxu0 %v379
        %v2586 = vpop.f32.mrb[0].mxu0
        %v2587 = vadd.f32 0.0, %v2586
        %v2588 = vpop.f32.mrb[0].mxu0
        %2589 = vmatprep.mubr.f32.mxu0 0.0
        %2590 = vmatmul.mubr.f32.gmra.mrb[0].mxu0 %v381
        %v2591 = vpop.f32.mrb[0].mxu0
        %v2592 = vadd.f32 0.0, %v2591
        %v2593 = vpop.f32.mrb[0].mxu0
        %2594 = vmatprep.mubr.f32.mxu0 0.0
        %2595 = vmatmul.mubr.f32.gmra.mrb[0].mxu0 %v383
        %v2596 = vpop.f32.mrb[0].mxu0
        %v2597 = vadd.f32 0.0, %v2596
        %v2598 = vpop.f32.mrb[0].mxu0
        %2599 = vmatprep.mubr.f32.mxu0 0.0
        %2600 = vmatmul.mubr.f32.gmra.mrb[0].mxu0 %v385
        %v2601 = vpop.f32.mrb[0].mxu0
        %v2602 = vadd.f32 0.0, %v2601
        %v2603 = vpop.f32.mrb[0].mxu0
        %2604 = vmatprep.mubr.f32.mxu0 0.0
        %2605 = vmatmul.mubr.f32.gmra.mrb[0].mxu0 %v387
        %v2606 = vpop.f32.mrb[0].mxu0
        %v2607 = vadd.f32 0.0, %v2606
        %v2608 = vpop.f32.mrb[0].mxu0
        %2609 = vmatprep.mubr.f32.mxu0 0.0
        %2610 = vmatmul.mubr.f32.gmra.mrb[0].mxu0 %v389
        %v2611 = vpop.f32.mrb[0].mxu0
        %v2612 = vadd.f32 0.0, %v2611
        %v2613 = vpop.f32.mrb[0].mxu0
        %2614 = vmatprep.mubr.f32.mxu0 0.0
        %2615 = vmatmul.mubr.f32.gmra.mrb[0].mxu0 %v391
        %v2616 = vpop.f32.mrb[0].mxu0
        %v2617 = vadd.f32 0.0, %v2616
        %v2618 = vpop.f32.mrb[0].mxu0
        %2619 = vmatprep.mubr.f32.mxu0 0.0
        %2620 = vmatmul.mubr.f32.gmra.mrb[0].mxu0 %v1597
        %v2621 = vpop.f32.mrb[0].mxu0
        %v2622 = vadd.f32 0.0, %v2621
        %v2623 = vpop.f32.mrb[0].mxu0
        %2624 = vmatprep.mubr.f32.mxu0 0.0
        %2625 = vmatmul.mubr.f32.gmra.mrb[0].mxu0 %v1599
        %v2626 = vpop.f32.mrb[0].mxu0
        %v2627 = vadd.f32 0.0, %v2626
        %v2628 = vpop.f32.mrb[0].mxu0
        %2629 = vmatprep.mubr.f32.mxu0 0.0
        %2630 = vmatmul.mubr.f32.gmra.mrb[0].mxu0 %v2408
        %v2631 = vpop.f32.mrb[0].mxu0
        %v2632 = vadd.f32 0.0, %v2631
        %v2633 = vpop.f32.mrb[0].mxu0
        %2634 = vmatprep.mubr.f32.mxu0 0.0
        %2635 = vmatmul.mubr.f32.gmra.mrb[0].mxu0 %v2410
        %v2636 = vpop.f32.mrb[0].mxu0
        %v2637 = vadd.f32 0.0, %v2636
        %v2638 = vpop.f32.mrb[0].mxu0
        %2639 = vdwg.mxu0
        %v2640 = vadd.f32 %v2368, %v2482
        %v2641 = vadd.f32 %v2369, %v2487
        %v2642 = vadd.f32 %v2370, %v2492
        %v2643 = vadd.f32 %v2371, %v2497
        %v2644 = vadd.f32 %v2372, %v2502
        %v2645 = vadd.f32 %v2373, %v2507
        %v2646 = vadd.f32 %v2374, %v2512
        %v2647 = vadd.f32 %v2375, %v2517
        %v2648 = vadd.f32 %v2376, %v2522
        %v2649 = vadd.f32 %v2377, %v2527
        %v2650 = vadd.f32 %v2378, %v2532
        %v2651 = vadd.f32 %v2379, %v2537
        %v2652 = vadd.f32 %v2380, %v2542
        %v2653 = vadd.f32 %v2381, %v2547
        %v2654 = vadd.f32 %v2382, %v2552
        %v2655 = vadd.f32 %v2383, %v2557
        %v2656 = vadd.f32 %v2384, %v2562
        %v2657 = vadd.f32 %v2385, %v2567
        %v2658 = vadd.f32 %v2386, %v2572
        %v2659 = vadd.f32 %v2387, %v2577
        %v2660 = vadd.f32 %v2388, %v2582
        %v2661 = vadd.f32 %v2389, %v2587
        %v2662 = vadd.f32 %v2390, %v2592
        %v2663 = vadd.f32 %v2391, %v2597
        %v2664 = vadd.f32 %v2392, %v2602
        %v2665 = vadd.f32 %v2393, %v2607
        %v2666 = vadd.f32 %v2394, %v2612
        %v2667 = vadd.f32 %v2395, %v2617
        %v2668 = vadd.f32 %v2396, %v2622
        %v2669 = vadd.f32 %v2397, %v2627
        %v2670 = vadd.f32 %v2398, %v2632
        %v2671 = vadd.f32 %v2399, %v2637
        %v2672 = vrot.slane %v193, 2
        %v2673 = vrot.slane %v194, 2
        %v2674 = vsel %vm914, %v2672, %v2673
        %v2675 = vrot.slane %v195, 2
        %v2676 = vsel %vm914, %v2673, %v2675
        %s2677 = scalar_lea.vmem %s1, 32
        %v2678 = vld [vmem:[%s2677] sm:$0x7]
        %v2679 = vsel %vm328, %v2674, 0
        %v2681 = vsel %vm328, %v2676, 0
        %v2684 = vsel %vm393, %v2678, 0
        %2686 = vmatprep.subr.mxu0 0.0
        %2687 = vmatpush1.msra.mxu0 %v2684
        %2688 = vmatprep.subr.mxu0 0.0
        %2689 = vmatpush1.msra.mxu0 0.0
        %2690 = vmatprep.subr.mxu0 0.0
        %2691 = vmatpush1.msra.mxu0 0.0
        %2692 = vmatprep.subr.mxu0 0.0
        %2693 = vmatpush1.msra.mxu0 0.0
        %2694 = vmatprep.subr.mxu0 0.0
        %2695 = vmatpush1.msra.mxu0 0.0
        %2696 = vmatprep.subr.mxu0 0.0
        %2697 = vmatpush1.msra.mxu0 0.0
        %2698 = vmatprep.subr.mxu0 0.0
        %2699 = vmatpush1.msra.mxu0 0.0
        %2700 = vmatprep.subr.mxu0 0.0
        %2701 = vmatpush1.msra.mxu0 0.0
        %2702 = vmatprep.subr.mxu0 0.0
        %2703 = vmatpush1.msra.mxu0 0.0
        %2704 = vmatprep.subr.mxu0 0.0
        %2705 = vmatpush1.msra.mxu0 0.0
        %2706 = vmatprep.subr.mxu0 0.0
        %2707 = vmatpush1.msra.mxu0 0.0
        %2708 = vmatprep.subr.mxu0 0.0
        %2709 = vmatpush1.msra.mxu0 0.0
        %2710 = vmatprep.subr.mxu0 0.0
        %2711 = vmatpush1.msra.mxu0 0.0
        %2712 = vmatprep.subr.mxu0 0.0
        %2713 = vmatpush1.msra.mxu0 0.0
        %2714 = vmatprep.subr.mxu0 0.0
        %2715 = vmatpush1.msra.mxu0 0.0
        %2716 = vmatprep.subr.mxu0 0.0
        %2717 = vmatpush1.msra.mxu0 0.0
        %2718 = vmatprep.subr.mxu0 0.0
        %2719 = vmatpush1.msra.mxu0 0.0
        %2720 = vmatprep.subr.mxu0 0.0
        %2721 = vmatpush1.msra.mxu0 0.0
        %2722 = vmatprep.subr.mxu0 0.0
        %2723 = vmatpush1.msra.mxu0 0.0
        %2724 = vmatprep.subr.mxu0 0.0
        %2725 = vmatpush1.msra.mxu0 0.0
        %2726 = vmatprep.subr.mxu0 0.0
        %2727 = vmatpush1.msra.mxu0 0.0
        %2728 = vmatprep.subr.mxu0 0.0
        %2729 = vmatpush1.msra.mxu0 0.0
        %2730 = vmatprep.subr.mxu0 0.0
        %2731 = vmatpush1.msra.mxu0 0.0
        %2732 = vmatprep.subr.mxu0 0.0
        %2733 = vmatpush1.msra.mxu0 0.0
        %2734 = vmatprep.subr.mxu0 0.0
        %2735 = vmatpush1.msra.mxu0 0.0
        %2736 = vmatprep.subr.mxu0 0.0
        %2737 = vmatpush1.msra.mxu0 0.0
        %2738 = vmatprep.subr.mxu0 0.0
        %2739 = vmatpush1.msra.mxu0 0.0
        %2740 = vmatprep.subr.mxu0 0.0
        %2741 = vmatpush1.msra.mxu0 0.0
        %2742 = vmatprep.subr.mxu0 0.0
        %2743 = vmatpush1.msra.mxu0 0.0
        %2744 = vmatprep.subr.mxu0 0.0
        %2745 = vmatpush1.msra.mxu0 0.0
        %2746 = vmatprep.subr.mxu0 0.0
        %2747 = vmatpush1.msra.mxu0 0.0
        %2748 = vmatprep.subr.mxu0 0.0
        %2749 = vmatpush1.msra.mxu0 0.0
        %2750 = vmatprep.mubr.f32.mxu0 0.0
        %2751 = vmatmul.mubr.f32.gmra.mrb[0].mxu0 %v1005
        %v2752 = vpop.f32.mrb[0].mxu0
        %v2753 = vadd.f32 0.0, %v2752
        %v2754 = vpop.f32.mrb[0].mxu0
        %2755 = vmatprep.mubr.f32.mxu0 0.0
        %2756 = vmatmul.mubr.f32.gmra.mrb[0].mxu0 %v1007
        %v2757 = vpop.f32.mrb[0].mxu0
        %v2758 = vadd.f32 0.0, %v2757
        %v2759 = vpop.f32.mrb[0].mxu0
        %2760 = vmatprep.mubr.f32.mxu0 0.0
        %2761 = vmatmul.mubr.f32.gmra.mrb[0].mxu0 %v1009
        %v2762 = vpop.f32.mrb[0].mxu0
        %v2763 = vadd.f32 0.0, %v2762
        %v2764 = vpop.f32.mrb[0].mxu0
        %2765 = vmatprep.mubr.f32.mxu0 0.0
        %2766 = vmatmul.mubr.f32.gmra.mrb[0].mxu0 %v1011
        %v2767 = vpop.f32.mrb[0].mxu0
        %v2768 = vadd.f32 0.0, %v2767
        %v2769 = vpop.f32.mrb[0].mxu0
        %2770 = vmatprep.mubr.f32.mxu0 0.0
        %2771 = vmatmul.mubr.f32.gmra.mrb[0].mxu0 %v1013
        %v2772 = vpop.f32.mrb[0].mxu0
        %v2773 = vadd.f32 0.0, %v2772
        %v2774 = vpop.f32.mrb[0].mxu0
        %2775 = vmatprep.mubr.f32.mxu0 0.0
        %2776 = vmatmul.mubr.f32.gmra.mrb[0].mxu0 %v1015
        %v2777 = vpop.f32.mrb[0].mxu0
        %v2778 = vadd.f32 0.0, %v2777
        %v2779 = vpop.f32.mrb[0].mxu0
        %2780 = vmatprep.mubr.f32.mxu0 0.0
        %2781 = vmatmul.mubr.f32.gmra.mrb[0].mxu0 %v1017
        %v2782 = vpop.f32.mrb[0].mxu0
        %v2783 = vadd.f32 0.0, %v2782
        %v2784 = vpop.f32.mrb[0].mxu0
        %2785 = vmatprep.mubr.f32.mxu0 0.0
        %2786 = vmatmul.mubr.f32.gmra.mrb[0].mxu0 %v1019
        %v2787 = vpop.f32.mrb[0].mxu0
        %v2788 = vadd.f32 0.0, %v2787
        %v2789 = vpop.f32.mrb[0].mxu0
        %2790 = vmatprep.mubr.f32.mxu0 0.0
        %2791 = vmatmul.mubr.f32.gmra.mrb[0].mxu0 %v1021
        %v2792 = vpop.f32.mrb[0].mxu0
        %v2793 = vadd.f32 0.0, %v2792
        %v2794 = vpop.f32.mrb[0].mxu0
        %2795 = vmatprep.mubr.f32.mxu0 0.0
        %2796 = vmatmul.mubr.f32.gmra.mrb[0].mxu0 %v1023
        %v2797 = vpop.f32.mrb[0].mxu0
        %v2798 = vadd.f32 0.0, %v2797
        %v2799 = vpop.f32.mrb[0].mxu0
        %2800 = vmatprep.mubr.f32.mxu0 0.0
        %2801 = vmatmul.mubr.f32.gmra.mrb[0].mxu0 %v1025
        %v2802 = vpop.f32.mrb[0].mxu0
        %v2803 = vadd.f32 0.0, %v2802
        %v2804 = vpop.f32.mrb[0].mxu0
        %2805 = vmatprep.mubr.f32.mxu0 0.0
        %2806 = vmatmul.mubr.f32.gmra.mrb[0].mxu0 %v1027
        %v2807 = vpop.f32.mrb[0].mxu0
        %v2808 = vadd.f32 0.0, %v2807
        %v2809 = vpop.f32.mrb[0].mxu0
        %2810 = vmatprep.mubr.f32.mxu0 0.0
        %2811 = vmatmul.mubr.f32.gmra.mrb[0].mxu0 %v1029
        %v2812 = vpop.f32.mrb[0].mxu0
        %v2813 = vadd.f32 0.0, %v2812
        %v2814 = vpop.f32.mrb[0].mxu0
        %2815 = vmatprep.mubr.f32.mxu0 0.0
        %2816 = vmatmul.mubr.f32.gmra.mrb[0].mxu0 %v1031
        %v2817 = vpop.f32.mrb[0].mxu0
        %v2818 = vadd.f32 0.0, %v2817
        %v2819 = vpop.f32.mrb[0].mxu0
        %2820 = vmatprep.mubr.f32.mxu0 0.0
        %2821 = vmatmul.mubr.f32.gmra.mrb[0].mxu0 %v1033
        %v2822 = vpop.f32.mrb[0].mxu0
        %v2823 = vadd.f32 0.0, %v2822
        %v2824 = vpop.f32.mrb[0].mxu0
        %2825 = vmatprep.mubr.f32.mxu0 0.0
        %2826 = vmatmul.mubr.f32.gmra.mrb[0].mxu0 %v1035
        %v2827 = vpop.f32.mrb[0].mxu0
        %v2828 = vadd.f32 0.0, %v2827
        %v2829 = vpop.f32.mrb[0].mxu0
        %2830 = vmatprep.mubr.f32.mxu0 0.0
        %2831 = vmatmul.mubr.f32.gmra.mrb[0].mxu0 %v1037
        %v2832 = vpop.f32.mrb[0].mxu0
        %v2833 = vadd.f32 0.0, %v2832
        %v2834 = vpop.f32.mrb[0].mxu0
        %2835 = vmatprep.mubr.f32.mxu0 0.0
        %2836 = vmatmul.mubr.f32.gmra.mrb[0].mxu0 %v1039
        %v2837 = vpop.f32.mrb[0].mxu0
        %v2838 = vadd.f32 0.0, %v2837
        %v2839 = vpop.f32.mrb[0].mxu0
        %2840 = vmatprep.mubr.f32.mxu0 0.0
        %2841 = vmatmul.mubr.f32.gmra.mrb[0].mxu0 %v1041
        %v2842 = vpop.f32.mrb[0].mxu0
        %v2843 = vadd.f32 0.0, %v2842
        %v2844 = vpop.f32.mrb[0].mxu0
        %2845 = vmatprep.mubr.f32.mxu0 0.0
        %2846 = vmatmul.mubr.f32.gmra.mrb[0].mxu0 %v1043
        %v2847 = vpop.f32.mrb[0].mxu0
        %v2848 = vadd.f32 0.0, %v2847
        %v2849 = vpop.f32.mrb[0].mxu0
        %2850 = vmatprep.mubr.f32.mxu0 0.0
        %2851 = vmatmul.mubr.f32.gmra.mrb[0].mxu0 %v1045
        %v2852 = vpop.f32.mrb[0].mxu0
        %v2853 = vadd.f32 0.0, %v2852
        %v2854 = vpop.f32.mrb[0].mxu0
        %2855 = vmatprep.mubr.f32.mxu0 0.0
        %2856 = vmatmul.mubr.f32.gmra.mrb[0].mxu0 %v1047
        %v2857 = vpop.f32.mrb[0].mxu0
        %v2858 = vadd.f32 0.0, %v2857
        %v2859 = vpop.f32.mrb[0].mxu0
        %2860 = vmatprep.mubr.f32.mxu0 0.0
        %2861 = vmatmul.mubr.f32.gmra.mrb[0].mxu0 %v1049
        %v2862 = vpop.f32.mrb[0].mxu0
        %v2863 = vadd.f32 0.0, %v2862
        %v2864 = vpop.f32.mrb[0].mxu0
        %2865 = vmatprep.mubr.f32.mxu0 0.0
        %2866 = vmatmul.mubr.f32.gmra.mrb[0].mxu0 %v1051
        %v2867 = vpop.f32.mrb[0].mxu0
        %v2868 = vadd.f32 0.0, %v2867
        %v2869 = vpop.f32.mrb[0].mxu0
        %2870 = vmatprep.mubr.f32.mxu0 0.0
        %2871 = vmatmul.mubr.f32.gmra.mrb[0].mxu0 %v1053
        %v2872 = vpop.f32.mrb[0].mxu0
        %v2873 = vadd.f32 0.0, %v2872
        %v2874 = vpop.f32.mrb[0].mxu0
        %2875 = vmatprep.mubr.f32.mxu0 0.0
        %2876 = vmatmul.mubr.f32.gmra.mrb[0].mxu0 %v1055
        %v2877 = vpop.f32.mrb[0].mxu0
        %v2878 = vadd.f32 0.0, %v2877
        %v2879 = vpop.f32.mrb[0].mxu0
        %2880 = vmatprep.mubr.f32.mxu0 0.0
        %2881 = vmatmul.mubr.f32.gmra.mrb[0].mxu0 %v1057
        %v2882 = vpop.f32.mrb[0].mxu0
        %v2883 = vadd.f32 0.0, %v2882
        %v2884 = vpop.f32.mrb[0].mxu0
        %2885 = vmatprep.mubr.f32.mxu0 0.0
        %2886 = vmatmul.mubr.f32.gmra.mrb[0].mxu0 %v1059
        %v2887 = vpop.f32.mrb[0].mxu0
        %v2888 = vadd.f32 0.0, %v2887
        %v2889 = vpop.f32.mrb[0].mxu0
        %2890 = vmatprep.mubr.f32.mxu0 0.0
        %2891 = vmatmul.mubr.f32.gmra.mrb[0].mxu0 %v1868
        %v2892 = vpop.f32.mrb[0].mxu0
        %v2893 = vadd.f32 0.0, %v2892
        %v2894 = vpop.f32.mrb[0].mxu0
        %2895 = vmatprep.mubr.f32.mxu0 0.0
        %2896 = vmatmul.mubr.f32.gmra.mrb[0].mxu0 %v1870
        %v2897 = vpop.f32.mrb[0].mxu0
        %v2898 = vadd.f32 0.0, %v2897
        %v2899 = vpop.f32.mrb[0].mxu0
        %2900 = vmatprep.mubr.f32.mxu0 0.0
        %2901 = vmatmul.mubr.f32.gmra.mrb[0].mxu0 %v2679
        %v2902 = vpop.f32.mrb[0].mxu0
        %v2903 = vadd.f32 0.0, %v2902
        %v2904 = vpop.f32.mrb[0].mxu0
        %2905 = vmatprep.mubr.f32.mxu0 0.0
        %2906 = vmatmul.mubr.f32.gmra.mrb[0].mxu0 %v2681
        %v2907 = vpop.f32.mrb[0].mxu0
        %v2908 = vadd.f32 0.0, %v2907
        %v2909 = vpop.f32.mrb[0].mxu0
        %2910 = vdwg.mxu0
        %v2911 = vadd.f32 %v2640, %v2753
        %v2912 = vadd.f32 %v2641, %v2758
        %v2913 = vadd.f32 %v2642, %v2763
        %v2914 = vadd.f32 %v2643, %v2768
        %v2915 = vadd.f32 %v2644, %v2773
        %v2916 = vadd.f32 %v2645, %v2778
        %v2917 = vadd.f32 %v2646, %v2783
        %v2918 = vadd.f32 %v2647, %v2788
        %v2919 = vadd.f32 %v2648, %v2793
        %v2920 = vadd.f32 %v2649, %v2798
        %v2921 = vadd.f32 %v2650, %v2803
        %v2922 = vadd.f32 %v2651, %v2808
        %v2923 = vadd.f32 %v2652, %v2813
        %v2924 = vadd.f32 %v2653, %v2818
        %v2925 = vadd.f32 %v2654, %v2823
        %v2926 = vadd.f32 %v2655, %v2828
        %v2927 = vadd.f32 %v2656, %v2833
        %v2928 = vadd.f32 %v2657, %v2838
        %v2929 = vadd.f32 %v2658, %v2843
        %v2930 = vadd.f32 %v2659, %v2848
        %v2931 = vadd.f32 %v2660, %v2853
        %v2932 = vadd.f32 %v2661, %v2858
        %v2933 = vadd.f32 %v2662, %v2863
        %v2934 = vadd.f32 %v2663, %v2868
        %v2935 = vadd.f32 %v2664, %v2873
        %v2936 = vadd.f32 %v2665, %v2878
        %v2937 = vadd.f32 %v2666, %v2883
        %v2938 = vadd.f32 %v2667, %v2888
        %v2939 = vadd.f32 %v2668, %v2893
        %v2940 = vadd.f32 %v2669, %v2898
        %v2941 = vadd.f32 %v2670, %v2903
        %v2942 = vadd.f32 %v2671, %v2908
        %vm2943 = vcmask 130048
        %2944 = vst.msk [vmem:[%s136] sm:$0xff] %vm2943, %v2911
        %2945 = vst.msk [vmem:[%s136 + $0x8] sm:$0xff] %vm2943, %v2912
        %2946 = vst.msk [vmem:[%s136 + $0x10] sm:$0xff] %vm2943, %v2913
        %2947 = vst.msk [vmem:[%s136 + $0x18] sm:$0xff] %vm2943, %v2914
        %2948 = vst.msk [vmem:[%s136 + $0x20] sm:$0xff] %vm2943, %v2915
        %2949 = vst.msk [vmem:[%s136 + $0x28] sm:$0xff] %vm2943, %v2916
        %2950 = vst.msk [vmem:[%s136 + $0x30] sm:$0xff] %vm2943, %v2917
        %2951 = vst.msk [vmem:[%s136 + $0x38] sm:$0xff] %vm2943, %v2918
        %2952 = vst.msk [vmem:[%s136 + $0x40] sm:$0xff] %vm2943, %v2919
        %2953 = vst.msk [vmem:[%s136 + $0x48] sm:$0xff] %vm2943, %v2920
        %2954 = vst.msk [vmem:[%s136 + $0x50] sm:$0xff] %vm2943, %v2921
        %2955 = vst.msk [vmem:[%s136 + $0x58] sm:$0xff] %vm2943, %v2922
        %2956 = vst.msk [vmem:[%s136 + $0x60] sm:$0xff] %vm2943, %v2923
        %2957 = vst.msk [vmem:[%s136 + $0x68] sm:$0xff] %vm2943, %v2924
        %2958 = vst.msk [vmem:[%s136 + $0x70] sm:$0xff] %vm2943, %v2925
        %2959 = vst.msk [vmem:[%s136 + $0x78] sm:$0xff] %vm2943, %v2926
        %2960 = vst.msk [vmem:[%s136 + $0x80] sm:$0xff] %vm2943, %v2927
        %2961 = vst.msk [vmem:[%s136 + $0x88] sm:$0xff] %vm2943, %v2928
        %2962 = vst.msk [vmem:[%s136 + $0x90] sm:$0xff] %vm2943, %v2929
        %2963 = vst.msk [vmem:[%s136 + $0x98] sm:$0xff] %vm2943, %v2930
        %2964 = vst.msk [vmem:[%s136 + $0xa0] sm:$0xff] %vm2943, %v2931
        %2965 = vst.msk [vmem:[%s136 + $0xa8] sm:$0xff] %vm2943, %v2932
        %2966 = vst.msk [vmem:[%s136 + $0xb0] sm:$0xff] %vm2943, %v2933
        %2967 = vst.msk [vmem:[%s136 + $0xb8] sm:$0xff] %vm2943, %v2934
        %2968 = vst.msk [vmem:[%s136 + $0xc0] sm:$0xff] %vm2943, %v2935
        %2969 = vst.msk [vmem:[%s136 + $0xc8] sm:$0xff] %vm2943, %v2936
        %2970 = vst.msk [vmem:[%s136 + $0xd0] sm:$0xff] %vm2943, %v2937
        %2971 = vst.msk [vmem:[%s136 + $0xd8] sm:$0xff] %vm2943, %v2938
        %2972 = vst.msk [vmem:[%s136 + $0xe0] sm:$0xff] %vm2943, %v2939
        %2973 = vst.msk [vmem:[%s136 + $0xe8] sm:$0xff] %vm2943, %v2940
        %2974 = vst.msk [vmem:[%s136 + $0xf0] sm:$0xff] %vm2943, %v2941
        %2975 = vst.msk [vmem:[%s136 + $0xf8] sm:$0xff] %vm2943, %v2942
        %s2976 = sand.u32 %s71, 1
        %s2977 = scalar_lea.sflag [#allocation3], %s2976
        %s2978 = sand.u32 %s71, 1
        %s2979 = smul.addr %s2978, 256
        %s2980 = scalar_lea.vmem [#allocation2], %s2979
        // Predicated region
        $region29: #{tpu_custom_call.1} parent=27 // pred_check
          %p2981 = pneg %p81
        $region30: #{tpu_custom_call.1} parent=27 // pred_check_branch
          %2983 = sbr.rel (%p2981) target = $region32
        $region31: #{tpu_custom_call.1} parent=27 // pred_region
          %s2985 = ssub.s32 4096, 4096
          %2986 = vsyncadd %s2977, %s2985
          %s2987 = smul.addr %s16, 32
          %s2988 = smul.addr %s2987, 128
          %s2989 = scalar_lea.hbm %s2, %s2988
          %s2990 = sshll.u32 %s2980, 4
          %s2991 = int_to_ptr.vmem [resolvable:$true] %s2990
          %2996 = dma.vmem_to_hbm [thread:$0]  %s2991, 4096, %s2989, %s2977, 128, 128, 8
        $region32: #{tpu_custom_call.1} parent=27 // pred_fallthru
          _
      $region28: #{tpu_custom_call.1} parent=5 // pred_fallthru
        _
      %p2997 = scmp.le.s32.totalorder 2, %s11
      // Predicated region
      $region33: #{tpu_custom_call.1} parent=5 // pred_check
        %p2998 = pneg %p2997
      $region34: #{tpu_custom_call.1} parent=5 // pred_check_branch
        %3000 = sbr.rel (%p2998) target = $region36
      $region35: #{tpu_custom_call.1} parent=5 // pred_region
        %s3001 = ssub.s32 %s11, 2
        // Predicated region
        $region37: #{tpu_custom_call.1} parent=35 // pred_check
          %p3002 = pneg %p87
        $region38: #{tpu_custom_call.1} parent=35 // pred_check_branch
          %3004 = sbr.rel (%p3002) target = $region40
        $region39: #{tpu_custom_call.1} parent=35 // pred_region
          %s3005 = sand.u32 %s72, 1
          %s3006 = scalar_lea.sflag [#allocation3], %s3005
          %s3007 = sand.u32 %s72, 1
          %s3008 = smul.addr %s3007, 256
          %s3009 = scalar_lea.vmem [#allocation2], %s3008
          %3010 = dma.done %s3006, 4096
        $region40: #{tpu_custom_call.1} parent=35 // pred_fallthru
          _
      $region36: #{tpu_custom_call.1} parent=5 // pred_fallthru
        _
    $region6: #{tpu_custom_call.1} parent=1 // loop_footer
      %s15 = sadd.s32 1, %s11
    $region7: #{tpu_custom_call.1} parent=1 // loop_footer_branch
      %10 = sbr.rel target = $region3
    $region8: #{tpu_custom_call.1} parent=1 // loop_exit
      _
    %3011 = vsyncpa [#allocation3], 1
    %s3012 = scalar_lea.sflag [#allocation3], 1
    %3013 = vsyncpa %s3012, 1

</llo_original>
